<compile_context>
chip_gen: v7x
topology: tpu7x:2x2x1
jax: 0.10.0
libtpu: 0.0.40
codegen_flags: <defaults>
</compile_context>

<pallas_src>
import jax
import jax.numpy as jnp
from jax.experimental import pallas as pl
from jax.experimental.pallas import tpu as pltpu

C = 128      # channels (fixed by the module)
KH = 7       # conv kernel height
PAD = 3      # conv padding along H
BN_EPS = 1e-5


def _round_up(a, b):
    return (a + b - 1) // b * b


def l2block_kernel(x_ref, w1_ref, t1_ref, w2_ref, t2_ref, o_ref,
                   buf_ref, col_ref):
    # x_ref  : (TB, H, C)      f32 input tile
    # w*_ref : (KH*C, C)       bf16 im2col weights, BN scale pre-folded
    # t*_ref : (1, C)          f32 folded BN shift (+ folded conv bias)
    # o_ref  : (TB, H, C)      f32 output tile
    # buf_ref: (TB, Hr, C)     f32 activation scratch; rows [H, Hr) stay zero
    #                          and act as the conv's H padding for the rolls.
    # col_ref: (TB*Hr, KH*C)   bf16 im2col scratch.
    TB, H, Cc = x_ref.shape
    Hr = buf_ref.shape[1]
    M = TB * Hr

    # Zero the tail rows every invocation (scratch persists per core across
    # grid steps; do NOT gate this on program_id), then write the real rows.
    buf_ref[:, H:, :] = jnp.zeros((TB, Hr - H, Cc), jnp.float32)
    buf_ref[:, :H, :] = x_ref[...]

    def conv_bn(w_ref, t_ref):
        # out[h] = sum_k act[h + k - PAD] @ W_k  (zeros outside valid rows).
        # im2col: block k of the columns is roll(act_flat, PAD - k) along the
        # flattened row axis; wrap-around only ever reads the zeroed tail
        # rows for the rows we keep ([0, H) of each block).  One K=KH*C
        # matmul replaces KH separate K=C matmuls.
        z = buf_ref[...].reshape(M, Cc)
        for k in range(KH):
            shift = (PAD - k) % M
            zk = pltpu.roll(z, shift, 0) if shift else z      # XLU rotate
            col_ref[:, k * Cc:(k + 1) * Cc] = zk.astype(jnp.bfloat16)
        acc = jnp.dot(col_ref[...], w_ref[...],
                      preferred_element_type=jnp.float32)
        return (acc + t_ref[...]).reshape(TB, Hr, Cc)

    # ---- conv1 -> bn1 -> ReLU ----
    h1 = conv_bn(w1_ref, t1_ref)
    # Store only the valid rows; tail rows stay zero for conv2's padding.
    buf_ref[:, :H, :] = jnp.maximum(h1[:, :H, :], 0.0)

    # ---- conv2 -> bn2 -> +x -> ReLU ----
    pre2 = conv_bn(w2_ref, t2_ref)
    out = pre2[:, :H, :] + x_ref[...]
    o_ref[...] = jnp.maximum(out, 0.0).astype(o_ref.dtype)


def _vmem_limit_bytes():
    """Generation-aware VMEM limit: leave headroom below physical capacity."""
    phys = 128 * 1024 * 1024
    try:
        info = pltpu.get_tpu_info()
        cap = getattr(info, "vmem_capacity_bytes", None)
        if cap:
            phys = int(cap)
    except Exception:
        pass
    # ~48 MiB on v7x (64 MiB physical), 96 MiB on v5e/v6e (128 MiB physical).
    return min((phys * 3) // 4, 96 * 1024 * 1024)


def _choose_tb(B, H, vmem_limit):
    """Batch tile: big enough to feed the MXU, small enough for VMEM."""
    Hr = _round_up(H + PAD, 8)
    # rough per-batch-row VMEM bytes: double-buffered f32 in/out blocks,
    # f32 activation scratch, bf16 im2col scratch, f32 matmul result and
    # epilogue temporaries.
    per_row = (16 * H + 30 * Hr) * C
    budget = max(vmem_limit // 2, 4 * 1024 * 1024)
    tb = min(budget // per_row, max(4096 // Hr, 8), 512)  # ~4k matmul rows
    tb = max(8, (tb // 8) * 8)
    tb = min(tb, _round_up(B, 8))            # don't exceed the (padded) batch
    if B >= 128:                             # keep grid >= 2 (megacore / v7x)
        tb = min(tb, _round_up((B + 1) // 2, 8))
    return tb, Hr


def _l2block_bhc(x_bhc, params):
    B, H, Cin = x_bhc.shape
    vlim = _vmem_limit_bytes()
    tb, Hr = _choose_tb(B, H, vlim)
    Bp = _round_up(B, tb)
    if Bp != B:                              # arbitrary N*W handled by padding
        x_bhc = jnp.pad(x_bhc, ((0, Bp - B), (0, 0), (0, 0)))

    # Fold BN scale into the conv weights (per out-channel) and the conv bias
    # into the BN shift; pre-reshape weights to the (KH*C, C) im2col layout.
    w1 = (params["w1"] * params["s1"]).reshape(KH * Cin, Cin).astype(jnp.bfloat16)
    w2 = (params["w2"] * params["s2"]).reshape(KH * Cin, Cin).astype(jnp.bfloat16)
    t1 = params["t1"] + params["b1"] * params["s1"]
    t2 = params["t2"] + params["b2"] * params["s2"]

    w_spec = pl.BlockSpec((KH * Cin, Cin), lambda i: (0, 0))
    vec_spec = pl.BlockSpec((1, Cin), lambda i: (0, 0))

    out = pl.pallas_call(
        l2block_kernel,
        out_shape=jax.ShapeDtypeStruct((Bp, H, Cin), jnp.float32),
        grid_spec=pltpu.PrefetchScalarGridSpec(
            num_scalar_prefetch=0,
            grid=(Bp // tb,),
            in_specs=[
                pl.BlockSpec((tb, H, Cin), lambda i: (i, 0, 0)),   # x tile
                w_spec, vec_spec,                                  # conv1/bn1
                w_spec, vec_spec,                                  # conv2/bn2
            ],
            out_specs=pl.BlockSpec((tb, H, Cin), lambda i: (i, 0, 0)),
            scratch_shapes=[
                pltpu.VMEM((tb, Hr, Cin), jnp.float32),            # activation
                pltpu.VMEM((tb * Hr, KH * Cin), jnp.bfloat16),     # im2col
            ],
        ),
        compiler_params=pltpu.CompilerParams(
            dimension_semantics=("parallel",),
            vmem_limit_bytes=vlim),
    )(x_bhc, w1, t1, w2, t2)
    return out[:B]


@jax.jit
def l2block_forward(x_nchw, params):
    N, Cin, H, W = x_nchw.shape
    assert Cin == C
    B = N * W
    # NCHW -> (N*W, H, C); channels on the lane axis.
    x_bhc = jnp.transpose(x_nchw, (0, 3, 2, 1)).reshape(B, H, Cin)
    out = _l2block_bhc(x_bhc, params)
    return out.reshape(N, W, H, Cin).transpose(0, 3, 2, 1)


def make_params(key):
    """Deterministic synthetic parameters (conv weights + eval-mode BN)."""
    ks = jax.random.split(key, 12)
    fan_in = KH * C
    std = 1.0 / jnp.sqrt(jnp.float32(fan_in))

    def bn_fold(kg, kb, km, kv):
        gamma = jax.random.uniform(kg, (1, C), jnp.float32, 0.5, 1.5)
        beta = 0.1 * jax.random.normal(kb, (1, C), jnp.float32)
        mean = 0.1 * jax.random.normal(km, (1, C), jnp.float32)
        var = jax.random.uniform(kv, (1, C), jnp.float32, 0.5, 1.5)
        scale = gamma / jnp.sqrt(var + BN_EPS)
        shift = beta - mean * scale
        return scale, shift

    s1, t1 = bn_fold(ks[2], ks[3], ks[4], ks[5])
    s2, t2 = bn_fold(ks[8], ks[9], ks[10], ks[11])
    return {
        "w1": std * jax.random.normal(ks[0], (KH, C, C), jnp.float32),
        "b1": std * jax.random.normal(ks[1], (1, C), jnp.float32),
        "s1": s1, "t1": t1,
        "w2": std * jax.random.normal(ks[6], (KH, C, C), jnp.float32),
        "b2": std * jax.random.normal(ks[7], (1, C), jnp.float32),
        "s2": s2, "t2": t2,
    }


def l2block_reference(x_nchw, params):
    """Pure-JAX f32 reference with identical math (shift-and-matmul conv)."""
    N, Cin, H, W = x_nchw.shape
    x = jnp.transpose(x_nchw, (0, 3, 2, 1)).reshape(N * W, H, Cin)

    def conv(z, w, b):
        zp = jnp.pad(z, ((0, 0), (PAD, PAD), (0, 0)))
        acc = jnp.zeros((z.shape[0], H, Cin), jnp.float32)
        for k in range(KH):
            acc = acc + jnp.einsum("bhc,cd->bhd", zp[:, k:k + H, :], w[k],
                                   preferred_element_type=jnp.float32)
        return acc + b[None]

    h = conv(x, params["w1"], params["b1"])
    h = jnp.maximum(h * params["s1"][None] + params["t1"][None], 0.0)
    o = conv(h, params["w2"], params["b2"])
    o = o * params["s2"][None] + params["t2"][None]
    o = jnp.maximum(o + x, 0.0)
    return o.reshape(N, W, H, Cin).transpose(0, 3, 2, 1)


if __name__ == "__main__":
    key = jax.random.PRNGKey(0)
    k_x, k_p = jax.random.split(key)

    # Small shapes consistent with the module: channels fixed at 128.
    N, H, W = 2, 16, 8
    x = jax.random.normal(k_x, (N, C, H, W), jnp.float32)
    params = make_params(k_p)

    y = jax.block_until_ready(l2block_forward(x, params))
    y_ref = jax.block_until_ready(l2block_reference(x, params))

    assert y.shape == (N, C, H, W)
    assert bool(jnp.all(jnp.isfinite(y)))
    max_diff = float(jnp.max(jnp.abs(y - y_ref)))
    assert bool(jnp.allclose(y, y_ref, rtol=3e-2, atol=3e-2)), (
        f"mismatch vs reference: max abs diff {max_diff}")

    print("KERNEL_OK")
</pallas_src>

<mosaic_0001>
module attributes {stable_mosaic.version = 11 : i64} {
  func.func @l2block_kernel(%arg0: i32, %arg1: memref<16x16x128xf32, #tpu.memory_space<vmem>>, %arg2: memref<896x128xbf16, #tpu.memory_space<vmem>>, %arg3: memref<1x128xf32, #tpu.memory_space<vmem>>, %arg4: memref<896x128xbf16, #tpu.memory_space<vmem>>, %arg5: memref<1x128xf32, #tpu.memory_space<vmem>>, %arg6: memref<16x16x128xf32, #tpu.memory_space<vmem>>, %arg7: memref<16x24x128xf32, #tpu.memory_space<vmem>>, %arg8: memref<384x896xbf16, #tpu.memory_space<vmem>>) attributes {dimension_semantics = [#tpu.dimension_semantics<parallel>], iteration_bounds = array<i64: 1>, scalar_prefetch = 0 : i64, scratch_operands = 2 : i64, tpu.core_type = #tpu.core_type<tc>, window_params = [{transform_indices = @transform_0, window_bounds = array<i64: 16, 16, 128>}, {pipeline_mode = #tpu.pipeline_mode<synchronous>, transform_indices = @transform_1, window_bounds = array<i64: 896, 128>}, {pipeline_mode = #tpu.pipeline_mode<synchronous>, transform_indices = @transform_2, window_bounds = array<i64: 1, 128>}, {pipeline_mode = #tpu.pipeline_mode<synchronous>, transform_indices = @transform_3, window_bounds = array<i64: 896, 128>}, {pipeline_mode = #tpu.pipeline_mode<synchronous>, transform_indices = @transform_4, window_bounds = array<i64: 1, 128>}, {transform_indices = @transform_5, window_bounds = array<i64: 16, 16, 128>}]} {
    %cst = arith.constant 0.000000e+00 : f32
    %0 = vector.broadcast %cst : f32 to vector<16x8x128xf32>
    %c0 = arith.constant 0 : index
    %c16 = arith.constant 16 : index
    %c0_0 = arith.constant 0 : index
    %1 = vector.load %arg7[%c0, %c16, %c0_0] : memref<16x24x128xf32, #tpu.memory_space<vmem>>, vector<16x8x128xf32>
    tpu.vector_store %arg7[%c0, %c16, %c0_0], %0 {strides = array<i32>} : memref<16x24x128xf32, #tpu.memory_space<vmem>>, vector<16x8x128xf32>,
    %c0_1 = arith.constant 0 : index
    %c0_2 = arith.constant 0 : index
    %c0_3 = arith.constant 0 : index
    %2 = vector.load %arg1[%c0_1, %c0_2, %c0_3] : memref<16x16x128xf32, #tpu.memory_space<vmem>>, vector<16x16x128xf32>
    %c0_4 = arith.constant 0 : index
    %c0_5 = arith.constant 0 : index
    %c0_6 = arith.constant 0 : index
    %3 = vector.load %arg7[%c0_4, %c0_5, %c0_6] : memref<16x24x128xf32, #tpu.memory_space<vmem>>, vector<16x16x128xf32>
    tpu.vector_store %arg7[%c0_4, %c0_5, %c0_6], %2 {strides = array<i32>} : memref<16x24x128xf32, #tpu.memory_space<vmem>>, vector<16x16x128xf32>,
    %c0_7 = arith.constant 0 : index
    %c0_8 = arith.constant 0 : index
    %c0_9 = arith.constant 0 : index
    %4 = vector.load %arg7[%c0_7, %c0_8, %c0_9] : memref<16x24x128xf32, #tpu.memory_space<vmem>>, vector<16x24x128xf32>
    %5 = vector.shape_cast %4 : vector<16x24x128xf32> to vector<384x128xf32>
    %c3_i32 = arith.constant 3 : i32
    %6 = tpu.dynamic_rotate %5 by %c3_i32 dim 0 : vector<384x128xf32>, i32 -> vector<384x128xf32>
    %7 = arith.truncf %6 : vector<384x128xf32> to vector<384x128xbf16>
    %c0_10 = arith.constant 0 : index
    %c0_11 = arith.constant 0 : index
    %8 = vector.load %arg8[%c0_10, %c0_11] : memref<384x896xbf16, #tpu.memory_space<vmem>>, vector<384x128xbf16>
    tpu.vector_store %arg8[%c0_10, %c0_11], %7 {strides = array<i32>} : memref<384x896xbf16, #tpu.memory_space<vmem>>, vector<384x128xbf16>,
    %c2_i32 = arith.constant 2 : i32
    %9 = tpu.dynamic_rotate %5 by %c2_i32 dim 0 : vector<384x128xf32>, i32 -> vector<384x128xf32>
    %10 = arith.truncf %9 : vector<384x128xf32> to vector<384x128xbf16>
    %c0_12 = arith.constant 0 : index
    %c128 = arith.constant 128 : index
    %11 = vector.load %arg8[%c0_12, %c128] : memref<384x896xbf16, #tpu.memory_space<vmem>>, vector<384x128xbf16>
    tpu.vector_store %arg8[%c0_12, %c128], %10 {strides = array<i32>} : memref<384x896xbf16, #tpu.memory_space<vmem>>, vector<384x128xbf16>,
    %c1_i32 = arith.constant 1 : i32
    %12 = tpu.dynamic_rotate %5 by %c1_i32 dim 0 : vector<384x128xf32>, i32 -> vector<384x128xf32>
    %13 = arith.truncf %12 : vector<384x128xf32> to vector<384x128xbf16>
    %c0_13 = arith.constant 0 : index
    %c256 = arith.constant 256 : index
    %14 = vector.load %arg8[%c0_13, %c256] : memref<384x896xbf16, #tpu.memory_space<vmem>>, vector<384x128xbf16>
    tpu.vector_store %arg8[%c0_13, %c256], %13 {strides = array<i32>} : memref<384x896xbf16, #tpu.memory_space<vmem>>, vector<384x128xbf16>,
    %15 = arith.truncf %5 : vector<384x128xf32> to vector<384x128xbf16>
    %c0_14 = arith.constant 0 : index
    %c384 = arith.constant 384 : index
    %16 = vector.load %arg8[%c0_14, %c384] : memref<384x896xbf16, #tpu.memory_space<vmem>>, vector<384x128xbf16>
    tpu.vector_store %arg8[%c0_14, %c384], %15 {strides = array<i32>} : memref<384x896xbf16, #tpu.memory_space<vmem>>, vector<384x128xbf16>,
    %c383_i32 = arith.constant 383 : i32
    %17 = tpu.dynamic_rotate %5 by %c383_i32 dim 0 : vector<384x128xf32>, i32 -> vector<384x128xf32>
    %18 = arith.truncf %17 : vector<384x128xf32> to vector<384x128xbf16>
    %c0_15 = arith.constant 0 : index
    %c512 = arith.constant 512 : index
    %19 = vector.load %arg8[%c0_15, %c512] : memref<384x896xbf16, #tpu.memory_space<vmem>>, vector<384x128xbf16>
    tpu.vector_store %arg8[%c0_15, %c512], %18 {strides = array<i32>} : memref<384x896xbf16, #tpu.memory_space<vmem>>, vector<384x128xbf16>,
    %c382_i32 = arith.constant 382 : i32
    %20 = tpu.dynamic_rotate %5 by %c382_i32 dim 0 : vector<384x128xf32>, i32 -> vector<384x128xf32>
    %21 = arith.truncf %20 : vector<384x128xf32> to vector<384x128xbf16>
    %c0_16 = arith.constant 0 : index
    %c640 = arith.constant 640 : index
    %22 = vector.load %arg8[%c0_16, %c640] : memref<384x896xbf16, #tpu.memory_space<vmem>>, vector<384x128xbf16>
    tpu.vector_store %arg8[%c0_16, %c640], %21 {strides = array<i32>} : memref<384x896xbf16, #tpu.memory_space<vmem>>, vector<384x128xbf16>,
    %c381_i32 = arith.constant 381 : i32
    %23 = tpu.dynamic_rotate %5 by %c381_i32 dim 0 : vector<384x128xf32>, i32 -> vector<384x128xf32>
    %24 = arith.truncf %23 : vector<384x128xf32> to vector<384x128xbf16>
    %c0_17 = arith.constant 0 : index
    %c768 = arith.constant 768 : index
    %25 = vector.load %arg8[%c0_17, %c768] : memref<384x896xbf16, #tpu.memory_space<vmem>>, vector<384x128xbf16>
    tpu.vector_store %arg8[%c0_17, %c768], %24 {strides = array<i32>} : memref<384x896xbf16, #tpu.memory_space<vmem>>, vector<384x128xbf16>,
    %c0_18 = arith.constant 0 : index
    %c0_19 = arith.constant 0 : index
    %26 = vector.load %arg8[%c0_18, %c0_19] : memref<384x896xbf16, #tpu.memory_space<vmem>>, vector<384x896xbf16>
    %c0_20 = arith.constant 0 : index
    %c0_21 = arith.constant 0 : index
    %27 = vector.load %arg2[%c0_20, %c0_21] : memref<896x128xbf16, #tpu.memory_space<vmem>>, vector<896x128xbf16>
    %cst_22 = arith.constant dense<0.000000e+00> : vector<384x128xf32>
    %28 = tpu.matmul %26, %27, %cst_22 {dimension_numbers = #tpu.dot_dimension_numbers<[1], [0], [0], [1], [0, 0, 1, 1], [], []>} : vector<384x896xbf16>, vector<896x128xbf16>, vector<384x128xf32> -> vector<384x128xf32>
    %c0_23 = arith.constant 0 : index
    %c0_24 = arith.constant 0 : index
    %29 = vector.load %arg3[%c0_23, %c0_24] : memref<1x128xf32, #tpu.memory_space<vmem>>, vector<1x128xf32>
    %30 = vector.broadcast %29 : vector<1x128xf32> to vector<384x128xf32>
    %31 = arith.addf %28, %30 : vector<384x128xf32>
    %32 = vector.shape_cast %31 : vector<384x128xf32> to vector<16x24x128xf32>
    %33 = vector.extract_strided_slice %32 {offsets = [0, 0, 0], sizes = [16, 16, 128], strides = [1, 1, 1]} : vector<16x24x128xf32> to vector<16x16x128xf32>
    %cst_25 = arith.constant 0.000000e+00 : f32
    %34 = vector.broadcast %cst_25 : f32 to vector<16x16x128xf32>
    %35 = arith.maximumf %33, %34 : vector<16x16x128xf32>
    %c0_26 = arith.constant 0 : index
    %c0_27 = arith.constant 0 : index
    %c0_28 = arith.constant 0 : index
    %36 = vector.load %arg7[%c0_26, %c0_27, %c0_28] : memref<16x24x128xf32, #tpu.memory_space<vmem>>, vector<16x16x128xf32>
    tpu.vector_store %arg7[%c0_26, %c0_27, %c0_28], %35 {strides = array<i32>} : memref<16x24x128xf32, #tpu.memory_space<vmem>>, vector<16x16x128xf32>,
    %c0_29 = arith.constant 0 : index
    %c0_30 = arith.constant 0 : index
    %c0_31 = arith.constant 0 : index
    %37 = vector.load %arg7[%c0_29, %c0_30, %c0_31] : memref<16x24x128xf32, #tpu.memory_space<vmem>>, vector<16x24x128xf32>
    %38 = vector.shape_cast %37 : vector<16x24x128xf32> to vector<384x128xf32>
    %c3_i32_32 = arith.constant 3 : i32
    %39 = tpu.dynamic_rotate %38 by %c3_i32_32 dim 0 : vector<384x128xf32>, i32 -> vector<384x128xf32>
    %40 = arith.truncf %39 : vector<384x128xf32> to vector<384x128xbf16>
    %c0_33 = arith.constant 0 : index
    %c0_34 = arith.constant 0 : index
    %41 = vector.load %arg8[%c0_33, %c0_34] : memref<384x896xbf16, #tpu.memory_space<vmem>>, vector<384x128xbf16>
    tpu.vector_store %arg8[%c0_33, %c0_34], %40 {strides = array<i32>} : memref<384x896xbf16, #tpu.memory_space<vmem>>, vector<384x128xbf16>,
    %c2_i32_35 = arith.constant 2 : i32
    %42 = tpu.dynamic_rotate %38 by %c2_i32_35 dim 0 : vector<384x128xf32>, i32 -> vector<384x128xf32>
    %43 = arith.truncf %42 : vector<384x128xf32> to vector<384x128xbf16>
    %c0_36 = arith.constant 0 : index
    %c128_37 = arith.constant 128 : index
    %44 = vector.load %arg8[%c0_36, %c128_37] : memref<384x896xbf16, #tpu.memory_space<vmem>>, vector<384x128xbf16>
    tpu.vector_store %arg8[%c0_36, %c128_37], %43 {strides = array<i32>} : memref<384x896xbf16, #tpu.memory_space<vmem>>, vector<384x128xbf16>,
    %c1_i32_38 = arith.constant 1 : i32
    %45 = tpu.dynamic_rotate %38 by %c1_i32_38 dim 0 : vector<384x128xf32>, i32 -> vector<384x128xf32>
    %46 = arith.truncf %45 : vector<384x128xf32> to vector<384x128xbf16>
    %c0_39 = arith.constant 0 : index
    %c256_40 = arith.constant 256 : index
    %47 = vector.load %arg8[%c0_39, %c256_40] : memref<384x896xbf16, #tpu.memory_space<vmem>>, vector<384x128xbf16>
    tpu.vector_store %arg8[%c0_39, %c256_40], %46 {strides = array<i32>} : memref<384x896xbf16, #tpu.memory_space<vmem>>, vector<384x128xbf16>,
    %48 = arith.truncf %38 : vector<384x128xf32> to vector<384x128xbf16>
    %c0_41 = arith.constant 0 : index
    %c384_42 = arith.constant 384 : index
    %49 = vector.load %arg8[%c0_41, %c384_42] : memref<384x896xbf16, #tpu.memory_space<vmem>>, vector<384x128xbf16>
    tpu.vector_store %arg8[%c0_41, %c384_42], %48 {strides = array<i32>} : memref<384x896xbf16, #tpu.memory_space<vmem>>, vector<384x128xbf16>,
    %c383_i32_43 = arith.constant 383 : i32
    %50 = tpu.dynamic_rotate %38 by %c383_i32_43 dim 0 : vector<384x128xf32>, i32 -> vector<384x128xf32>
    %51 = arith.truncf %50 : vector<384x128xf32> to vector<384x128xbf16>
    %c0_44 = arith.constant 0 : index
    %c512_45 = arith.constant 512 : index
    %52 = vector.load %arg8[%c0_44, %c512_45] : memref<384x896xbf16, #tpu.memory_space<vmem>>, vector<384x128xbf16>
    tpu.vector_store %arg8[%c0_44, %c512_45], %51 {strides = array<i32>} : memref<384x896xbf16, #tpu.memory_space<vmem>>, vector<384x128xbf16>,
    %c382_i32_46 = arith.constant 382 : i32
    %53 = tpu.dynamic_rotate %38 by %c382_i32_46 dim 0 : vector<384x128xf32>, i32 -> vector<384x128xf32>
    %54 = arith.truncf %53 : vector<384x128xf32> to vector<384x128xbf16>
    %c0_47 = arith.constant 0 : index
    %c640_48 = arith.constant 640 : index
    %55 = vector.load %arg8[%c0_47, %c640_48] : memref<384x896xbf16, #tpu.memory_space<vmem>>, vector<384x128xbf16>
    tpu.vector_store %arg8[%c0_47, %c640_48], %54 {strides = array<i32>} : memref<384x896xbf16, #tpu.memory_space<vmem>>, vector<384x128xbf16>,
    %c381_i32_49 = arith.constant 381 : i32
    %56 = tpu.dynamic_rotate %38 by %c381_i32_49 dim 0 : vector<384x128xf32>, i32 -> vector<384x128xf32>
    %57 = arith.truncf %56 : vector<384x128xf32> to vector<384x128xbf16>
    %c0_50 = arith.constant 0 : index
    %c768_51 = arith.constant 768 : index
    %58 = vector.load %arg8[%c0_50, %c768_51] : memref<384x896xbf16, #tpu.memory_space<vmem>>, vector<384x128xbf16>
    tpu.vector_store %arg8[%c0_50, %c768_51], %57 {strides = array<i32>} : memref<384x896xbf16, #tpu.memory_space<vmem>>, vector<384x128xbf16>,
    %c0_52 = arith.constant 0 : index
    %c0_53 = arith.constant 0 : index
    %59 = vector.load %arg8[%c0_52, %c0_53] : memref<384x896xbf16, #tpu.memory_space<vmem>>, vector<384x896xbf16>
    %c0_54 = arith.constant 0 : index
    %c0_55 = arith.constant 0 : index
    %60 = vector.load %arg4[%c0_54, %c0_55] : memref<896x128xbf16, #tpu.memory_space<vmem>>, vector<896x128xbf16>
    %cst_56 = arith.constant dense<0.000000e+00> : vector<384x128xf32>
    %61 = tpu.matmul %59, %60, %cst_56 {dimension_numbers = #tpu.dot_dimension_numbers<[1], [0], [0], [1], [0, 0, 1, 1], [], []>} : vector<384x896xbf16>, vector<896x128xbf16>, vector<384x128xf32> -> vector<384x128xf32>
    %c0_57 = arith.constant 0 : index
    %c0_58 = arith.constant 0 : index
    %62 = vector.load %arg5[%c0_57, %c0_58] : memref<1x128xf32, #tpu.memory_space<vmem>>, vector<1x128xf32>
    %63 = vector.broadcast %62 : vector<1x128xf32> to vector<384x128xf32>
    %64 = arith.addf %61, %63 : vector<384x128xf32>
    %65 = vector.shape_cast %64 : vector<384x128xf32> to vector<16x24x128xf32>
    %66 = vector.extract_strided_slice %65 {offsets = [0, 0, 0], sizes = [16, 16, 128], strides = [1, 1, 1]} : vector<16x24x128xf32> to vector<16x16x128xf32>
    %c0_59 = arith.constant 0 : index
    %c0_60 = arith.constant 0 : index
    %c0_61 = arith.constant 0 : index
    %67 = vector.load %arg1[%c0_59, %c0_60, %c0_61] : memref<16x16x128xf32, #tpu.memory_space<vmem>>, vector<16x16x128xf32>
    %68 = arith.addf %66, %67 : vector<16x16x128xf32>
    %cst_62 = arith.constant 0.000000e+00 : f32
    %69 = vector.broadcast %cst_62 : f32 to vector<16x16x128xf32>
    %70 = arith.maximumf %68, %69 : vector<16x16x128xf32>
    %c0_63 = arith.constant 0 : index
    %c0_64 = arith.constant 0 : index
    %c0_65 = arith.constant 0 : index
    %71 = vector.load %arg6[%c0_63, %c0_64, %c0_65] : memref<16x16x128xf32, #tpu.memory_space<vmem>>, vector<16x16x128xf32>
    tpu.vector_store %arg6[%c0_63, %c0_64, %c0_65], %70 {strides = array<i32>} : memref<16x16x128xf32, #tpu.memory_space<vmem>>, vector<16x16x128xf32>,
    return
  }
  func.func @transform_0(%arg0: i32) -> (i32, i32, i32) {
    %c0_i32 = arith.constant 0 : i32
    %c0_i32_0 = arith.constant 0 : i32
    %c0_i32_1 = arith.constant 0 : i32
    return %arg0, %c0_i32, %c0_i32_0 : i32, i32, i32
  }
  func.func @transform_1(%arg0: i32) -> (i32, i32) {
    %c0_i32 = arith.constant 0 : i32
    %c0_i32_0 = arith.constant 0 : i32
    %c0_i32_1 = arith.constant 0 : i32
    return %c0_i32, %c0_i32_0 : i32, i32
  }
  func.func @transform_2(%arg0: i32) -> (i32, i32) {
    %c0_i32 = arith.constant 0 : i32
    %c0_i32_0 = arith.constant 0 : i32
    %c0_i32_1 = arith.constant 0 : i32
    return %c0_i32, %c0_i32_0 : i32, i32
  }
  func.func @transform_3(%arg0: i32) -> (i32, i32) {
    %c0_i32 = arith.constant 0 : i32
    %c0_i32_0 = arith.constant 0 : i32
    %c0_i32_1 = arith.constant 0 : i32
    return %c0_i32, %c0_i32_0 : i32, i32
  }
  func.func @transform_4(%arg0: i32) -> (i32, i32) {
    %c0_i32 = arith.constant 0 : i32
    %c0_i32_0 = arith.constant 0 : i32
    %c0_i32_1 = arith.constant 0 : i32
    return %c0_i32, %c0_i32_0 : i32, i32
  }
  func.func @transform_5(%arg0: i32) -> (i32, i32, i32) {
    %c0_i32 = arith.constant 0 : i32
    %c0_i32_0 = arith.constant 0 : i32
    %c0_i32_1 = arith.constant 0 : i32
    return %arg0, %c0_i32, %c0_i32_0 : i32, i32, i32
  }
}

</mosaic_0001>

<llo_original>
// kernel: l2block_forward.1
$region0: #{l2block_forward.1}
  #allocation0 [shape = 'u32[]', space=smem, size = 0x4, offset = 0x4, fixed_abs, tag = 'smem constant byte address 0x4 - core index']
  #allocation1 [shape = 'u32[144,128]{1,0:T(1,128)}', space=vmem, size = 0x12000, scoped, tag = 'internal scratch']
  #allocation2 [shape = 'f32[16,24,128]{2,1,0:T(8,128)}', space=vmem, size = 0x30000, scoped, tag = 'scratch operand']
  #allocation3 [shape = 'bf16[384,896]{1,0:T(16,128)(2,1)}', space=vmem, size = 0xa8000, scoped, tag = 'scratch operand']
  %s0 = inlined_call_operand.hbm [shape: f32[16,16,128], index: 0, kind: input, shape index: {}]
  %s1 = inlined_call_operand.hbm [shape: bf16[896,128], index: 1, kind: input, shape index: {}]
  %s2 = inlined_call_operand.hbm [shape: f32[1,128], index: 2, kind: input, shape index: {}]
  %s3 = inlined_call_operand.hbm [shape: bf16[896,128], index: 3, kind: input, shape index: {}]
  %s4 = inlined_call_operand.hbm [shape: f32[1,128], index: 4, kind: input, shape index: {}]
  %s5 = inlined_call_operand.hbm [shape: f32[16,16,128], index: 5, kind: output, shape index: {}]
  %s6 = sld [smem:[#allocation0]]
  $region50: #{l2block_forward.1} parent=0
    _
  %s8 = ssub.s32 1, %s6
  %s9 = scalar_select 0, %s8, %s6
  $region1: #{l2block_forward.1} parent=0
    #allocation4 [shape = 'u8[131072]{0}', space=vmem, size = 0x20000, scoped, tag = 'input window, operand 0, single buffered']
    #allocation5 [shape = 's32[1]{0}', space=sflag, size = 0x4, scoped, tag = 'scoped memory for l2block_forward.1']
    #allocation6 [shape = 's32[1]{0}', space=sflag, size = 0x4, scoped, tag = 'scoped memory for l2block_forward.1']
    #allocation7 [shape = 'u8[229376]{0}', space=vmem, size = 0x38000, scoped, tag = 'input window, operand 1, single buffered']
    #allocation8 [shape = 's32[1]{0}', space=sflag, size = 0x4, scoped, tag = 'scoped memory for l2block_forward.1']
    #allocation9 [shape = 'u8[512]{0}', space=vmem, size = 0x400, scoped, tag = 'input window, operand 2, single buffered']
    #allocation10 [shape = 'u8[229376]{0}', space=vmem, size = 0x38000, scoped, tag = 'input window, operand 3, single buffered']
    #allocation11 [shape = 's32[1]{0}', space=sflag, size = 0x4, scoped, tag = 'scoped memory for l2block_forward.1']
    #allocation12 [shape = 'u8[512]{0}', space=vmem, size = 0x400, scoped, tag = 'input window, operand 4, single buffered']
    #allocation13 [shape = 'u8[131072]{0}', space=vmem, size = 0x20000, scoped, tag = 'output window, operand 0, single buffered']
    %10 = vsyncpa [#allocation5], 0
    %11 = vsyncpa [#allocation8], 0
    %12 = vsyncpa [#allocation11], 0
    %13 = vsyncpa [#allocation6], 0
    // Predicated region
    $region2: #{l2block_forward.1} parent=1 // pred_check
      _
    $region3: #{l2block_forward.1} parent=1 // pred_check_branch
      %15 = sbr.rel (0) target = $region5
    $region4: #{l2block_forward.1} parent=1 // pred_region
      %s17 = ssub.s32 4096, 4096
      %18 = vsyncadd [#allocation5], %s17
      %s19 = sshll.u32 [#allocation4], 4
      %s20 = int_to_ptr.vmem [resolvable:$true] %s19
      %25 = dma.hbm_to_vmem [thread:$0]  %s0, 4096, %s20, [#allocation5], 128, 128, 8
    $region5: #{l2block_forward.1} parent=1 // pred_fallthru
      _
    // Predicated region
    $region6: #{l2block_forward.1} parent=1 // pred_check
      _
    $region7: #{l2block_forward.1} parent=1 // pred_check_branch
      %27 = sbr.rel (0) target = $region9
    $region8: #{l2block_forward.1} parent=1 // pred_region
      %s29 = ssub.s32 7168, 7168
      %30 = vsyncadd [#allocation8], %s29
      %s31 = sshll.u32 [#allocation7], 4
      %s32 = int_to_ptr.vmem [resolvable:$true] %s31
      %37 = dma.hbm_to_vmem [thread:$0]  %s1, 7168, %s32, [#allocation8], 64, 64, 4
    $region9: #{l2block_forward.1} parent=1 // pred_fallthru
      _
    // Predicated region
    $region10: #{l2block_forward.1} parent=1 // pred_check
      _
    $region11: #{l2block_forward.1} parent=1 // pred_check_branch
      %39 = sbr.rel (0) target = $region13
    $region12: #{l2block_forward.1} parent=1 // pred_region
      %s41 = ssub.s32 16, 16
      %42 = vsyncadd [#allocation8], %s41
      %s44 = sshll.u32 [#allocation9], 4
      %s45 = int_to_ptr.vmem [resolvable:$true] %s44
      %47 = dma.hbm_to_vmem [thread:$0]  %s2, 16, %s45, [#allocation8]
    $region13: #{l2block_forward.1} parent=1 // pred_fallthru
      _
    // Predicated region
    $region14: #{l2block_forward.1} parent=1 // pred_check
      _
    $region15: #{l2block_forward.1} parent=1 // pred_check_branch
      %49 = sbr.rel (0) target = $region17
    $region16: #{l2block_forward.1} parent=1 // pred_region
      %s51 = ssub.s32 7168, 7168
      %52 = vsyncadd [#allocation11], %s51
      %s53 = sshll.u32 [#allocation10], 4
      %s54 = int_to_ptr.vmem [resolvable:$true] %s53
      %59 = dma.hbm_to_vmem [thread:$0]  %s3, 7168, %s54, [#allocation11], 64, 64, 4
    $region17: #{l2block_forward.1} parent=1 // pred_fallthru
      _
    // Predicated region
    $region18: #{l2block_forward.1} parent=1 // pred_check
      _
    $region19: #{l2block_forward.1} parent=1 // pred_check_branch
      %61 = sbr.rel (0) target = $region21
    $region20: #{l2block_forward.1} parent=1 // pred_region
      %s63 = ssub.s32 16, 16
      %64 = vsyncadd [#allocation11], %s63
      %s66 = sshll.u32 [#allocation12], 4
      %s67 = int_to_ptr.vmem [resolvable:$true] %s66
      %69 = dma.hbm_to_vmem [thread:$0]  %s4, 16, %s67, [#allocation11]
    $region21: #{l2block_forward.1} parent=1 // pred_fallthru
      _
    // Predicated region
    $region22: #{l2block_forward.1} parent=1 // pred_check
      _
    $region23: #{l2block_forward.1} parent=1 // pred_check_branch
      %71 = sbr.rel (0) target = $region25
    $region24: #{l2block_forward.1} parent=1 // pred_region
      %72 = dma.done [#allocation5], 4096
    $region25: #{l2block_forward.1} parent=1 // pred_fallthru
      _
    // Predicated region
    $region26: #{l2block_forward.1} parent=1 // pred_check
      _
    $region27: #{l2block_forward.1} parent=1 // pred_check_branch
      %74 = sbr.rel (0) target = $region29
    $region28: #{l2block_forward.1} parent=1 // pred_region
      %75 = dma.done [#allocation8], 7168
    $region29: #{l2block_forward.1} parent=1 // pred_fallthru
      _
    // Predicated region
    $region30: #{l2block_forward.1} parent=1 // pred_check
      _
    $region31: #{l2block_forward.1} parent=1 // pred_check_branch
      %77 = sbr.rel (0) target = $region33
    $region32: #{l2block_forward.1} parent=1 // pred_region
      %78 = dma.done [#allocation8], 16
    $region33: #{l2block_forward.1} parent=1 // pred_fallthru
      _
    // Predicated region
    $region34: #{l2block_forward.1} parent=1 // pred_check
      _
    $region35: #{l2block_forward.1} parent=1 // pred_check_branch
      %80 = sbr.rel (0) target = $region37
    $region36: #{l2block_forward.1} parent=1 // pred_region
      %81 = dma.done [#allocation11], 7168
    $region37: #{l2block_forward.1} parent=1 // pred_fallthru
      _
    // Predicated region
    $region38: #{l2block_forward.1} parent=1 // pred_check
      _
    $region39: #{l2block_forward.1} parent=1 // pred_check_branch
      %83 = sbr.rel (0) target = $region41
    $region40: #{l2block_forward.1} parent=1 // pred_region
      %84 = dma.done [#allocation11], 16
    $region41: #{l2block_forward.1} parent=1 // pred_fallthru
      _
    %86 = vst [vmem:[#allocation2 + $0x10] sm:$0xff] 0.0
    %87 = vst [vmem:[#allocation2 + $0x28] sm:$0xff] 0.0
    %88 = vst [vmem:[#allocation2 + $0x40] sm:$0xff] 0.0
    %89 = vst [vmem:[#allocation2 + $0x58] sm:$0xff] 0.0
    %90 = vst [vmem:[#allocation2 + $0x70] sm:$0xff] 0.0
    %91 = vst [vmem:[#allocation2 + $0x88] sm:$0xff] 0.0
    %92 = vst [vmem:[#allocation2 + $0xa0] sm:$0xff] 0.0
    %93 = vst [vmem:[#allocation2 + $0xb8] sm:$0xff] 0.0
    %94 = vst [vmem:[#allocation2 + $0xd0] sm:$0xff] 0.0
    %95 = vst [vmem:[#allocation2 + $0xe8] sm:$0xff] 0.0
    %96 = vst [vmem:[#allocation2 + $0x100] sm:$0xff] 0.0
    %97 = vst [vmem:[#allocation2 + $0x118] sm:$0xff] 0.0
    %98 = vst [vmem:[#allocation2 + $0x130] sm:$0xff] 0.0
    %99 = vst [vmem:[#allocation2 + $0x148] sm:$0xff] 0.0
    %100 = vst [vmem:[#allocation2 + $0x160] sm:$0xff] 0.0
    %101 = vst [vmem:[#allocation2 + $0x178] sm:$0xff] 0.0
    %v102 = vld [vmem:[#allocation4] sm:$0xff]
    %v103 = vld [vmem:[#allocation4 + $0x8] sm:$0xff]
    %v104 = vld [vmem:[#allocation4 + $0x10] sm:$0xff]
    %v105 = vld [vmem:[#allocation4 + $0x18] sm:$0xff]
    %v106 = vld [vmem:[#allocation4 + $0x20] sm:$0xff]
    %v107 = vld [vmem:[#allocation4 + $0x28] sm:$0xff]
    %v108 = vld [vmem:[#allocation4 + $0x30] sm:$0xff]
    %v109 = vld [vmem:[#allocation4 + $0x38] sm:$0xff]
    %v110 = vld [vmem:[#allocation4 + $0x40] sm:$0xff]
    %v111 = vld [vmem:[#allocation4 + $0x48] sm:$0xff]
    %v112 = vld [vmem:[#allocation4 + $0x50] sm:$0xff]
    %v113 = vld [vmem:[#allocation4 + $0x58] sm:$0xff]
    %v114 = vld [vmem:[#allocation4 + $0x60] sm:$0xff]
    %v115 = vld [vmem:[#allocation4 + $0x68] sm:$0xff]
    %v116 = vld [vmem:[#allocation4 + $0x70] sm:$0xff]
    %v117 = vld [vmem:[#allocation4 + $0x78] sm:$0xff]
    %v118 = vld [vmem:[#allocation4 + $0x80] sm:$0xff]
    %v119 = vld [vmem:[#allocation4 + $0x88] sm:$0xff]
    %v120 = vld [vmem:[#allocation4 + $0x90] sm:$0xff]
    %v121 = vld [vmem:[#allocation4 + $0x98] sm:$0xff]
    %v122 = vld [vmem:[#allocation4 + $0xa0] sm:$0xff]
    %v123 = vld [vmem:[#allocation4 + $0xa8] sm:$0xff]
    %v124 = vld [vmem:[#allocation4 + $0xb0] sm:$0xff]
    %v125 = vld [vmem:[#allocation4 + $0xb8] sm:$0xff]
    %v126 = vld [vmem:[#allocation4 + $0xc0] sm:$0xff]
    %v127 = vld [vmem:[#allocation4 + $0xc8] sm:$0xff]
    %v128 = vld [vmem:[#allocation4 + $0xd0] sm:$0xff]
    %v129 = vld [vmem:[#allocation4 + $0xd8] sm:$0xff]
    %v130 = vld [vmem:[#allocation4 + $0xe0] sm:$0xff]
    %v131 = vld [vmem:[#allocation4 + $0xe8] sm:$0xff]
    %v132 = vld [vmem:[#allocation4 + $0xf0] sm:$0xff]
    %v133 = vld [vmem:[#allocation4 + $0xf8] sm:$0xff]
    %134 = vst [vmem:[#allocation2] sm:$0xff] %v102
    %135 = vst [vmem:[#allocation2 + $0x8] sm:$0xff] %v103
    %136 = vst [vmem:[#allocation2 + $0x18] sm:$0xff] %v104
    %137 = vst [vmem:[#allocation2 + $0x20] sm:$0xff] %v105
    %138 = vst [vmem:[#allocation2 + $0x30] sm:$0xff] %v106
    %139 = vst [vmem:[#allocation2 + $0x38] sm:$0xff] %v107
    %140 = vst [vmem:[#allocation2 + $0x48] sm:$0xff] %v108
    %141 = vst [vmem:[#allocation2 + $0x50] sm:$0xff] %v109
    %142 = vst [vmem:[#allocation2 + $0x60] sm:$0xff] %v110
    %143 = vst [vmem:[#allocation2 + $0x68] sm:$0xff] %v111
    %144 = vst [vmem:[#allocation2 + $0x78] sm:$0xff] %v112
    %145 = vst [vmem:[#allocation2 + $0x80] sm:$0xff] %v113
    %146 = vst [vmem:[#allocation2 + $0x90] sm:$0xff] %v114
    %147 = vst [vmem:[#allocation2 + $0x98] sm:$0xff] %v115
    %148 = vst [vmem:[#allocation2 + $0xa8] sm:$0xff] %v116
    %149 = vst [vmem:[#allocation2 + $0xb0] sm:$0xff] %v117
    %150 = vst [vmem:[#allocation2 + $0xc0] sm:$0xff] %v118
    %151 = vst [vmem:[#allocation2 + $0xc8] sm:$0xff] %v119
    %152 = vst [vmem:[#allocation2 + $0xd8] sm:$0xff] %v120
    %153 = vst [vmem:[#allocation2 + $0xe0] sm:$0xff] %v121
    %154 = vst [vmem:[#allocation2 + $0xf0] sm:$0xff] %v122
    %155 = vst [vmem:[#allocation2 + $0xf8] sm:$0xff] %v123
    %156 = vst [vmem:[#allocation2 + $0x108] sm:$0xff] %v124
    %157 = vst [vmem:[#allocation2 + $0x110] sm:$0xff] %v125
    %158 = vst [vmem:[#allocation2 + $0x120] sm:$0xff] %v126
    %159 = vst [vmem:[#allocation2 + $0x128] sm:$0xff] %v127
    %160 = vst [vmem:[#allocation2 + $0x138] sm:$0xff] %v128
    %161 = vst [vmem:[#allocation2 + $0x140] sm:$0xff] %v129
    %162 = vst [vmem:[#allocation2 + $0x150] sm:$0xff] %v130
    %163 = vst [vmem:[#allocation2 + $0x158] sm:$0xff] %v131
    %164 = vst [vmem:[#allocation2 + $0x168] sm:$0xff] %v132
    %165 = vst [vmem:[#allocation2 + $0x170] sm:$0xff] %v133
    %v166 = vld [vmem:[#allocation2] sm:$0xff]
    %v167 = vld [vmem:[#allocation2 + $0x8] sm:$0xff]
    %v168 = vld [vmem:[#allocation2 + $0x10] sm:$0xff]
    %v169 = vld [vmem:[#allocation2 + $0x18] sm:$0xff]
    %v170 = vld [vmem:[#allocation2 + $0x20] sm:$0xff]
    %v171 = vld [vmem:[#allocation2 + $0x28] sm:$0xff]
    %v172 = vld [vmem:[#allocation2 + $0x30] sm:$0xff]
    %v173 = vld [vmem:[#allocation2 + $0x38] sm:$0xff]
    %v174 = vld [vmem:[#allocation2 + $0x40] sm:$0xff]
    %v175 = vld [vmem:[#allocation2 + $0x48] sm:$0xff]
    %v176 = vld [vmem:[#allocation2 + $0x50] sm:$0xff]
    %v177 = vld [vmem:[#allocation2 + $0x58] sm:$0xff]
    %v178 = vld [vmem:[#allocation2 + $0x60] sm:$0xff]
    %v179 = vld [vmem:[#allocation2 + $0x68] sm:$0xff]
    %v180 = vld [vmem:[#allocation2 + $0x70] sm:$0xff]
    %v181 = vld [vmem:[#allocation2 + $0x78] sm:$0xff]
    %v182 = vld [vmem:[#allocation2 + $0x80] sm:$0xff]
    %v183 = vld [vmem:[#allocation2 + $0x88] sm:$0xff]
    %v184 = vld [vmem:[#allocation2 + $0x90] sm:$0xff]
    %v185 = vld [vmem:[#allocation2 + $0x98] sm:$0xff]
    %v186 = vld [vmem:[#allocation2 + $0xa0] sm:$0xff]
    %v187 = vld [vmem:[#allocation2 + $0xa8] sm:$0xff]
    %v188 = vld [vmem:[#allocation2 + $0xb0] sm:$0xff]
    %v189 = vld [vmem:[#allocation2 + $0xb8] sm:$0xff]
    %v190 = vld [vmem:[#allocation2 + $0xc0] sm:$0xff]
    %v191 = vld [vmem:[#allocation2 + $0xc8] sm:$0xff]
    %v192 = vld [vmem:[#allocation2 + $0xd0] sm:$0xff]
    %v193 = vld [vmem:[#allocation2 + $0xd8] sm:$0xff]
    %v194 = vld [vmem:[#allocation2 + $0xe0] sm:$0xff]
    %v195 = vld [vmem:[#allocation2 + $0xe8] sm:$0xff]
    %v196 = vld [vmem:[#allocation2 + $0xf0] sm:$0xff]
    %v197 = vld [vmem:[#allocation2 + $0xf8] sm:$0xff]
    %v198 = vld [vmem:[#allocation2 + $0x100] sm:$0xff]
    %v199 = vld [vmem:[#allocation2 + $0x108] sm:$0xff]
    %v200 = vld [vmem:[#allocation2 + $0x110] sm:$0xff]
    %v201 = vld [vmem:[#allocation2 + $0x118] sm:$0xff]
    %v202 = vld [vmem:[#allocation2 + $0x120] sm:$0xff]
    %v203 = vld [vmem:[#allocation2 + $0x128] sm:$0xff]
    %v204 = vld [vmem:[#allocation2 + $0x130] sm:$0xff]
    %v205 = vld [vmem:[#allocation2 + $0x138] sm:$0xff]
    %v206 = vld [vmem:[#allocation2 + $0x140] sm:$0xff]
    %v207 = vld [vmem:[#allocation2 + $0x148] sm:$0xff]
    %v208 = vld [vmem:[#allocation2 + $0x150] sm:$0xff]
    %v209 = vld [vmem:[#allocation2 + $0x158] sm:$0xff]
    %v210 = vld [vmem:[#allocation2 + $0x160] sm:$0xff]
    %v211 = vld [vmem:[#allocation2 + $0x168] sm:$0xff]
    %v212 = vld [vmem:[#allocation2 + $0x170] sm:$0xff]
    %v213 = vld [vmem:[#allocation2 + $0x178] sm:$0xff]
    %v214 = vrot.slane %v166, 5
    %v215 = vrot.slane %v167, 5
    %v216 = vrot.slane %v168, 5
    %v217 = vrot.slane %v169, 5
    %v218 = vrot.slane %v170, 5
    %v219 = vrot.slane %v171, 5
    %v220 = vrot.slane %v172, 5
    %v221 = vrot.slane %v173, 5
    %v222 = vrot.slane %v174, 5
    %v223 = vrot.slane %v175, 5
    %v224 = vrot.slane %v176, 5
    %v225 = vrot.slane %v177, 5
    %v226 = vrot.slane %v178, 5
    %v227 = vrot.slane %v179, 5
    %v228 = vrot.slane %v180, 5
    %v229 = vrot.slane %v181, 5
    %v230 = vrot.slane %v182, 5
    %v231 = vrot.slane %v183, 5
    %v232 = vrot.slane %v184, 5
    %v233 = vrot.slane %v185, 5
    %v234 = vrot.slane %v186, 5
    %v235 = vrot.slane %v187, 5
    %v236 = vrot.slane %v188, 5
    %v237 = vrot.slane %v189, 5
    %v238 = vrot.slane %v190, 5
    %v239 = vrot.slane %v191, 5
    %v240 = vrot.slane %v192, 5
    %v241 = vrot.slane %v193, 5
    %v242 = vrot.slane %v194, 5
    %v243 = vrot.slane %v195, 5
    %v244 = vrot.slane %v196, 5
    %v245 = vrot.slane %v197, 5
    %v246 = vrot.slane %v198, 5
    %v247 = vrot.slane %v199, 5
    %v248 = vrot.slane %v200, 5
    %v249 = vrot.slane %v201, 5
    %v250 = vrot.slane %v202, 5
    %v251 = vrot.slane %v203, 5
    %v252 = vrot.slane %v204, 5
    %v253 = vrot.slane %v205, 5
    %v254 = vrot.slane %v206, 5
    %v255 = vrot.slane %v207, 5
    %v256 = vrot.slane %v208, 5
    %v257 = vrot.slane %v209, 5
    %v258 = vrot.slane %v210, 5
    %v259 = vrot.slane %v211, 5
    %v260 = vrot.slane %v212, 5
    %v261 = vrot.slane %v213, 5
    %v262 = vlaneseq
    %v263 = vshrl.u32 %v262, 7
    %vm264 = vcmp.lt.s32.totalorder %v263, 3
    %v265 = vsel %vm264, %v260, %v261
    %v266 = vsel %vm264, %v259, %v260
    %v267 = vsel %vm264, %v258, %v259
    %v268 = vsel %vm264, %v257, %v258
    %v269 = vsel %vm264, %v256, %v257
    %v270 = vsel %vm264, %v255, %v256
    %v271 = vsel %vm264, %v254, %v255
    %v272 = vsel %vm264, %v253, %v254
    %v273 = vsel %vm264, %v252, %v253
    %v274 = vsel %vm264, %v251, %v252
    %v275 = vsel %vm264, %v250, %v251
    %v276 = vsel %vm264, %v249, %v250
    %v277 = vsel %vm264, %v248, %v249
    %v278 = vsel %vm264, %v247, %v248
    %v279 = vsel %vm264, %v246, %v247
    %v280 = vsel %vm264, %v245, %v246
    %v281 = vsel %vm264, %v244, %v245
    %v282 = vsel %vm264, %v243, %v244
    %v283 = vsel %vm264, %v242, %v243
    %v284 = vsel %vm264, %v241, %v242
    %v285 = vsel %vm264, %v240, %v241
    %v286 = vsel %vm264, %v239, %v240
    %v287 = vsel %vm264, %v238, %v239
    %v288 = vsel %vm264, %v237, %v238
    %v289 = vsel %vm264, %v236, %v237
    %v290 = vsel %vm264, %v235, %v236
    %v291 = vsel %vm264, %v234, %v235
    %v292 = vsel %vm264, %v233, %v234
    %v293 = vsel %vm264, %v232, %v233
    %v294 = vsel %vm264, %v231, %v232
    %v295 = vsel %vm264, %v230, %v231
    %v296 = vsel %vm264, %v229, %v230
    %v297 = vsel %vm264, %v228, %v229
    %v298 = vsel %vm264, %v227, %v228
    %v299 = vsel %vm264, %v226, %v227
    %v300 = vsel %vm264, %v225, %v226
    %v301 = vsel %vm264, %v224, %v225
    %v302 = vsel %vm264, %v223, %v224
    %v303 = vsel %vm264, %v222, %v223
    %v304 = vsel %vm264, %v221, %v222
    %v305 = vsel %vm264, %v220, %v221
    %v306 = vsel %vm264, %v219, %v220
    %v307 = vsel %vm264, %v218, %v219
    %v308 = vsel %vm264, %v217, %v218
    %v309 = vsel %vm264, %v216, %v217
    %v310 = vsel %vm264, %v215, %v216
    %v311 = vsel %vm264, %v214, %v215
    %v312 = vsel %vm264, %v261, %v214
    %v313 = vpack.c.bf16 %v311, %v312
    %v314 = vpack.c.bf16 %v309, %v310
    %v315 = vpack.c.bf16 %v307, %v308
    %v316 = vpack.c.bf16 %v305, %v306
    %v317 = vpack.c.bf16 %v303, %v304
    %v318 = vpack.c.bf16 %v301, %v302
    %v319 = vpack.c.bf16 %v299, %v300
    %v320 = vpack.c.bf16 %v297, %v298
    %v321 = vpack.c.bf16 %v295, %v296
    %v322 = vpack.c.bf16 %v293, %v294
    %v323 = vpack.c.bf16 %v291, %v292
    %v324 = vpack.c.bf16 %v289, %v290
    %v325 = vpack.c.bf16 %v287, %v288
    %v326 = vpack.c.bf16 %v285, %v286
    %v327 = vpack.c.bf16 %v283, %v284
    %v328 = vpack.c.bf16 %v281, %v282
    %v329 = vpack.c.bf16 %v279, %v280
    %v330 = vpack.c.bf16 %v277, %v278
    %v331 = vpack.c.bf16 %v275, %v276
    %v332 = vpack.c.bf16 %v273, %v274
    %v333 = vpack.c.bf16 %v271, %v272
    %v334 = vpack.c.bf16 %v269, %v270
    %v335 = vpack.c.bf16 %v267, %v268
    %v336 = vpack.c.bf16 %v265, %v266
    %337 = vst [vmem:[#allocation3] sm:$0xff] %v313
    %338 = vst [vmem:[#allocation3 + $0x38] sm:$0xff] %v314
    %339 = vst [vmem:[#allocation3 + $0x70] sm:$0xff] %v315
    %340 = vst [vmem:[#allocation3 + $0xa8] sm:$0xff] %v316
    %341 = vst [vmem:[#allocation3 + $0xe0] sm:$0xff] %v317
    %342 = vst [vmem:[#allocation3 + $0x118] sm:$0xff] %v318
    %343 = vst [vmem:[#allocation3 + $0x150] sm:$0xff] %v319
    %344 = vst [vmem:[#allocation3 + $0x188] sm:$0xff] %v320
    %345 = vst [vmem:[#allocation3 + $0x1c0] sm:$0xff] %v321
    %346 = vst [vmem:[#allocation3 + $0x1f8] sm:$0xff] %v322
    %347 = vst [vmem:[#allocation3 + $0x230] sm:$0xff] %v323
    %348 = vst [vmem:[#allocation3 + $0x268] sm:$0xff] %v324
    %349 = vst [vmem:[#allocation3 + $0x2a0] sm:$0xff] %v325
    %350 = vst [vmem:[#allocation3 + $0x2d8] sm:$0xff] %v326
    %351 = vst [vmem:[#allocation3 + $0x310] sm:$0xff] %v327
    %352 = vst [vmem:[#allocation3 + $0x348] sm:$0xff] %v328
    %353 = vst [vmem:[#allocation3 + $0x380] sm:$0xff] %v329
    %354 = vst [vmem:[#allocation3 + $0x3b8] sm:$0xff] %v330
    %355 = vst [vmem:[#allocation3 + $0x3f0] sm:$0xff] %v331
    %356 = vst [vmem:[#allocation3 + $0x428] sm:$0xff] %v332
    %357 = vst [vmem:[#allocation3 + $0x460] sm:$0xff] %v333
    %358 = vst [vmem:[#allocation3 + $0x498] sm:$0xff] %v334
    %359 = vst [vmem:[#allocation3 + $0x4d0] sm:$0xff] %v335
    %360 = vst [vmem:[#allocation3 + $0x508] sm:$0xff] %v336
    %v361 = vrot.slane %v166, 6
    %v362 = vrot.slane %v167, 6
    %v363 = vrot.slane %v168, 6
    %v364 = vrot.slane %v169, 6
    %v365 = vrot.slane %v170, 6
    %v366 = vrot.slane %v171, 6
    %v367 = vrot.slane %v172, 6
    %v368 = vrot.slane %v173, 6
    %v369 = vrot.slane %v174, 6
    %v370 = vrot.slane %v175, 6
    %v371 = vrot.slane %v176, 6
    %v372 = vrot.slane %v177, 6
    %v373 = vrot.slane %v178, 6
    %v374 = vrot.slane %v179, 6
    %v375 = vrot.slane %v180, 6
    %v376 = vrot.slane %v181, 6
    %v377 = vrot.slane %v182, 6
    %v378 = vrot.slane %v183, 6
    %v379 = vrot.slane %v184, 6
    %v380 = vrot.slane %v185, 6
    %v381 = vrot.slane %v186, 6
    %v382 = vrot.slane %v187, 6
    %v383 = vrot.slane %v188, 6
    %v384 = vrot.slane %v189, 6
    %v385 = vrot.slane %v190, 6
    %v386 = vrot.slane %v191, 6
    %v387 = vrot.slane %v192, 6
    %v388 = vrot.slane %v193, 6
    %v389 = vrot.slane %v194, 6
    %v390 = vrot.slane %v195, 6
    %v391 = vrot.slane %v196, 6
    %v392 = vrot.slane %v197, 6
    %v393 = vrot.slane %v198, 6
    %v394 = vrot.slane %v199, 6
    %v395 = vrot.slane %v200, 6
    %v396 = vrot.slane %v201, 6
    %v397 = vrot.slane %v202, 6
    %v398 = vrot.slane %v203, 6
    %v399 = vrot.slane %v204, 6
    %v400 = vrot.slane %v205, 6
    %v401 = vrot.slane %v206, 6
    %v402 = vrot.slane %v207, 6
    %v403 = vrot.slane %v208, 6
    %v404 = vrot.slane %v209, 6
    %v405 = vrot.slane %v210, 6
    %v406 = vrot.slane %v211, 6
    %v407 = vrot.slane %v212, 6
    %v408 = vrot.slane %v213, 6
    %vm409 = vcmp.lt.s32.totalorder %v263, 2
    %v410 = vsel %vm409, %v407, %v408
    %v411 = vsel %vm409, %v406, %v407
    %v412 = vsel %vm409, %v405, %v406
    %v413 = vsel %vm409, %v404, %v405
    %v414 = vsel %vm409, %v403, %v404
    %v415 = vsel %vm409, %v402, %v403
    %v416 = vsel %vm409, %v401, %v402
    %v417 = vsel %vm409, %v400, %v401
    %v418 = vsel %vm409, %v399, %v400
    %v419 = vsel %vm409, %v398, %v399
    %v420 = vsel %vm409, %v397, %v398
    %v421 = vsel %vm409, %v396, %v397
    %v422 = vsel %vm409, %v395, %v396
    %v423 = vsel %vm409, %v394, %v395
    %v424 = vsel %vm409, %v393, %v394
    %v425 = vsel %vm409, %v392, %v393
    %v426 = vsel %vm409, %v391, %v392
    %v427 = vsel %vm409, %v390, %v391
    %v428 = vsel %vm409, %v389, %v390
    %v429 = vsel %vm409, %v388, %v389
    %v430 = vsel %vm409, %v387, %v388
    %v431 = vsel %vm409, %v386, %v387
    %v432 = vsel %vm409, %v385, %v386
    %v433 = vsel %vm409, %v384, %v385
    %v434 = vsel %vm409, %v383, %v384
    %v435 = vsel %vm409, %v382, %v383
    %v436 = vsel %vm409, %v381, %v382
    %v437 = vsel %vm409, %v380, %v381
    %v438 = vsel %vm409, %v379, %v380
    %v439 = vsel %vm409, %v378, %v379
    %v440 = vsel %vm409, %v377, %v378
    %v441 = vsel %vm409, %v376, %v377
    %v442 = vsel %vm409, %v375, %v376
    %v443 = vsel %vm409, %v374, %v375
    %v444 = vsel %vm409, %v373, %v374
    %v445 = vsel %vm409, %v372, %v373
    %v446 = vsel %vm409, %v371, %v372
    %v447 = vsel %vm409, %v370, %v371
    %v448 = vsel %vm409, %v369, %v370
    %v449 = vsel %vm409, %v368, %v369
    %v450 = vsel %vm409, %v367, %v368
    %v451 = vsel %vm409, %v366, %v367
    %v452 = vsel %vm409, %v365, %v366
    %v453 = vsel %vm409, %v364, %v365
    %v454 = vsel %vm409, %v363, %v364
    %v455 = vsel %vm409, %v362, %v363
    %v456 = vsel %vm409, %v361, %v362
    %v457 = vsel %vm409, %v408, %v361
    %v458 = vpack.c.bf16 %v456, %v457
    %v459 = vpack.c.bf16 %v454, %v455
    %v460 = vpack.c.bf16 %v452, %v453
    %v461 = vpack.c.bf16 %v450, %v451
    %v462 = vpack.c.bf16 %v448, %v449
    %v463 = vpack.c.bf16 %v446, %v447
    %v464 = vpack.c.bf16 %v444, %v445
    %v465 = vpack.c.bf16 %v442, %v443
    %v466 = vpack.c.bf16 %v440, %v441
    %v467 = vpack.c.bf16 %v438, %v439
    %v468 = vpack.c.bf16 %v436, %v437
    %v469 = vpack.c.bf16 %v434, %v435
    %v470 = vpack.c.bf16 %v432, %v433
    %v471 = vpack.c.bf16 %v430, %v431
    %v472 = vpack.c.bf16 %v428, %v429
    %v473 = vpack.c.bf16 %v426, %v427
    %v474 = vpack.c.bf16 %v424, %v425
    %v475 = vpack.c.bf16 %v422, %v423
    %v476 = vpack.c.bf16 %v420, %v421
    %v477 = vpack.c.bf16 %v418, %v419
    %v478 = vpack.c.bf16 %v416, %v417
    %v479 = vpack.c.bf16 %v414, %v415
    %v480 = vpack.c.bf16 %v412, %v413
    %v481 = vpack.c.bf16 %v410, %v411
    %482 = vst [vmem:[#allocation3 + $0x8] sm:$0xff] %v458
    %483 = vst [vmem:[#allocation3 + $0x40] sm:$0xff] %v459
    %484 = vst [vmem:[#allocation3 + $0x78] sm:$0xff] %v460
    %485 = vst [vmem:[#allocation3 + $0xb0] sm:$0xff] %v461
    %486 = vst [vmem:[#allocation3 + $0xe8] sm:$0xff] %v462
    %487 = vst [vmem:[#allocation3 + $0x120] sm:$0xff] %v463
    %488 = vst [vmem:[#allocation3 + $0x158] sm:$0xff] %v464
    %489 = vst [vmem:[#allocation3 + $0x190] sm:$0xff] %v465
    %490 = vst [vmem:[#allocation3 + $0x1c8] sm:$0xff] %v466
    %491 = vst [vmem:[#allocation3 + $0x200] sm:$0xff] %v467
    %492 = vst [vmem:[#allocation3 + $0x238] sm:$0xff] %v468
    %493 = vst [vmem:[#allocation3 + $0x270] sm:$0xff] %v469
    %494 = vst [vmem:[#allocation3 + $0x2a8] sm:$0xff] %v470
    %495 = vst [vmem:[#allocation3 + $0x2e0] sm:$0xff] %v471
    %496 = vst [vmem:[#allocation3 + $0x318] sm:$0xff] %v472
    %497 = vst [vmem:[#allocation3 + $0x350] sm:$0xff] %v473
    %498 = vst [vmem:[#allocation3 + $0x388] sm:$0xff] %v474
    %499 = vst [vmem:[#allocation3 + $0x3c0] sm:$0xff] %v475
    %500 = vst [vmem:[#allocation3 + $0x3f8] sm:$0xff] %v476
    %501 = vst [vmem:[#allocation3 + $0x430] sm:$0xff] %v477
    %502 = vst [vmem:[#allocation3 + $0x468] sm:$0xff] %v478
    %503 = vst [vmem:[#allocation3 + $0x4a0] sm:$0xff] %v479
    %504 = vst [vmem:[#allocation3 + $0x4d8] sm:$0xff] %v480
    %505 = vst [vmem:[#allocation3 + $0x510] sm:$0xff] %v481
    %v506 = vrot.slane %v166, 7
    %v507 = vrot.slane %v167, 7
    %v508 = vrot.slane %v168, 7
    %v509 = vrot.slane %v169, 7
    %v510 = vrot.slane %v170, 7
    %v511 = vrot.slane %v171, 7
    %v512 = vrot.slane %v172, 7
    %v513 = vrot.slane %v173, 7
    %v514 = vrot.slane %v174, 7
    %v515 = vrot.slane %v175, 7
    %v516 = vrot.slane %v176, 7
    %v517 = vrot.slane %v177, 7
    %v518 = vrot.slane %v178, 7
    %v519 = vrot.slane %v179, 7
    %v520 = vrot.slane %v180, 7
    %v521 = vrot.slane %v181, 7
    %v522 = vrot.slane %v182, 7
    %v523 = vrot.slane %v183, 7
    %v524 = vrot.slane %v184, 7
    %v525 = vrot.slane %v185, 7
    %v526 = vrot.slane %v186, 7
    %v527 = vrot.slane %v187, 7
    %v528 = vrot.slane %v188, 7
    %v529 = vrot.slane %v189, 7
    %v530 = vrot.slane %v190, 7
    %v531 = vrot.slane %v191, 7
    %v532 = vrot.slane %v192, 7
    %v533 = vrot.slane %v193, 7
    %v534 = vrot.slane %v194, 7
    %v535 = vrot.slane %v195, 7
    %v536 = vrot.slane %v196, 7
    %v537 = vrot.slane %v197, 7
    %v538 = vrot.slane %v198, 7
    %v539 = vrot.slane %v199, 7
    %v540 = vrot.slane %v200, 7
    %v541 = vrot.slane %v201, 7
    %v542 = vrot.slane %v202, 7
    %v543 = vrot.slane %v203, 7
    %v544 = vrot.slane %v204, 7
    %v545 = vrot.slane %v205, 7
    %v546 = vrot.slane %v206, 7
    %v547 = vrot.slane %v207, 7
    %v548 = vrot.slane %v208, 7
    %v549 = vrot.slane %v209, 7
    %v550 = vrot.slane %v210, 7
    %v551 = vrot.slane %v211, 7
    %v552 = vrot.slane %v212, 7
    %v553 = vrot.slane %v213, 7
    %vm554 = vcmp.lt.s32.totalorder %v263, 1
    %v555 = vsel %vm554, %v552, %v553
    %v556 = vsel %vm554, %v551, %v552
    %v557 = vsel %vm554, %v550, %v551
    %v558 = vsel %vm554, %v549, %v550
    %v559 = vsel %vm554, %v548, %v549
    %v560 = vsel %vm554, %v547, %v548
    %v561 = vsel %vm554, %v546, %v547
    %v562 = vsel %vm554, %v545, %v546
    %v563 = vsel %vm554, %v544, %v545
    %v564 = vsel %vm554, %v543, %v544
    %v565 = vsel %vm554, %v542, %v543
    %v566 = vsel %vm554, %v541, %v542
    %v567 = vsel %vm554, %v540, %v541
    %v568 = vsel %vm554, %v539, %v540
    %v569 = vsel %vm554, %v538, %v539
    %v570 = vsel %vm554, %v537, %v538
    %v571 = vsel %vm554, %v536, %v537
    %v572 = vsel %vm554, %v535, %v536
    %v573 = vsel %vm554, %v534, %v535
    %v574 = vsel %vm554, %v533, %v534
    %v575 = vsel %vm554, %v532, %v533
    %v576 = vsel %vm554, %v531, %v532
    %v577 = vsel %vm554, %v530, %v531
    %v578 = vsel %vm554, %v529, %v530
    %v579 = vsel %vm554, %v528, %v529
    %v580 = vsel %vm554, %v527, %v528
    %v581 = vsel %vm554, %v526, %v527
    %v582 = vsel %vm554, %v525, %v526
    %v583 = vsel %vm554, %v524, %v525
    %v584 = vsel %vm554, %v523, %v524
    %v585 = vsel %vm554, %v522, %v523
    %v586 = vsel %vm554, %v521, %v522
    %v587 = vsel %vm554, %v520, %v521
    %v588 = vsel %vm554, %v519, %v520
    %v589 = vsel %vm554, %v518, %v519
    %v590 = vsel %vm554, %v517, %v518
    %v591 = vsel %vm554, %v516, %v517
    %v592 = vsel %vm554, %v515, %v516
    %v593 = vsel %vm554, %v514, %v515
    %v594 = vsel %vm554, %v513, %v514
    %v595 = vsel %vm554, %v512, %v513
    %v596 = vsel %vm554, %v511, %v512
    %v597 = vsel %vm554, %v510, %v511
    %v598 = vsel %vm554, %v509, %v510
    %v599 = vsel %vm554, %v508, %v509
    %v600 = vsel %vm554, %v507, %v508
    %v601 = vsel %vm554, %v506, %v507
    %v602 = vsel %vm554, %v553, %v506
    %v603 = vpack.c.bf16 %v601, %v602
    %v604 = vpack.c.bf16 %v599, %v600
    %v605 = vpack.c.bf16 %v597, %v598
    %v606 = vpack.c.bf16 %v595, %v596
    %v607 = vpack.c.bf16 %v593, %v594
    %v608 = vpack.c.bf16 %v591, %v592
    %v609 = vpack.c.bf16 %v589, %v590
    %v610 = vpack.c.bf16 %v587, %v588
    %v611 = vpack.c.bf16 %v585, %v586
    %v612 = vpack.c.bf16 %v583, %v584
    %v613 = vpack.c.bf16 %v581, %v582
    %v614 = vpack.c.bf16 %v579, %v580
    %v615 = vpack.c.bf16 %v577, %v578
    %v616 = vpack.c.bf16 %v575, %v576
    %v617 = vpack.c.bf16 %v573, %v574
    %v618 = vpack.c.bf16 %v571, %v572
    %v619 = vpack.c.bf16 %v569, %v570
    %v620 = vpack.c.bf16 %v567, %v568
    %v621 = vpack.c.bf16 %v565, %v566
    %v622 = vpack.c.bf16 %v563, %v564
    %v623 = vpack.c.bf16 %v561, %v562
    %v624 = vpack.c.bf16 %v559, %v560
    %v625 = vpack.c.bf16 %v557, %v558
    %v626 = vpack.c.bf16 %v555, %v556
    %627 = vst [vmem:[#allocation3 + $0x10] sm:$0xff] %v603
    %628 = vst [vmem:[#allocation3 + $0x48] sm:$0xff] %v604
    %629 = vst [vmem:[#allocation3 + $0x80] sm:$0xff] %v605
    %630 = vst [vmem:[#allocation3 + $0xb8] sm:$0xff] %v606
    %631 = vst [vmem:[#allocation3 + $0xf0] sm:$0xff] %v607
    %632 = vst [vmem:[#allocation3 + $0x128] sm:$0xff] %v608
    %633 = vst [vmem:[#allocation3 + $0x160] sm:$0xff] %v609
    %634 = vst [vmem:[#allocation3 + $0x198] sm:$0xff] %v610
    %635 = vst [vmem:[#allocation3 + $0x1d0] sm:$0xff] %v611
    %636 = vst [vmem:[#allocation3 + $0x208] sm:$0xff] %v612
    %637 = vst [vmem:[#allocation3 + $0x240] sm:$0xff] %v613
    %638 = vst [vmem:[#allocation3 + $0x278] sm:$0xff] %v614
    %639 = vst [vmem:[#allocation3 + $0x2b0] sm:$0xff] %v615
    %640 = vst [vmem:[#allocation3 + $0x2e8] sm:$0xff] %v616
    %641 = vst [vmem:[#allocation3 + $0x320] sm:$0xff] %v617
    %642 = vst [vmem:[#allocation3 + $0x358] sm:$0xff] %v618
    %643 = vst [vmem:[#allocation3 + $0x390] sm:$0xff] %v619
    %644 = vst [vmem:[#allocation3 + $0x3c8] sm:$0xff] %v620
    %645 = vst [vmem:[#allocation3 + $0x400] sm:$0xff] %v621
    %646 = vst [vmem:[#allocation3 + $0x438] sm:$0xff] %v622
    %647 = vst [vmem:[#allocation3 + $0x470] sm:$0xff] %v623
    %648 = vst [vmem:[#allocation3 + $0x4a8] sm:$0xff] %v624
    %649 = vst [vmem:[#allocation3 + $0x4e0] sm:$0xff] %v625
    %650 = vst [vmem:[#allocation3 + $0x518] sm:$0xff] %v626
    %v651 = vpack.c.bf16 %v167, %v166
    %v652 = vpack.c.bf16 %v169, %v168
    %v653 = vpack.c.bf16 %v171, %v170
    %v654 = vpack.c.bf16 %v173, %v172
    %v655 = vpack.c.bf16 %v175, %v174
    %v656 = vpack.c.bf16 %v177, %v176
    %v657 = vpack.c.bf16 %v179, %v178
    %v658 = vpack.c.bf16 %v181, %v180
    %v659 = vpack.c.bf16 %v183, %v182
    %v660 = vpack.c.bf16 %v185, %v184
    %v661 = vpack.c.bf16 %v187, %v186
    %v662 = vpack.c.bf16 %v189, %v188
    %v663 = vpack.c.bf16 %v191, %v190
    %v664 = vpack.c.bf16 %v193, %v192
    %v665 = vpack.c.bf16 %v195, %v194
    %v666 = vpack.c.bf16 %v197, %v196
    %v667 = vpack.c.bf16 %v199, %v198
    %v668 = vpack.c.bf16 %v201, %v200
    %v669 = vpack.c.bf16 %v203, %v202
    %v670 = vpack.c.bf16 %v205, %v204
    %v671 = vpack.c.bf16 %v207, %v206
    %v672 = vpack.c.bf16 %v209, %v208
    %v673 = vpack.c.bf16 %v211, %v210
    %v674 = vpack.c.bf16 %v213, %v212
    %675 = vst [vmem:[#allocation3 + $0x18] sm:$0xff] %v651
    %676 = vst [vmem:[#allocation3 + $0x50] sm:$0xff] %v652
    %677 = vst [vmem:[#allocation3 + $0x88] sm:$0xff] %v653
    %678 = vst [vmem:[#allocation3 + $0xc0] sm:$0xff] %v654
    %679 = vst [vmem:[#allocation3 + $0xf8] sm:$0xff] %v655
    %680 = vst [vmem:[#allocation3 + $0x130] sm:$0xff] %v656
    %681 = vst [vmem:[#allocation3 + $0x168] sm:$0xff] %v657
    %682 = vst [vmem:[#allocation3 + $0x1a0] sm:$0xff] %v658
    %683 = vst [vmem:[#allocation3 + $0x1d8] sm:$0xff] %v659
    %684 = vst [vmem:[#allocation3 + $0x210] sm:$0xff] %v660
    %685 = vst [vmem:[#allocation3 + $0x248] sm:$0xff] %v661
    %686 = vst [vmem:[#allocation3 + $0x280] sm:$0xff] %v662
    %687 = vst [vmem:[#allocation3 + $0x2b8] sm:$0xff] %v663
    %688 = vst [vmem:[#allocation3 + $0x2f0] sm:$0xff] %v664
    %689 = vst [vmem:[#allocation3 + $0x328] sm:$0xff] %v665
    %690 = vst [vmem:[#allocation3 + $0x360] sm:$0xff] %v666
    %691 = vst [vmem:[#allocation3 + $0x398] sm:$0xff] %v667
    %692 = vst [vmem:[#allocation3 + $0x3d0] sm:$0xff] %v668
    %693 = vst [vmem:[#allocation3 + $0x408] sm:$0xff] %v669
    %694 = vst [vmem:[#allocation3 + $0x440] sm:$0xff] %v670
    %695 = vst [vmem:[#allocation3 + $0x478] sm:$0xff] %v671
    %696 = vst [vmem:[#allocation3 + $0x4b0] sm:$0xff] %v672
    %697 = vst [vmem:[#allocation3 + $0x4e8] sm:$0xff] %v673
    %698 = vst [vmem:[#allocation3 + $0x520] sm:$0xff] %v674
    %v699 = vrot.slane %v166, 1
    %v700 = vrot.slane %v167, 1
    %v701 = vrot.slane %v168, 1
    %v702 = vrot.slane %v169, 1
    %v703 = vrot.slane %v170, 1
    %v704 = vrot.slane %v171, 1
    %v705 = vrot.slane %v172, 1
    %v706 = vrot.slane %v173, 1
    %v707 = vrot.slane %v174, 1
    %v708 = vrot.slane %v175, 1
    %v709 = vrot.slane %v176, 1
    %v710 = vrot.slane %v177, 1
    %v711 = vrot.slane %v178, 1
    %v712 = vrot.slane %v179, 1
    %v713 = vrot.slane %v180, 1
    %v714 = vrot.slane %v181, 1
    %v715 = vrot.slane %v182, 1
    %v716 = vrot.slane %v183, 1
    %v717 = vrot.slane %v184, 1
    %v718 = vrot.slane %v185, 1
    %v719 = vrot.slane %v186, 1
    %v720 = vrot.slane %v187, 1
    %v721 = vrot.slane %v188, 1
    %v722 = vrot.slane %v189, 1
    %v723 = vrot.slane %v190, 1
    %v724 = vrot.slane %v191, 1
    %v725 = vrot.slane %v192, 1
    %v726 = vrot.slane %v193, 1
    %v727 = vrot.slane %v194, 1
    %v728 = vrot.slane %v195, 1
    %v729 = vrot.slane %v196, 1
    %v730 = vrot.slane %v197, 1
    %v731 = vrot.slane %v198, 1
    %v732 = vrot.slane %v199, 1
    %v733 = vrot.slane %v200, 1
    %v734 = vrot.slane %v201, 1
    %v735 = vrot.slane %v202, 1
    %v736 = vrot.slane %v203, 1
    %v737 = vrot.slane %v204, 1
    %v738 = vrot.slane %v205, 1
    %v739 = vrot.slane %v206, 1
    %v740 = vrot.slane %v207, 1
    %v741 = vrot.slane %v208, 1
    %v742 = vrot.slane %v209, 1
    %v743 = vrot.slane %v210, 1
    %v744 = vrot.slane %v211, 1
    %v745 = vrot.slane %v212, 1
    %v746 = vrot.slane %v213, 1
    %vm747 = vcmp.lt.s32.totalorder %v263, 7
    %v748 = vsel %vm747, %v745, %v746
    %v749 = vsel %vm747, %v744, %v745
    %v750 = vsel %vm747, %v743, %v744
    %v751 = vsel %vm747, %v742, %v743
    %v752 = vsel %vm747, %v741, %v742
    %v753 = vsel %vm747, %v740, %v741
    %v754 = vsel %vm747, %v739, %v740
    %v755 = vsel %vm747, %v738, %v739
    %v756 = vsel %vm747, %v737, %v738
    %v757 = vsel %vm747, %v736, %v737
    %v758 = vsel %vm747, %v735, %v736
    %v759 = vsel %vm747, %v734, %v735
    %v760 = vsel %vm747, %v733, %v734
    %v761 = vsel %vm747, %v732, %v733
    %v762 = vsel %vm747, %v731, %v732
    %v763 = vsel %vm747, %v730, %v731
    %v764 = vsel %vm747, %v729, %v730
    %v765 = vsel %vm747, %v728, %v729
    %v766 = vsel %vm747, %v727, %v728
    %v767 = vsel %vm747, %v726, %v727
    %v768 = vsel %vm747, %v725, %v726
    %v769 = vsel %vm747, %v724, %v725
    %v770 = vsel %vm747, %v723, %v724
    %v771 = vsel %vm747, %v722, %v723
    %v772 = vsel %vm747, %v721, %v722
    %v773 = vsel %vm747, %v720, %v721
    %v774 = vsel %vm747, %v719, %v720
    %v775 = vsel %vm747, %v718, %v719
    %v776 = vsel %vm747, %v717, %v718
    %v777 = vsel %vm747, %v716, %v717
    %v778 = vsel %vm747, %v715, %v716
    %v779 = vsel %vm747, %v714, %v715
    %v780 = vsel %vm747, %v713, %v714
    %v781 = vsel %vm747, %v712, %v713
    %v782 = vsel %vm747, %v711, %v712
    %v783 = vsel %vm747, %v710, %v711
    %v784 = vsel %vm747, %v709, %v710
    %v785 = vsel %vm747, %v708, %v709
    %v786 = vsel %vm747, %v707, %v708
    %v787 = vsel %vm747, %v706, %v707
    %v788 = vsel %vm747, %v705, %v706
    %v789 = vsel %vm747, %v704, %v705
    %v790 = vsel %vm747, %v703, %v704
    %v791 = vsel %vm747, %v702, %v703
    %v792 = vsel %vm747, %v701, %v702
    %v793 = vsel %vm747, %v700, %v701
    %v794 = vsel %vm747, %v699, %v700
    %v795 = vsel %vm747, %v746, %v699
    %v796 = vpack.c.bf16 %v793, %v794
    %v797 = vpack.c.bf16 %v791, %v792
    %v798 = vpack.c.bf16 %v789, %v790
    %v799 = vpack.c.bf16 %v787, %v788
    %v800 = vpack.c.bf16 %v785, %v786
    %v801 = vpack.c.bf16 %v783, %v784
    %v802 = vpack.c.bf16 %v781, %v782
    %v803 = vpack.c.bf16 %v779, %v780
    %v804 = vpack.c.bf16 %v777, %v778
    %v805 = vpack.c.bf16 %v775, %v776
    %v806 = vpack.c.bf16 %v773, %v774
    %v807 = vpack.c.bf16 %v771, %v772
    %v808 = vpack.c.bf16 %v769, %v770
    %v809 = vpack.c.bf16 %v767, %v768
    %v810 = vpack.c.bf16 %v765, %v766
    %v811 = vpack.c.bf16 %v763, %v764
    %v812 = vpack.c.bf16 %v761, %v762
    %v813 = vpack.c.bf16 %v759, %v760
    %v814 = vpack.c.bf16 %v757, %v758
    %v815 = vpack.c.bf16 %v755, %v756
    %v816 = vpack.c.bf16 %v753, %v754
    %v817 = vpack.c.bf16 %v751, %v752
    %v818 = vpack.c.bf16 %v749, %v750
    %v819 = vpack.c.bf16 %v795, %v748
    %820 = vst [vmem:[#allocation3 + $0x20] sm:$0xff] %v796
    %821 = vst [vmem:[#allocation3 + $0x58] sm:$0xff] %v797
    %822 = vst [vmem:[#allocation3 + $0x90] sm:$0xff] %v798
    %823 = vst [vmem:[#allocation3 + $0xc8] sm:$0xff] %v799
    %824 = vst [vmem:[#allocation3 + $0x100] sm:$0xff] %v800
    %825 = vst [vmem:[#allocation3 + $0x138] sm:$0xff] %v801
    %826 = vst [vmem:[#allocation3 + $0x170] sm:$0xff] %v802
    %827 = vst [vmem:[#allocation3 + $0x1a8] sm:$0xff] %v803
    %828 = vst [vmem:[#allocation3 + $0x1e0] sm:$0xff] %v804
    %829 = vst [vmem:[#allocation3 + $0x218] sm:$0xff] %v805
    %830 = vst [vmem:[#allocation3 + $0x250] sm:$0xff] %v806
    %831 = vst [vmem:[#allocation3 + $0x288] sm:$0xff] %v807
    %832 = vst [vmem:[#allocation3 + $0x2c0] sm:$0xff] %v808
    %833 = vst [vmem:[#allocation3 + $0x2f8] sm:$0xff] %v809
    %834 = vst [vmem:[#allocation3 + $0x330] sm:$0xff] %v810
    %835 = vst [vmem:[#allocation3 + $0x368] sm:$0xff] %v811
    %836 = vst [vmem:[#allocation3 + $0x3a0] sm:$0xff] %v812
    %837 = vst [vmem:[#allocation3 + $0x3d8] sm:$0xff] %v813
    %838 = vst [vmem:[#allocation3 + $0x410] sm:$0xff] %v814
    %839 = vst [vmem:[#allocation3 + $0x448] sm:$0xff] %v815
    %840 = vst [vmem:[#allocation3 + $0x480] sm:$0xff] %v816
    %841 = vst [vmem:[#allocation3 + $0x4b8] sm:$0xff] %v817
    %842 = vst [vmem:[#allocation3 + $0x4f0] sm:$0xff] %v818
    %843 = vst [vmem:[#allocation3 + $0x528] sm:$0xff] %v819
    %v844 = vrot.slane %v166, 2
    %v845 = vrot.slane %v167, 2
    %v846 = vrot.slane %v168, 2
    %v847 = vrot.slane %v169, 2
    %v848 = vrot.slane %v170, 2
    %v849 = vrot.slane %v171, 2
    %v850 = vrot.slane %v172, 2
    %v851 = vrot.slane %v173, 2
    %v852 = vrot.slane %v174, 2
    %v853 = vrot.slane %v175, 2
    %v854 = vrot.slane %v176, 2
    %v855 = vrot.slane %v177, 2
    %v856 = vrot.slane %v178, 2
    %v857 = vrot.slane %v179, 2
    %v858 = vrot.slane %v180, 2
    %v859 = vrot.slane %v181, 2
    %v860 = vrot.slane %v182, 2
    %v861 = vrot.slane %v183, 2
    %v862 = vrot.slane %v184, 2
    %v863 = vrot.slane %v185, 2
    %v864 = vrot.slane %v186, 2
    %v865 = vrot.slane %v187, 2
    %v866 = vrot.slane %v188, 2
    %v867 = vrot.slane %v189, 2
    %v868 = vrot.slane %v190, 2
    %v869 = vrot.slane %v191, 2
    %v870 = vrot.slane %v192, 2
    %v871 = vrot.slane %v193, 2
    %v872 = vrot.slane %v194, 2
    %v873 = vrot.slane %v195, 2
    %v874 = vrot.slane %v196, 2
    %v875 = vrot.slane %v197, 2
    %v876 = vrot.slane %v198, 2
    %v877 = vrot.slane %v199, 2
    %v878 = vrot.slane %v200, 2
    %v879 = vrot.slane %v201, 2
    %v880 = vrot.slane %v202, 2
    %v881 = vrot.slane %v203, 2
    %v882 = vrot.slane %v204, 2
    %v883 = vrot.slane %v205, 2
    %v884 = vrot.slane %v206, 2
    %v885 = vrot.slane %v207, 2
    %v886 = vrot.slane %v208, 2
    %v887 = vrot.slane %v209, 2
    %v888 = vrot.slane %v210, 2
    %v889 = vrot.slane %v211, 2
    %v890 = vrot.slane %v212, 2
    %v891 = vrot.slane %v213, 2
    %vm892 = vcmp.lt.s32.totalorder %v263, 6
    %v893 = vsel %vm892, %v890, %v891
    %v894 = vsel %vm892, %v889, %v890
    %v895 = vsel %vm892, %v888, %v889
    %v896 = vsel %vm892, %v887, %v888
    %v897 = vsel %vm892, %v886, %v887
    %v898 = vsel %vm892, %v885, %v886
    %v899 = vsel %vm892, %v884, %v885
    %v900 = vsel %vm892, %v883, %v884
    %v901 = vsel %vm892, %v882, %v883
    %v902 = vsel %vm892, %v881, %v882
    %v903 = vsel %vm892, %v880, %v881
    %v904 = vsel %vm892, %v879, %v880
    %v905 = vsel %vm892, %v878, %v879
    %v906 = vsel %vm892, %v877, %v878
    %v907 = vsel %vm892, %v876, %v877
    %v908 = vsel %vm892, %v875, %v876
    %v909 = vsel %vm892, %v874, %v875
    %v910 = vsel %vm892, %v873, %v874
    %v911 = vsel %vm892, %v872, %v873
    %v912 = vsel %vm892, %v871, %v872
    %v913 = vsel %vm892, %v870, %v871
    %v914 = vsel %vm892, %v869, %v870
    %v915 = vsel %vm892, %v868, %v869
    %v916 = vsel %vm892, %v867, %v868
    %v917 = vsel %vm892, %v866, %v867
    %v918 = vsel %vm892, %v865, %v866
    %v919 = vsel %vm892, %v864, %v865
    %v920 = vsel %vm892, %v863, %v864
    %v921 = vsel %vm892, %v862, %v863
    %v922 = vsel %vm892, %v861, %v862
    %v923 = vsel %vm892, %v860, %v861
    %v924 = vsel %vm892, %v859, %v860
    %v925 = vsel %vm892, %v858, %v859
    %v926 = vsel %vm892, %v857, %v858
    %v927 = vsel %vm892, %v856, %v857
    %v928 = vsel %vm892, %v855, %v856
    %v929 = vsel %vm892, %v854, %v855
    %v930 = vsel %vm892, %v853, %v854
    %v931 = vsel %vm892, %v852, %v853
    %v932 = vsel %vm892, %v851, %v852
    %v933 = vsel %vm892, %v850, %v851
    %v934 = vsel %vm892, %v849, %v850
    %v935 = vsel %vm892, %v848, %v849
    %v936 = vsel %vm892, %v847, %v848
    %v937 = vsel %vm892, %v846, %v847
    %v938 = vsel %vm892, %v845, %v846
    %v939 = vsel %vm892, %v844, %v845
    %v940 = vsel %vm892, %v891, %v844
    %v941 = vpack.c.bf16 %v938, %v939
    %v942 = vpack.c.bf16 %v936, %v937
    %v943 = vpack.c.bf16 %v934, %v935
    %v944 = vpack.c.bf16 %v932, %v933
    %v945 = vpack.c.bf16 %v930, %v931
    %v946 = vpack.c.bf16 %v928, %v929
    %v947 = vpack.c.bf16 %v926, %v927
    %v948 = vpack.c.bf16 %v924, %v925
    %v949 = vpack.c.bf16 %v922, %v923
    %v950 = vpack.c.bf16 %v920, %v921
    %v951 = vpack.c.bf16 %v918, %v919
    %v952 = vpack.c.bf16 %v916, %v917
    %v953 = vpack.c.bf16 %v914, %v915
    %v954 = vpack.c.bf16 %v912, %v913
    %v955 = vpack.c.bf16 %v910, %v911
    %v956 = vpack.c.bf16 %v908, %v909
    %v957 = vpack.c.bf16 %v906, %v907
    %v958 = vpack.c.bf16 %v904, %v905
    %v959 = vpack.c.bf16 %v902, %v903
    %v960 = vpack.c.bf16 %v900, %v901
    %v961 = vpack.c.bf16 %v898, %v899
    %v962 = vpack.c.bf16 %v896, %v897
    %v963 = vpack.c.bf16 %v894, %v895
    %v964 = vpack.c.bf16 %v940, %v893
    %965 = vst [vmem:[#allocation3 + $0x28] sm:$0xff] %v941
    %966 = vst [vmem:[#allocation3 + $0x60] sm:$0xff] %v942
    %967 = vst [vmem:[#allocation3 + $0x98] sm:$0xff] %v943
    %968 = vst [vmem:[#allocation3 + $0xd0] sm:$0xff] %v944
    %969 = vst [vmem:[#allocation3 + $0x108] sm:$0xff] %v945
    %970 = vst [vmem:[#allocation3 + $0x140] sm:$0xff] %v946
    %971 = vst [vmem:[#allocation3 + $0x178] sm:$0xff] %v947
    %972 = vst [vmem:[#allocation3 + $0x1b0] sm:$0xff] %v948
    %973 = vst [vmem:[#allocation3 + $0x1e8] sm:$0xff] %v949
    %974 = vst [vmem:[#allocation3 + $0x220] sm:$0xff] %v950
    %975 = vst [vmem:[#allocation3 + $0x258] sm:$0xff] %v951
    %976 = vst [vmem:[#allocation3 + $0x290] sm:$0xff] %v952
    %977 = vst [vmem:[#allocation3 + $0x2c8] sm:$0xff] %v953
    %978 = vst [vmem:[#allocation3 + $0x300] sm:$0xff] %v954
    %979 = vst [vmem:[#allocation3 + $0x338] sm:$0xff] %v955
    %980 = vst [vmem:[#allocation3 + $0x370] sm:$0xff] %v956
    %981 = vst [vmem:[#allocation3 + $0x3a8] sm:$0xff] %v957
    %982 = vst [vmem:[#allocation3 + $0x3e0] sm:$0xff] %v958
    %983 = vst [vmem:[#allocation3 + $0x418] sm:$0xff] %v959
    %984 = vst [vmem:[#allocation3 + $0x450] sm:$0xff] %v960
    %985 = vst [vmem:[#allocation3 + $0x488] sm:$0xff] %v961
    %986 = vst [vmem:[#allocation3 + $0x4c0] sm:$0xff] %v962
    %987 = vst [vmem:[#allocation3 + $0x4f8] sm:$0xff] %v963
    %988 = vst [vmem:[#allocation3 + $0x530] sm:$0xff] %v964
    %v989 = vrot.slane %v166, 3
    %v990 = vrot.slane %v167, 3
    %v991 = vrot.slane %v168, 3
    %v992 = vrot.slane %v169, 3
    %v993 = vrot.slane %v170, 3
    %v994 = vrot.slane %v171, 3
    %v995 = vrot.slane %v172, 3
    %v996 = vrot.slane %v173, 3
    %v997 = vrot.slane %v174, 3
    %v998 = vrot.slane %v175, 3
    %v999 = vrot.slane %v176, 3
    %v1000 = vrot.slane %v177, 3
    %v1001 = vrot.slane %v178, 3
    %v1002 = vrot.slane %v179, 3
    %v1003 = vrot.slane %v180, 3
    %v1004 = vrot.slane %v181, 3
    %v1005 = vrot.slane %v182, 3
    %v1006 = vrot.slane %v183, 3
    %v1007 = vrot.slane %v184, 3
    %v1008 = vrot.slane %v185, 3
    %v1009 = vrot.slane %v186, 3
    %v1010 = vrot.slane %v187, 3
    %v1011 = vrot.slane %v188, 3
    %v1012 = vrot.slane %v189, 3
    %v1013 = vrot.slane %v190, 3
    %v1014 = vrot.slane %v191, 3
    %v1015 = vrot.slane %v192, 3
    %v1016 = vrot.slane %v193, 3
    %v1017 = vrot.slane %v194, 3
    %v1018 = vrot.slane %v195, 3
    %v1019 = vrot.slane %v196, 3
    %v1020 = vrot.slane %v197, 3
    %v1021 = vrot.slane %v198, 3
    %v1022 = vrot.slane %v199, 3
    %v1023 = vrot.slane %v200, 3
    %v1024 = vrot.slane %v201, 3
    %v1025 = vrot.slane %v202, 3
    %v1026 = vrot.slane %v203, 3
    %v1027 = vrot.slane %v204, 3
    %v1028 = vrot.slane %v205, 3
    %v1029 = vrot.slane %v206, 3
    %v1030 = vrot.slane %v207, 3
    %v1031 = vrot.slane %v208, 3
    %v1032 = vrot.slane %v209, 3
    %v1033 = vrot.slane %v210, 3
    %v1034 = vrot.slane %v211, 3
    %v1035 = vrot.slane %v212, 3
    %v1036 = vrot.slane %v213, 3
    %vm1037 = vcmp.lt.s32.totalorder %v263, 5
    %v1038 = vsel %vm1037, %v1035, %v1036
    %v1039 = vsel %vm1037, %v1034, %v1035
    %v1040 = vsel %vm1037, %v1033, %v1034
    %v1041 = vsel %vm1037, %v1032, %v1033
    %v1042 = vsel %vm1037, %v1031, %v1032
    %v1043 = vsel %vm1037, %v1030, %v1031
    %v1044 = vsel %vm1037, %v1029, %v1030
    %v1045 = vsel %vm1037, %v1028, %v1029
    %v1046 = vsel %vm1037, %v1027, %v1028
    %v1047 = vsel %vm1037, %v1026, %v1027
    %v1048 = vsel %vm1037, %v1025, %v1026
    %v1049 = vsel %vm1037, %v1024, %v1025
    %v1050 = vsel %vm1037, %v1023, %v1024
    %v1051 = vsel %vm1037, %v1022, %v1023
    %v1052 = vsel %vm1037, %v1021, %v1022
    %v1053 = vsel %vm1037, %v1020, %v1021
    %v1054 = vsel %vm1037, %v1019, %v1020
    %v1055 = vsel %vm1037, %v1018, %v1019
    %v1056 = vsel %vm1037, %v1017, %v1018
    %v1057 = vsel %vm1037, %v1016, %v1017
    %v1058 = vsel %vm1037, %v1015, %v1016
    %v1059 = vsel %vm1037, %v1014, %v1015
    %v1060 = vsel %vm1037, %v1013, %v1014
    %v1061 = vsel %vm1037, %v1012, %v1013
    %v1062 = vsel %vm1037, %v1011, %v1012
    %v1063 = vsel %vm1037, %v1010, %v1011
    %v1064 = vsel %vm1037, %v1009, %v1010
    %v1065 = vsel %vm1037, %v1008, %v1009
    %v1066 = vsel %vm1037, %v1007, %v1008
    %v1067 = vsel %vm1037, %v1006, %v1007
    %v1068 = vsel %vm1037, %v1005, %v1006
    %v1069 = vsel %vm1037, %v1004, %v1005
    %v1070 = vsel %vm1037, %v1003, %v1004
    %v1071 = vsel %vm1037, %v1002, %v1003
    %v1072 = vsel %vm1037, %v1001, %v1002
    %v1073 = vsel %vm1037, %v1000, %v1001
    %v1074 = vsel %vm1037, %v999, %v1000
    %v1075 = vsel %vm1037, %v998, %v999
    %v1076 = vsel %vm1037, %v997, %v998
    %v1077 = vsel %vm1037, %v996, %v997
    %v1078 = vsel %vm1037, %v995, %v996
    %v1079 = vsel %vm1037, %v994, %v995
    %v1080 = vsel %vm1037, %v993, %v994
    %v1081 = vsel %vm1037, %v992, %v993
    %v1082 = vsel %vm1037, %v991, %v992
    %v1083 = vsel %vm1037, %v990, %v991
    %v1084 = vsel %vm1037, %v989, %v990
    %v1085 = vsel %vm1037, %v1036, %v989
    %v1086 = vpack.c.bf16 %v1083, %v1084
    %v1087 = vpack.c.bf16 %v1081, %v1082
    %v1088 = vpack.c.bf16 %v1079, %v1080
    %v1089 = vpack.c.bf16 %v1077, %v1078
    %v1090 = vpack.c.bf16 %v1075, %v1076
    %v1091 = vpack.c.bf16 %v1073, %v1074
    %v1092 = vpack.c.bf16 %v1071, %v1072
    %v1093 = vpack.c.bf16 %v1069, %v1070
    %v1094 = vpack.c.bf16 %v1067, %v1068
    %v1095 = vpack.c.bf16 %v1065, %v1066
    %v1096 = vpack.c.bf16 %v1063, %v1064
    %v1097 = vpack.c.bf16 %v1061, %v1062
    %v1098 = vpack.c.bf16 %v1059, %v1060
    %v1099 = vpack.c.bf16 %v1057, %v1058
    %v1100 = vpack.c.bf16 %v1055, %v1056
    %v1101 = vpack.c.bf16 %v1053, %v1054
    %v1102 = vpack.c.bf16 %v1051, %v1052
    %v1103 = vpack.c.bf16 %v1049, %v1050
    %v1104 = vpack.c.bf16 %v1047, %v1048
    %v1105 = vpack.c.bf16 %v1045, %v1046
    %v1106 = vpack.c.bf16 %v1043, %v1044
    %v1107 = vpack.c.bf16 %v1041, %v1042
    %v1108 = vpack.c.bf16 %v1039, %v1040
    %v1109 = vpack.c.bf16 %v1085, %v1038
    %1110 = vst [vmem:[#allocation3 + $0x30] sm:$0xff] %v1086
    %1111 = vst [vmem:[#allocation3 + $0x68] sm:$0xff] %v1087
    %1112 = vst [vmem:[#allocation3 + $0xa0] sm:$0xff] %v1088
    %1113 = vst [vmem:[#allocation3 + $0xd8] sm:$0xff] %v1089
    %1114 = vst [vmem:[#allocation3 + $0x110] sm:$0xff] %v1090
    %1115 = vst [vmem:[#allocation3 + $0x148] sm:$0xff] %v1091
    %1116 = vst [vmem:[#allocation3 + $0x180] sm:$0xff] %v1092
    %1117 = vst [vmem:[#allocation3 + $0x1b8] sm:$0xff] %v1093
    %1118 = vst [vmem:[#allocation3 + $0x1f0] sm:$0xff] %v1094
    %1119 = vst [vmem:[#allocation3 + $0x228] sm:$0xff] %v1095
    %1120 = vst [vmem:[#allocation3 + $0x260] sm:$0xff] %v1096
    %1121 = vst [vmem:[#allocation3 + $0x298] sm:$0xff] %v1097
    %1122 = vst [vmem:[#allocation3 + $0x2d0] sm:$0xff] %v1098
    %1123 = vst [vmem:[#allocation3 + $0x308] sm:$0xff] %v1099
    %1124 = vst [vmem:[#allocation3 + $0x340] sm:$0xff] %v1100
    %1125 = vst [vmem:[#allocation3 + $0x378] sm:$0xff] %v1101
    %1126 = vst [vmem:[#allocation3 + $0x3b0] sm:$0xff] %v1102
    %1127 = vst [vmem:[#allocation3 + $0x3e8] sm:$0xff] %v1103
    %1128 = vst [vmem:[#allocation3 + $0x420] sm:$0xff] %v1104
    %1129 = vst [vmem:[#allocation3 + $0x458] sm:$0xff] %v1105
    %1130 = vst [vmem:[#allocation3 + $0x490] sm:$0xff] %v1106
    %1131 = vst [vmem:[#allocation3 + $0x4c8] sm:$0xff] %v1107
    %1132 = vst [vmem:[#allocation3 + $0x500] sm:$0xff] %v1108
    %1133 = vst [vmem:[#allocation3 + $0x538] sm:$0xff] %v1109
    %v1134 = vld [vmem:[#allocation3] sm:$0xff]
    %v1135 = vld [vmem:[#allocation3 + $0x8] sm:$0xff]
    %v1136 = vld [vmem:[#allocation3 + $0x10] sm:$0xff]
    %v1137 = vld [vmem:[#allocation3 + $0x18] sm:$0xff]
    %v1138 = vld [vmem:[#allocation3 + $0x20] sm:$0xff]
    %v1139 = vld [vmem:[#allocation3 + $0x28] sm:$0xff]
    %v1140 = vld [vmem:[#allocation3 + $0x30] sm:$0xff]
    %v1141 = vld [vmem:[#allocation3 + $0x38] sm:$0xff]
    %v1142 = vld [vmem:[#allocation3 + $0x40] sm:$0xff]
    %v1143 = vld [vmem:[#allocation3 + $0x48] sm:$0xff]
    %v1144 = vld [vmem:[#allocation3 + $0x50] sm:$0xff]
    %v1145 = vld [vmem:[#allocation3 + $0x58] sm:$0xff]
    %v1146 = vld [vmem:[#allocation3 + $0x60] sm:$0xff]
    %v1147 = vld [vmem:[#allocation3 + $0x68] sm:$0xff]
    %v1148 = vld [vmem:[#allocation3 + $0x70] sm:$0xff]
    %v1149 = vld [vmem:[#allocation3 + $0x78] sm:$0xff]
    %v1150 = vld [vmem:[#allocation3 + $0x80] sm:$0xff]
    %v1151 = vld [vmem:[#allocation3 + $0x88] sm:$0xff]
    %v1152 = vld [vmem:[#allocation3 + $0x90] sm:$0xff]
    %v1153 = vld [vmem:[#allocation3 + $0x98] sm:$0xff]
    %v1154 = vld [vmem:[#allocation3 + $0xa0] sm:$0xff]
    %v1155 = vld [vmem:[#allocation3 + $0xa8] sm:$0xff]
    %v1156 = vld [vmem:[#allocation3 + $0xb0] sm:$0xff]
    %v1157 = vld [vmem:[#allocation3 + $0xb8] sm:$0xff]
    %v1158 = vld [vmem:[#allocation3 + $0xc0] sm:$0xff]
    %v1159 = vld [vmem:[#allocation3 + $0xc8] sm:$0xff]
    %v1160 = vld [vmem:[#allocation3 + $0xd0] sm:$0xff]
    %v1161 = vld [vmem:[#allocation3 + $0xd8] sm:$0xff]
    %v1162 = vld [vmem:[#allocation3 + $0xe0] sm:$0xff]
    %v1163 = vld [vmem:[#allocation3 + $0xe8] sm:$0xff]
    %v1164 = vld [vmem:[#allocation3 + $0xf0] sm:$0xff]
    %v1165 = vld [vmem:[#allocation3 + $0xf8] sm:$0xff]
    %v1166 = vld [vmem:[#allocation3 + $0x100] sm:$0xff]
    %v1167 = vld [vmem:[#allocation3 + $0x108] sm:$0xff]
    %v1168 = vld [vmem:[#allocation3 + $0x110] sm:$0xff]
    %v1169 = vld [vmem:[#allocation3 + $0x118] sm:$0xff]
    %v1170 = vld [vmem:[#allocation3 + $0x120] sm:$0xff]
    %v1171 = vld [vmem:[#allocation3 + $0x128] sm:$0xff]
    %v1172 = vld [vmem:[#allocation3 + $0x130] sm:$0xff]
    %v1173 = vld [vmem:[#allocation3 + $0x138] sm:$0xff]
    %v1174 = vld [vmem:[#allocation3 + $0x140] sm:$0xff]
    %v1175 = vld [vmem:[#allocation3 + $0x148] sm:$0xff]
    %v1176 = vld [vmem:[#allocation3 + $0x150] sm:$0xff]
    %v1177 = vld [vmem:[#allocation3 + $0x158] sm:$0xff]
    %v1178 = vld [vmem:[#allocation3 + $0x160] sm:$0xff]
    %v1179 = vld [vmem:[#allocation3 + $0x168] sm:$0xff]
    %v1180 = vld [vmem:[#allocation3 + $0x170] sm:$0xff]
    %v1181 = vld [vmem:[#allocation3 + $0x178] sm:$0xff]
    %v1182 = vld [vmem:[#allocation3 + $0x180] sm:$0xff]
    %v1183 = vld [vmem:[#allocation3 + $0x188] sm:$0xff]
    %v1184 = vld [vmem:[#allocation3 + $0x190] sm:$0xff]
    %v1185 = vld [vmem:[#allocation3 + $0x198] sm:$0xff]
    %v1186 = vld [vmem:[#allocation3 + $0x1a0] sm:$0xff]
    %v1187 = vld [vmem:[#allocation3 + $0x1a8] sm:$0xff]
    %v1188 = vld [vmem:[#allocation3 + $0x1b0] sm:$0xff]
    %v1189 = vld [vmem:[#allocation3 + $0x1b8] sm:$0xff]
    %v1190 = vld [vmem:[#allocation3 + $0x1c0] sm:$0xff]
    %v1191 = vld [vmem:[#allocation3 + $0x1c8] sm:$0xff]
    %v1192 = vld [vmem:[#allocation3 + $0x1d0] sm:$0xff]
    %v1193 = vld [vmem:[#allocation3 + $0x1d8] sm:$0xff]
    %v1194 = vld [vmem:[#allocation3 + $0x1e0] sm:$0xff]
    %v1195 = vld [vmem:[#allocation3 + $0x1e8] sm:$0xff]
    %v1196 = vld [vmem:[#allocation3 + $0x1f0] sm:$0xff]
    %v1197 = vld [vmem:[#allocation3 + $0x1f8] sm:$0xff]
    %v1198 = vld [vmem:[#allocation3 + $0x200] sm:$0xff]
    %v1199 = vld [vmem:[#allocation3 + $0x208] sm:$0xff]
    %v1200 = vld [vmem:[#allocation3 + $0x210] sm:$0xff]
    %v1201 = vld [vmem:[#allocation3 + $0x218] sm:$0xff]
    %v1202 = vld [vmem:[#allocation3 + $0x220] sm:$0xff]
    %v1203 = vld [vmem:[#allocation3 + $0x228] sm:$0xff]
    %v1204 = vld [vmem:[#allocation3 + $0x230] sm:$0xff]
    %v1205 = vld [vmem:[#allocation3 + $0x238] sm:$0xff]
    %v1206 = vld [vmem:[#allocation3 + $0x240] sm:$0xff]
    %v1207 = vld [vmem:[#allocation3 + $0x248] sm:$0xff]
    %v1208 = vld [vmem:[#allocation3 + $0x250] sm:$0xff]
    %v1209 = vld [vmem:[#allocation3 + $0x258] sm:$0xff]
    %v1210 = vld [vmem:[#allocation3 + $0x260] sm:$0xff]
    %v1211 = vld [vmem:[#allocation3 + $0x268] sm:$0xff]
    %v1212 = vld [vmem:[#allocation3 + $0x270] sm:$0xff]
    %v1213 = vld [vmem:[#allocation3 + $0x278] sm:$0xff]
    %v1214 = vld [vmem:[#allocation3 + $0x280] sm:$0xff]
    %v1215 = vld [vmem:[#allocation3 + $0x288] sm:$0xff]
    %v1216 = vld [vmem:[#allocation3 + $0x290] sm:$0xff]
    %v1217 = vld [vmem:[#allocation3 + $0x298] sm:$0xff]
    %v1218 = vld [vmem:[#allocation3 + $0x2a0] sm:$0xff]
    %v1219 = vld [vmem:[#allocation3 + $0x2a8] sm:$0xff]
    %v1220 = vld [vmem:[#allocation3 + $0x2b0] sm:$0xff]
    %v1221 = vld [vmem:[#allocation3 + $0x2b8] sm:$0xff]
    %v1222 = vld [vmem:[#allocation3 + $0x2c0] sm:$0xff]
    %v1223 = vld [vmem:[#allocation3 + $0x2c8] sm:$0xff]
    %v1224 = vld [vmem:[#allocation3 + $0x2d0] sm:$0xff]
    %v1225 = vld [vmem:[#allocation3 + $0x2d8] sm:$0xff]
    %v1226 = vld [vmem:[#allocation3 + $0x2e0] sm:$0xff]
    %v1227 = vld [vmem:[#allocation3 + $0x2e8] sm:$0xff]
    %v1228 = vld [vmem:[#allocation3 + $0x2f0] sm:$0xff]
    %v1229 = vld [vmem:[#allocation3 + $0x2f8] sm:$0xff]
    %v1230 = vld [vmem:[#allocation3 + $0x300] sm:$0xff]
    %v1231 = vld [vmem:[#allocation3 + $0x308] sm:$0xff]
    %v1232 = vld [vmem:[#allocation3 + $0x310] sm:$0xff]
    %v1233 = vld [vmem:[#allocation3 + $0x318] sm:$0xff]
    %v1234 = vld [vmem:[#allocation3 + $0x320] sm:$0xff]
    %v1235 = vld [vmem:[#allocation3 + $0x328] sm:$0xff]
    %v1236 = vld [vmem:[#allocation3 + $0x330] sm:$0xff]
    %v1237 = vld [vmem:[#allocation3 + $0x338] sm:$0xff]
    %v1238 = vld [vmem:[#allocation3 + $0x340] sm:$0xff]
    %v1239 = vld [vmem:[#allocation3 + $0x348] sm:$0xff]
    %v1240 = vld [vmem:[#allocation3 + $0x350] sm:$0xff]
    %v1241 = vld [vmem:[#allocation3 + $0x358] sm:$0xff]
    %v1242 = vld [vmem:[#allocation3 + $0x360] sm:$0xff]
    %v1243 = vld [vmem:[#allocation3 + $0x368] sm:$0xff]
    %v1244 = vld [vmem:[#allocation3 + $0x370] sm:$0xff]
    %v1245 = vld [vmem:[#allocation3 + $0x378] sm:$0xff]
    %v1246 = vld [vmem:[#allocation3 + $0x380] sm:$0xff]
    %v1247 = vld [vmem:[#allocation3 + $0x388] sm:$0xff]
    %v1248 = vld [vmem:[#allocation3 + $0x390] sm:$0xff]
    %v1249 = vld [vmem:[#allocation3 + $0x398] sm:$0xff]
    %v1250 = vld [vmem:[#allocation3 + $0x3a0] sm:$0xff]
    %v1251 = vld [vmem:[#allocation3 + $0x3a8] sm:$0xff]
    %v1252 = vld [vmem:[#allocation3 + $0x3b0] sm:$0xff]
    %v1253 = vld [vmem:[#allocation3 + $0x3b8] sm:$0xff]
    %v1254 = vld [vmem:[#allocation3 + $0x3c0] sm:$0xff]
    %v1255 = vld [vmem:[#allocation3 + $0x3c8] sm:$0xff]
    %v1256 = vld [vmem:[#allocation3 + $0x3d0] sm:$0xff]
    %v1257 = vld [vmem:[#allocation3 + $0x3d8] sm:$0xff]
    %v1258 = vld [vmem:[#allocation3 + $0x3e0] sm:$0xff]
    %v1259 = vld [vmem:[#allocation3 + $0x3e8] sm:$0xff]
    %v1260 = vld [vmem:[#allocation3 + $0x3f0] sm:$0xff]
    %v1261 = vld [vmem:[#allocation3 + $0x3f8] sm:$0xff]
    %v1262 = vld [vmem:[#allocation3 + $0x400] sm:$0xff]
    %v1263 = vld [vmem:[#allocation3 + $0x408] sm:$0xff]
    %v1264 = vld [vmem:[#allocation3 + $0x410] sm:$0xff]
    %v1265 = vld [vmem:[#allocation3 + $0x418] sm:$0xff]
    %v1266 = vld [vmem:[#allocation3 + $0x420] sm:$0xff]
    %v1267 = vld [vmem:[#allocation3 + $0x428] sm:$0xff]
    %v1268 = vld [vmem:[#allocation3 + $0x430] sm:$0xff]
    %v1269 = vld [vmem:[#allocation3 + $0x438] sm:$0xff]
    %v1270 = vld [vmem:[#allocation3 + $0x440] sm:$0xff]
    %v1271 = vld [vmem:[#allocation3 + $0x448] sm:$0xff]
    %v1272 = vld [vmem:[#allocation3 + $0x450] sm:$0xff]
    %v1273 = vld [vmem:[#allocation3 + $0x458] sm:$0xff]
    %v1274 = vld [vmem:[#allocation3 + $0x460] sm:$0xff]
    %v1275 = vld [vmem:[#allocation3 + $0x468] sm:$0xff]
    %v1276 = vld [vmem:[#allocation3 + $0x470] sm:$0xff]
    %v1277 = vld [vmem:[#allocation3 + $0x478] sm:$0xff]
    %v1278 = vld [vmem:[#allocation3 + $0x480] sm:$0xff]
    %v1279 = vld [vmem:[#allocation3 + $0x488] sm:$0xff]
    %v1280 = vld [vmem:[#allocation3 + $0x490] sm:$0xff]
    %v1281 = vld [vmem:[#allocation3 + $0x498] sm:$0xff]
    %v1282 = vld [vmem:[#allocation3 + $0x4a0] sm:$0xff]
    %v1283 = vld [vmem:[#allocation3 + $0x4a8] sm:$0xff]
    %v1284 = vld [vmem:[#allocation3 + $0x4b0] sm:$0xff]
    %v1285 = vld [vmem:[#allocation3 + $0x4b8] sm:$0xff]
    %v1286 = vld [vmem:[#allocation3 + $0x4c0] sm:$0xff]
    %v1287 = vld [vmem:[#allocation3 + $0x4c8] sm:$0xff]
    %v1288 = vld [vmem:[#allocation3 + $0x4d0] sm:$0xff]
    %v1289 = vld [vmem:[#allocation3 + $0x4d8] sm:$0xff]
    %v1290 = vld [vmem:[#allocation3 + $0x4e0] sm:$0xff]
    %v1291 = vld [vmem:[#allocation3 + $0x4e8] sm:$0xff]
    %v1292 = vld [vmem:[#allocation3 + $0x4f0] sm:$0xff]
    %v1293 = vld [vmem:[#allocation3 + $0x4f8] sm:$0xff]
    %v1294 = vld [vmem:[#allocation3 + $0x500] sm:$0xff]
    %v1295 = vld [vmem:[#allocation3 + $0x508] sm:$0xff]
    %v1296 = vld [vmem:[#allocation3 + $0x510] sm:$0xff]
    %v1297 = vld [vmem:[#allocation3 + $0x518] sm:$0xff]
    %v1298 = vld [vmem:[#allocation3 + $0x520] sm:$0xff]
    %v1299 = vld [vmem:[#allocation3 + $0x528] sm:$0xff]
    %v1300 = vld [vmem:[#allocation3 + $0x530] sm:$0xff]
    %v1301 = vld [vmem:[#allocation3 + $0x538] sm:$0xff]
    %v1302 = vld [vmem:[#allocation7] sm:$0xf]
    %v1303 = vld [vmem:[#allocation7 + $0x4] sm:$0xf]
    %v1304 = vld [vmem:[#allocation7 + $0x8] sm:$0xf]
    %v1305 = vld [vmem:[#allocation7 + $0xc] sm:$0xf]
    %v1306 = vld [vmem:[#allocation7 + $0x10] sm:$0xf]
    %v1307 = vld [vmem:[#allocation7 + $0x14] sm:$0xf]
    %v1308 = vld [vmem:[#allocation7 + $0x18] sm:$0xf]
    %v1309 = vld [vmem:[#allocation7 + $0x1c] sm:$0xf]
    %v1310 = vld [vmem:[#allocation7 + $0x20] sm:$0xf]
    %v1311 = vld [vmem:[#allocation7 + $0x24] sm:$0xf]
    %v1312 = vld [vmem:[#allocation7 + $0x28] sm:$0xf]
    %v1313 = vld [vmem:[#allocation7 + $0x2c] sm:$0xf]
    %v1314 = vld [vmem:[#allocation7 + $0x30] sm:$0xf]
    %v1315 = vld [vmem:[#allocation7 + $0x34] sm:$0xf]
    %v1316 = vld [vmem:[#allocation7 + $0x38] sm:$0xf]
    %v1317 = vld [vmem:[#allocation7 + $0x3c] sm:$0xf]
    %v1318 = vld [vmem:[#allocation7 + $0x40] sm:$0xf]
    %v1319 = vld [vmem:[#allocation7 + $0x44] sm:$0xf]
    %v1320 = vld [vmem:[#allocation7 + $0x48] sm:$0xf]
    %v1321 = vld [vmem:[#allocation7 + $0x4c] sm:$0xf]
    %v1322 = vld [vmem:[#allocation7 + $0x50] sm:$0xf]
    %v1323 = vld [vmem:[#allocation7 + $0x54] sm:$0xf]
    %v1324 = vld [vmem:[#allocation7 + $0x58] sm:$0xf]
    %v1325 = vld [vmem:[#allocation7 + $0x5c] sm:$0xf]
    %v1326 = vld [vmem:[#allocation7 + $0x60] sm:$0xf]
    %v1327 = vld [vmem:[#allocation7 + $0x64] sm:$0xf]
    %v1328 = vld [vmem:[#allocation7 + $0x68] sm:$0xf]
    %v1329 = vld [vmem:[#allocation7 + $0x6c] sm:$0xf]
    %v1330 = vld [vmem:[#allocation7 + $0x70] sm:$0xf]
    %v1331 = vld [vmem:[#allocation7 + $0x74] sm:$0xf]
    %v1332 = vld [vmem:[#allocation7 + $0x78] sm:$0xf]
    %v1333 = vld [vmem:[#allocation7 + $0x7c] sm:$0xf]
    %v1334 = vld [vmem:[#allocation7 + $0x80] sm:$0xf]
    %v1335 = vld [vmem:[#allocation7 + $0x84] sm:$0xf]
    %v1336 = vld [vmem:[#allocation7 + $0x88] sm:$0xf]
    %v1337 = vld [vmem:[#allocation7 + $0x8c] sm:$0xf]
    %v1338 = vld [vmem:[#allocation7 + $0x90] sm:$0xf]
    %v1339 = vld [vmem:[#allocation7 + $0x94] sm:$0xf]
    %v1340 = vld [vmem:[#allocation7 + $0x98] sm:$0xf]
    %v1341 = vld [vmem:[#allocation7 + $0x9c] sm:$0xf]
    %v1342 = vld [vmem:[#allocation7 + $0xa0] sm:$0xf]
    %v1343 = vld [vmem:[#allocation7 + $0xa4] sm:$0xf]
    %v1344 = vld [vmem:[#allocation7 + $0xa8] sm:$0xf]
    %v1345 = vld [vmem:[#allocation7 + $0xac] sm:$0xf]
    %v1346 = vld [vmem:[#allocation7 + $0xb0] sm:$0xf]
    %v1347 = vld [vmem:[#allocation7 + $0xb4] sm:$0xf]
    %v1348 = vld [vmem:[#allocation7 + $0xb8] sm:$0xf]
    %v1349 = vld [vmem:[#allocation7 + $0xbc] sm:$0xf]
    %v1350 = vld [vmem:[#allocation7 + $0xc0] sm:$0xf]
    %v1351 = vld [vmem:[#allocation7 + $0xc4] sm:$0xf]
    %v1352 = vld [vmem:[#allocation7 + $0xc8] sm:$0xf]
    %v1353 = vld [vmem:[#allocation7 + $0xcc] sm:$0xf]
    %v1354 = vld [vmem:[#allocation7 + $0xd0] sm:$0xf]
    %v1355 = vld [vmem:[#allocation7 + $0xd4] sm:$0xf]
    %v1356 = vld [vmem:[#allocation7 + $0xd8] sm:$0xf]
    %v1357 = vld [vmem:[#allocation7 + $0xdc] sm:$0xf]
    %v1358 = vld [vmem:[#allocation7 + $0xe0] sm:$0xf]
    %v1359 = vld [vmem:[#allocation7 + $0xe4] sm:$0xf]
    %v1360 = vld [vmem:[#allocation7 + $0xe8] sm:$0xf]
    %v1361 = vld [vmem:[#allocation7 + $0xec] sm:$0xf]
    %v1362 = vld [vmem:[#allocation7 + $0xf0] sm:$0xf]
    %v1363 = vld [vmem:[#allocation7 + $0xf4] sm:$0xf]
    %v1364 = vld [vmem:[#allocation7 + $0xf8] sm:$0xf]
    %v1365 = vld [vmem:[#allocation7 + $0xfc] sm:$0xf]
    %v1366 = vld [vmem:[#allocation7 + $0x100] sm:$0xf]
    %v1367 = vld [vmem:[#allocation7 + $0x104] sm:$0xf]
    %v1368 = vld [vmem:[#allocation7 + $0x108] sm:$0xf]
    %v1369 = vld [vmem:[#allocation7 + $0x10c] sm:$0xf]
    %v1370 = vld [vmem:[#allocation7 + $0x110] sm:$0xf]
    %v1371 = vld [vmem:[#allocation7 + $0x114] sm:$0xf]
    %v1372 = vld [vmem:[#allocation7 + $0x118] sm:$0xf]
    %v1373 = vld [vmem:[#allocation7 + $0x11c] sm:$0xf]
    %v1374 = vld [vmem:[#allocation7 + $0x120] sm:$0xf]
    %v1375 = vld [vmem:[#allocation7 + $0x124] sm:$0xf]
    %v1376 = vld [vmem:[#allocation7 + $0x128] sm:$0xf]
    %v1377 = vld [vmem:[#allocation7 + $0x12c] sm:$0xf]
    %v1378 = vld [vmem:[#allocation7 + $0x130] sm:$0xf]
    %v1379 = vld [vmem:[#allocation7 + $0x134] sm:$0xf]
    %v1380 = vld [vmem:[#allocation7 + $0x138] sm:$0xf]
    %v1381 = vld [vmem:[#allocation7 + $0x13c] sm:$0xf]
    %v1382 = vld [vmem:[#allocation7 + $0x140] sm:$0xf]
    %v1383 = vld [vmem:[#allocation7 + $0x144] sm:$0xf]
    %v1384 = vld [vmem:[#allocation7 + $0x148] sm:$0xf]
    %v1385 = vld [vmem:[#allocation7 + $0x14c] sm:$0xf]
    %v1386 = vld [vmem:[#allocation7 + $0x150] sm:$0xf]
    %v1387 = vld [vmem:[#allocation7 + $0x154] sm:$0xf]
    %v1388 = vld [vmem:[#allocation7 + $0x158] sm:$0xf]
    %v1389 = vld [vmem:[#allocation7 + $0x15c] sm:$0xf]
    %v1390 = vld [vmem:[#allocation7 + $0x160] sm:$0xf]
    %v1391 = vld [vmem:[#allocation7 + $0x164] sm:$0xf]
    %v1392 = vld [vmem:[#allocation7 + $0x168] sm:$0xf]
    %v1393 = vld [vmem:[#allocation7 + $0x16c] sm:$0xf]
    %v1394 = vld [vmem:[#allocation7 + $0x170] sm:$0xf]
    %v1395 = vld [vmem:[#allocation7 + $0x174] sm:$0xf]
    %v1396 = vld [vmem:[#allocation7 + $0x178] sm:$0xf]
    %v1397 = vld [vmem:[#allocation7 + $0x17c] sm:$0xf]
    %v1398 = vld [vmem:[#allocation7 + $0x180] sm:$0xf]
    %v1399 = vld [vmem:[#allocation7 + $0x184] sm:$0xf]
    %v1400 = vld [vmem:[#allocation7 + $0x188] sm:$0xf]
    %v1401 = vld [vmem:[#allocation7 + $0x18c] sm:$0xf]
    %v1402 = vld [vmem:[#allocation7 + $0x190] sm:$0xf]
    %v1403 = vld [vmem:[#allocation7 + $0x194] sm:$0xf]
    %v1404 = vld [vmem:[#allocation7 + $0x198] sm:$0xf]
    %v1405 = vld [vmem:[#allocation7 + $0x19c] sm:$0xf]
    %v1406 = vld [vmem:[#allocation7 + $0x1a0] sm:$0xf]
    %v1407 = vld [vmem:[#allocation7 + $0x1a4] sm:$0xf]
    %v1408 = vld [vmem:[#allocation7 + $0x1a8] sm:$0xf]
    %v1409 = vld [vmem:[#allocation7 + $0x1ac] sm:$0xf]
    %v1410 = vld [vmem:[#allocation7 + $0x1b0] sm:$0xf]
    %v1411 = vld [vmem:[#allocation7 + $0x1b4] sm:$0xf]
    %v1412 = vld [vmem:[#allocation7 + $0x1b8] sm:$0xf]
    %v1413 = vld [vmem:[#allocation7 + $0x1bc] sm:$0xf]
    %v1414 = vld [vmem:[#allocation9] sm:$0x1]
    %v1416 = vlaneseq
    %v1417 = vshrl.u32 %v1416, 7
    %v1418 = vsub.s32 0, %v1417
    %v1419 = vrot.slane %v1414, %v1418
    %v1533 = vunpack.c.l.b16 %v1302
    %v1534 = vunpack.c.l.b16 %v1303
    %v1535 = vunpack.c.l.b16 %v1304
    %v1536 = vunpack.c.l.b16 %v1305
    %v1537 = vunpack.c.l.b16 %v1306
    %v1538 = vunpack.c.l.b16 %v1307
    %v1539 = vunpack.c.l.b16 %v1308
    %v1540 = vunpack.c.l.b16 %v1309
    %v1541 = vunpack.c.l.b16 %v1310
    %v1542 = vunpack.c.l.b16 %v1311
    %v1543 = vunpack.c.l.b16 %v1312
    %v1544 = vunpack.c.l.b16 %v1313
    %v1545 = vunpack.c.l.b16 %v1314
    %v1546 = vunpack.c.l.b16 %v1315
    %v1547 = vunpack.c.l.b16 %v1316
    %v1548 = vunpack.c.l.b16 %v1317
    %v1549 = vunpack.c.l.b16 %v1318
    %v1550 = vunpack.c.l.b16 %v1319
    %v1551 = vunpack.c.l.b16 %v1320
    %v1552 = vunpack.c.l.b16 %v1321
    %v1553 = vunpack.c.l.b16 %v1322
    %v1554 = vunpack.c.l.b16 %v1323
    %v1555 = vunpack.c.l.b16 %v1324
    %v1556 = vunpack.c.l.b16 %v1325
    %v1557 = vunpack.c.l.b16 %v1326
    %v1558 = vunpack.c.l.b16 %v1327
    %v1559 = vunpack.c.l.b16 %v1328
    %v1560 = vunpack.c.l.b16 %v1329
    %v1561 = vunpack.c.l.b16 %v1330
    %v1562 = vunpack.c.l.b16 %v1331
    %v1563 = vunpack.c.l.b16 %v1332
    %v1564 = vunpack.c.l.b16 %v1333
    %v1565 = vunpack.c.l.b16 %v1334
    %v1566 = vunpack.c.l.b16 %v1335
    %v1567 = vunpack.c.l.b16 %v1336
    %v1568 = vunpack.c.l.b16 %v1337
    %v1569 = vunpack.c.l.b16 %v1338
    %v1570 = vunpack.c.l.b16 %v1339
    %v1571 = vunpack.c.l.b16 %v1340
    %v1572 = vunpack.c.l.b16 %v1341
    %v1573 = vunpack.c.l.b16 %v1342
    %v1574 = vunpack.c.l.b16 %v1343
    %v1575 = vunpack.c.l.b16 %v1344
    %v1576 = vunpack.c.l.b16 %v1345
    %v1577 = vunpack.c.l.b16 %v1346
    %v1578 = vunpack.c.l.b16 %v1347
    %v1579 = vunpack.c.l.b16 %v1348
    %v1580 = vunpack.c.l.b16 %v1349
    %v1581 = vunpack.c.l.b16 %v1350
    %v1582 = vunpack.c.l.b16 %v1351
    %v1583 = vunpack.c.l.b16 %v1352
    %v1584 = vunpack.c.l.b16 %v1353
    %v1585 = vunpack.c.l.b16 %v1354
    %v1586 = vunpack.c.l.b16 %v1355
    %v1587 = vunpack.c.l.b16 %v1356
    %v1588 = vunpack.c.l.b16 %v1357
    %v1589 = vunpack.c.l.b16 %v1358
    %v1590 = vunpack.c.l.b16 %v1359
    %v1591 = vunpack.c.l.b16 %v1360
    %v1592 = vunpack.c.l.b16 %v1361
    %v1593 = vunpack.c.l.b16 %v1362
    %v1594 = vunpack.c.l.b16 %v1363
    %v1595 = vunpack.c.l.b16 %v1364
    %v1596 = vunpack.c.l.b16 %v1365
    %v1597 = vunpack.c.l.b16 %v1366
    %v1598 = vunpack.c.l.b16 %v1367
    %v1599 = vunpack.c.l.b16 %v1368
    %v1600 = vunpack.c.l.b16 %v1369
    %v1601 = vunpack.c.l.b16 %v1370
    %v1602 = vunpack.c.l.b16 %v1371
    %v1603 = vunpack.c.l.b16 %v1372
    %v1604 = vunpack.c.l.b16 %v1373
    %v1605 = vunpack.c.l.b16 %v1374
    %v1606 = vunpack.c.l.b16 %v1375
    %v1607 = vunpack.c.l.b16 %v1376
    %v1608 = vunpack.c.l.b16 %v1377
    %v1609 = vunpack.c.l.b16 %v1378
    %v1610 = vunpack.c.l.b16 %v1379
    %v1611 = vunpack.c.l.b16 %v1380
    %v1612 = vunpack.c.l.b16 %v1381
    %v1613 = vunpack.c.l.b16 %v1382
    %v1614 = vunpack.c.l.b16 %v1383
    %v1615 = vunpack.c.l.b16 %v1384
    %v1616 = vunpack.c.l.b16 %v1385
    %v1617 = vunpack.c.l.b16 %v1386
    %v1618 = vunpack.c.l.b16 %v1387
    %v1619 = vunpack.c.l.b16 %v1388
    %v1620 = vunpack.c.l.b16 %v1389
    %v1621 = vunpack.c.l.b16 %v1390
    %v1622 = vunpack.c.l.b16 %v1391
    %v1623 = vunpack.c.l.b16 %v1392
    %v1624 = vunpack.c.l.b16 %v1393
    %v1625 = vunpack.c.l.b16 %v1394
    %v1626 = vunpack.c.l.b16 %v1395
    %v1627 = vunpack.c.l.b16 %v1396
    %v1628 = vunpack.c.l.b16 %v1397
    %v1629 = vunpack.c.l.b16 %v1398
    %v1630 = vunpack.c.l.b16 %v1399
    %v1631 = vunpack.c.l.b16 %v1400
    %v1632 = vunpack.c.l.b16 %v1401
    %v1633 = vunpack.c.l.b16 %v1402
    %v1634 = vunpack.c.l.b16 %v1403
    %v1635 = vunpack.c.l.b16 %v1404
    %v1636 = vunpack.c.l.b16 %v1405
    %v1637 = vunpack.c.l.b16 %v1406
    %v1638 = vunpack.c.l.b16 %v1407
    %v1639 = vunpack.c.l.b16 %v1408
    %v1640 = vunpack.c.l.b16 %v1409
    %v1641 = vunpack.c.l.b16 %v1410
    %v1642 = vunpack.c.l.b16 %v1411
    %v1643 = vunpack.c.l.b16 %v1412
    %v1644 = vunpack.c.l.b16 %v1413
    %v1645 = vpack.c.b16 %v1534, %v1533
    %v1646 = vpack.c.b16 %v1536, %v1535
    %v1647 = vpack.c.b16 %v1538, %v1537
    %v1648 = vpack.c.b16 %v1540, %v1539
    %v1649 = vpack.c.b16 %v1542, %v1541
    %v1650 = vpack.c.b16 %v1544, %v1543
    %v1651 = vpack.c.b16 %v1546, %v1545
    %v1652 = vpack.c.b16 %v1548, %v1547
    %v1653 = vpack.c.b16 %v1550, %v1549
    %v1654 = vpack.c.b16 %v1552, %v1551
    %v1655 = vpack.c.b16 %v1554, %v1553
    %v1656 = vpack.c.b16 %v1556, %v1555
    %v1657 = vpack.c.b16 %v1558, %v1557
    %v1658 = vpack.c.b16 %v1560, %v1559
    %v1659 = vpack.c.b16 %v1562, %v1561
    %v1660 = vpack.c.b16 %v1564, %v1563
    %v1661 = vpack.c.b16 %v1566, %v1565
    %v1662 = vpack.c.b16 %v1568, %v1567
    %v1663 = vpack.c.b16 %v1570, %v1569
    %v1664 = vpack.c.b16 %v1572, %v1571
    %v1665 = vpack.c.b16 %v1574, %v1573
    %v1666 = vpack.c.b16 %v1576, %v1575
    %v1667 = vpack.c.b16 %v1578, %v1577
    %v1668 = vpack.c.b16 %v1580, %v1579
    %v1669 = vpack.c.b16 %v1582, %v1581
    %v1670 = vpack.c.b16 %v1584, %v1583
    %v1671 = vpack.c.b16 %v1586, %v1585
    %v1672 = vpack.c.b16 %v1588, %v1587
    %v1673 = vpack.c.b16 %v1590, %v1589
    %v1674 = vpack.c.b16 %v1592, %v1591
    %v1675 = vpack.c.b16 %v1594, %v1593
    %v1676 = vpack.c.b16 %v1596, %v1595
    %v1677 = vpack.c.b16 %v1598, %v1597
    %v1678 = vpack.c.b16 %v1600, %v1599
    %v1679 = vpack.c.b16 %v1602, %v1601
    %v1680 = vpack.c.b16 %v1604, %v1603
    %v1681 = vpack.c.b16 %v1606, %v1605
    %v1682 = vpack.c.b16 %v1608, %v1607
    %v1683 = vpack.c.b16 %v1610, %v1609
    %v1684 = vpack.c.b16 %v1612, %v1611
    %v1685 = vpack.c.b16 %v1614, %v1613
    %v1686 = vpack.c.b16 %v1616, %v1615
    %v1687 = vpack.c.b16 %v1618, %v1617
    %v1688 = vpack.c.b16 %v1620, %v1619
    %v1689 = vpack.c.b16 %v1622, %v1621
    %v1690 = vpack.c.b16 %v1624, %v1623
    %v1691 = vpack.c.b16 %v1626, %v1625
    %v1692 = vpack.c.b16 %v1628, %v1627
    %v1693 = vpack.c.b16 %v1630, %v1629
    %v1694 = vpack.c.b16 %v1632, %v1631
    %v1695 = vpack.c.b16 %v1634, %v1633
    %v1696 = vpack.c.b16 %v1636, %v1635
    %v1697 = vpack.c.b16 %v1638, %v1637
    %v1698 = vpack.c.b16 %v1640, %v1639
    %v1699 = vpack.c.b16 %v1642, %v1641
    %v1700 = vpack.c.b16 %v1644, %v1643
    %1757 = vmatprep.subr.bf16.mxu0 0
    %1758 = vmatpush1.bf16.msra.mxu0 %v1645
    %1759 = vmatprep.subr.bf16.mxu0 0
    %1760 = vmatpush1.bf16.msra.mxu0 %v1646
    %1761 = vmatprep.subr.bf16.mxu0 0
    %1762 = vmatpush1.bf16.msra.mxu0 %v1647
    %1763 = vmatprep.subr.bf16.mxu0 0
    %1764 = vmatpush1.bf16.msra.mxu0 %v1648
    %1765 = vmatprep.subr.bf16.mxu0 0
    %1766 = vmatpush1.bf16.msra.mxu0 %v1649
    %1767 = vmatprep.subr.bf16.mxu0 0
    %1768 = vmatpush1.bf16.msra.mxu0 %v1650
    %1769 = vmatprep.subr.bf16.mxu0 0
    %1770 = vmatpush1.bf16.msra.mxu0 %v1651
    %1771 = vmatprep.subr.bf16.mxu0 0
    %1772 = vmatpush1.bf16.msra.mxu0 %v1652
    %1773 = vmatprep.subr.bf16.mxu0 0
    %1774 = vmatpush1.bf16.msra.mxu0 %v1653
    %1775 = vmatprep.subr.bf16.mxu0 0
    %1776 = vmatpush1.bf16.msra.mxu0 %v1654
    %1777 = vmatprep.subr.bf16.mxu0 0
    %1778 = vmatpush1.bf16.msra.mxu0 %v1655
    %1779 = vmatprep.subr.bf16.mxu0 0
    %1780 = vmatpush1.bf16.msra.mxu0 %v1656
    %1781 = vmatprep.subr.bf16.mxu0 0
    %1782 = vmatpush1.bf16.msra.mxu0 %v1657
    %1783 = vmatprep.subr.bf16.mxu0 0
    %1784 = vmatpush1.bf16.msra.mxu0 %v1658
    %1785 = vmatprep.subr.bf16.mxu0 0
    %1786 = vmatpush1.bf16.msra.mxu0 %v1659
    %1787 = vmatprep.subr.bf16.mxu0 0
    %1788 = vmatpush1.bf16.msra.mxu0 %v1660
    %1789 = vmatprep.mubr.bf16.mxu0 %v1135
    %1790 = vmatmul.mubr.bf16.gmra.mrb[0].mxu0 %v1134
    %v1791 = vpop.f32.mrb[0].mxu0
    %v1792 = vadd.f32 %v1419, %v1791
    %v1793 = vpop.f32.mrb[0].mxu0
    %v1794 = vpop.f32.mrb[0].mxu0
    %v1795 = vadd.f32 %v1419, %v1794
    %v1796 = vpop.f32.mrb[0].mxu0
    %1797 = vmatprep.mubr.bf16.mxu0 %v1142
    %1798 = vmatmul.mubr.bf16.gmra.mrb[0].mxu0 %v1141
    %v1799 = vpop.f32.mrb[0].mxu0
    %v1800 = vpop.f32.mrb[0].mxu0
    %v1801 = vpop.f32.mrb[0].mxu0
    %v1802 = vadd.f32 %v1419, %v1801
    %v1803 = vpop.f32.mrb[0].mxu0
    %1804 = vmatprep.mubr.bf16.mxu0 %v1149
    %1805 = vmatmul.mubr.bf16.gmra.mrb[0].mxu0 %v1148
    %v1806 = vpop.f32.mrb[0].mxu0
    %v1807 = vadd.f32 %v1419, %v1806
    %v1808 = vpop.f32.mrb[0].mxu0
    %v1809 = vpop.f32.mrb[0].mxu0
    %v1810 = vpop.f32.mrb[0].mxu0
    %1811 = vmatprep.mubr.bf16.mxu0 %v1156
    %1812 = vmatmul.mubr.bf16.gmra.mrb[0].mxu0 %v1155
    %v1813 = vpop.f32.mrb[0].mxu0
    %v1814 = vadd.f32 %v1419, %v1813
    %v1815 = vpop.f32.mrb[0].mxu0
    %v1816 = vpop.f32.mrb[0].mxu0
    %v1817 = vadd.f32 %v1419, %v1816
    %v1818 = vpop.f32.mrb[0].mxu0
    %1819 = vmatprep.mubr.bf16.mxu0 %v1163
    %1820 = vmatmul.mubr.bf16.gmra.mrb[0].mxu0 %v1162
    %v1821 = vpop.f32.mrb[0].mxu0
    %v1822 = vpop.f32.mrb[0].mxu0
    %v1823 = vpop.f32.mrb[0].mxu0
    %v1824 = vadd.f32 %v1419, %v1823
    %v1825 = vpop.f32.mrb[0].mxu0
    %1826 = vmatprep.mubr.bf16.mxu0 %v1170
    %1827 = vmatmul.mubr.bf16.gmra.mrb[0].mxu0 %v1169
    %v1828 = vpop.f32.mrb[0].mxu0
    %v1829 = vadd.f32 %v1419, %v1828
    %v1830 = vpop.f32.mrb[0].mxu0
    %v1831 = vpop.f32.mrb[0].mxu0
    %v1832 = vpop.f32.mrb[0].mxu0
    %1833 = vmatprep.mubr.bf16.mxu0 %v1177
    %1834 = vmatmul.mubr.bf16.gmra.mrb[0].mxu0 %v1176
    %v1835 = vpop.f32.mrb[0].mxu0
    %v1836 = vadd.f32 %v1419, %v1835
    %v1837 = vpop.f32.mrb[0].mxu0
    %v1838 = vpop.f32.mrb[0].mxu0
    %v1839 = vadd.f32 %v1419, %v1838
    %v1840 = vpop.f32.mrb[0].mxu0
    %1841 = vmatprep.mubr.bf16.mxu0 %v1184
    %1842 = vmatmul.mubr.bf16.gmra.mrb[0].mxu0 %v1183
    %v1843 = vpop.f32.mrb[0].mxu0
    %v1844 = vpop.f32.mrb[0].mxu0
    %v1845 = vpop.f32.mrb[0].mxu0
    %v1846 = vadd.f32 %v1419, %v1845
    %v1847 = vpop.f32.mrb[0].mxu0
    %1848 = vmatprep.mubr.bf16.mxu0 %v1191
    %1849 = vmatmul.mubr.bf16.gmra.mrb[0].mxu0 %v1190
    %v1850 = vpop.f32.mrb[0].mxu0
    %v1851 = vadd.f32 %v1419, %v1850
    %v1852 = vpop.f32.mrb[0].mxu0
    %v1853 = vpop.f32.mrb[0].mxu0
    %v1854 = vpop.f32.mrb[0].mxu0
    %1855 = vmatprep.mubr.bf16.mxu0 %v1198
    %1856 = vmatmul.mubr.bf16.gmra.mrb[0].mxu0 %v1197
    %v1857 = vpop.f32.mrb[0].mxu0
    %v1858 = vadd.f32 %v1419, %v1857
    %v1859 = vpop.f32.mrb[0].mxu0
    %v1860 = vpop.f32.mrb[0].mxu0
    %v1861 = vadd.f32 %v1419, %v1860
    %v1862 = vpop.f32.mrb[0].mxu0
    %1863 = vmatprep.mubr.bf16.mxu0 %v1205
    %1864 = vmatmul.mubr.bf16.gmra.mrb[0].mxu0 %v1204
    %v1865 = vpop.f32.mrb[0].mxu0
    %v1866 = vpop.f32.mrb[0].mxu0
    %v1867 = vpop.f32.mrb[0].mxu0
    %v1868 = vadd.f32 %v1419, %v1867
    %v1869 = vpop.f32.mrb[0].mxu0
    %1870 = vmatprep.mubr.bf16.mxu0 %v1212
    %1871 = vmatmul.mubr.bf16.gmra.mrb[0].mxu0 %v1211
    %v1872 = vpop.f32.mrb[0].mxu0
    %v1873 = vadd.f32 %v1419, %v1872
    %v1874 = vpop.f32.mrb[0].mxu0
    %v1875 = vpop.f32.mrb[0].mxu0
    %v1876 = vpop.f32.mrb[0].mxu0
    %1877 = vmatprep.mubr.bf16.mxu0 %v1219
    %1878 = vmatmul.mubr.bf16.gmra.mrb[0].mxu0 %v1218
    %v1879 = vpop.f32.mrb[0].mxu0
    %v1880 = vadd.f32 %v1419, %v1879
    %v1881 = vpop.f32.mrb[0].mxu0
    %v1882 = vpop.f32.mrb[0].mxu0
    %v1883 = vadd.f32 %v1419, %v1882
    %v1884 = vpop.f32.mrb[0].mxu0
    %1885 = vmatprep.mubr.bf16.mxu0 %v1226
    %1886 = vmatmul.mubr.bf16.gmra.mrb[0].mxu0 %v1225
    %v1887 = vpop.f32.mrb[0].mxu0
    %v1888 = vpop.f32.mrb[0].mxu0
    %v1889 = vpop.f32.mrb[0].mxu0
    %v1890 = vadd.f32 %v1419, %v1889
    %v1891 = vpop.f32.mrb[0].mxu0
    %1892 = vmatprep.mubr.bf16.mxu0 %v1233
    %1893 = vmatmul.mubr.bf16.gmra.mrb[0].mxu0 %v1232
    %v1894 = vpop.f32.mrb[0].mxu0
    %v1895 = vadd.f32 %v1419, %v1894
    %v1896 = vpop.f32.mrb[0].mxu0
    %v1897 = vpop.f32.mrb[0].mxu0
    %v1898 = vpop.f32.mrb[0].mxu0
    %1899 = vmatprep.mubr.bf16.mxu0 %v1240
    %1900 = vmatmul.mubr.bf16.gmra.mrb[0].mxu0 %v1239
    %v1901 = vpop.f32.mrb[0].mxu0
    %v1902 = vadd.f32 %v1419, %v1901
    %v1903 = vpop.f32.mrb[0].mxu0
    %v1904 = vpop.f32.mrb[0].mxu0
    %v1905 = vadd.f32 %v1419, %v1904
    %v1906 = vpop.f32.mrb[0].mxu0
    %1907 = vmatprep.mubr.bf16.mxu0 %v1247
    %1908 = vmatmul.mubr.bf16.gmra.mrb[0].mxu0 %v1246
    %v1909 = vpop.f32.mrb[0].mxu0
    %v1910 = vpop.f32.mrb[0].mxu0
    %v1911 = vpop.f32.mrb[0].mxu0
    %v1912 = vadd.f32 %v1419, %v1911
    %v1913 = vpop.f32.mrb[0].mxu0
    %1914 = vmatprep.mubr.bf16.mxu0 %v1254
    %1915 = vmatmul.mubr.bf16.gmra.mrb[0].mxu0 %v1253
    %v1916 = vpop.f32.mrb[0].mxu0
    %v1917 = vadd.f32 %v1419, %v1916
    %v1918 = vpop.f32.mrb[0].mxu0
    %v1919 = vpop.f32.mrb[0].mxu0
    %v1920 = vpop.f32.mrb[0].mxu0
    %1921 = vmatprep.mubr.bf16.mxu0 %v1261
    %1922 = vmatmul.mubr.bf16.gmra.mrb[0].mxu0 %v1260
    %v1923 = vpop.f32.mrb[0].mxu0
    %v1924 = vadd.f32 %v1419, %v1923
    %v1925 = vpop.f32.mrb[0].mxu0
    %v1926 = vpop.f32.mrb[0].mxu0
    %v1927 = vadd.f32 %v1419, %v1926
    %v1928 = vpop.f32.mrb[0].mxu0
    %1929 = vmatprep.mubr.bf16.mxu0 %v1268
    %1930 = vmatmul.mubr.bf16.gmra.mrb[0].mxu0 %v1267
    %v1931 = vpop.f32.mrb[0].mxu0
    %v1932 = vpop.f32.mrb[0].mxu0
    %v1933 = vpop.f32.mrb[0].mxu0
    %v1934 = vadd.f32 %v1419, %v1933
    %v1935 = vpop.f32.mrb[0].mxu0
    %1936 = vmatprep.mubr.bf16.mxu0 %v1275
    %1937 = vmatmul.mubr.bf16.gmra.mrb[0].mxu0 %v1274
    %v1938 = vpop.f32.mrb[0].mxu0
    %v1939 = vadd.f32 %v1419, %v1938
    %v1940 = vpop.f32.mrb[0].mxu0
    %v1941 = vpop.f32.mrb[0].mxu0
    %v1942 = vpop.f32.mrb[0].mxu0
    %1943 = vmatprep.mubr.bf16.mxu0 %v1282
    %1944 = vmatmul.mubr.bf16.gmra.mrb[0].mxu0 %v1281
    %v1945 = vpop.f32.mrb[0].mxu0
    %v1946 = vadd.f32 %v1419, %v1945
    %v1947 = vpop.f32.mrb[0].mxu0
    %v1948 = vpop.f32.mrb[0].mxu0
    %v1949 = vadd.f32 %v1419, %v1948
    %v1950 = vpop.f32.mrb[0].mxu0
    %1951 = vmatprep.mubr.bf16.mxu0 %v1289
    %1952 = vmatmul.mubr.bf16.gmra.mrb[0].mxu0 %v1288
    %v1953 = vpop.f32.mrb[0].mxu0
    %v1954 = vpop.f32.mrb[0].mxu0
    %v1955 = vpop.f32.mrb[0].mxu0
    %v1956 = vadd.f32 %v1419, %v1955
    %v1957 = vpop.f32.mrb[0].mxu0
    %1958 = vmatprep.mubr.bf16.mxu0 %v1296
    %1959 = vmatmul.mubr.bf16.gmra.mrb[0].mxu0 %v1295
    %v1960 = vpop.f32.mrb[0].mxu0
    %v1961 = vadd.f32 %v1419, %v1960
    %v1962 = vpop.f32.mrb[0].mxu0
    %v1963 = vpop.f32.mrb[0].mxu0
    %v1964 = vpop.f32.mrb[0].mxu0
    %1965 = vdwg.mxu0
    %1966 = vmatprep.subr.bf16.mxu0 0
    %1967 = vmatpush1.bf16.msra.mxu0 %v1661
    %1968 = vmatprep.subr.bf16.mxu0 0
    %1969 = vmatpush1.bf16.msra.mxu0 %v1662
    %1970 = vmatprep.subr.bf16.mxu0 0
    %1971 = vmatpush1.bf16.msra.mxu0 %v1663
    %1972 = vmatprep.subr.bf16.mxu0 0
    %1973 = vmatpush1.bf16.msra.mxu0 %v1664
    %1974 = vmatprep.subr.bf16.mxu0 0
    %1975 = vmatpush1.bf16.msra.mxu0 %v1665
    %1976 = vmatprep.subr.bf16.mxu0 0
    %1977 = vmatpush1.bf16.msra.mxu0 %v1666
    %1978 = vmatprep.subr.bf16.mxu0 0
    %1979 = vmatpush1.bf16.msra.mxu0 %v1667
    %1980 = vmatprep.subr.bf16.mxu0 0
    %1981 = vmatpush1.bf16.msra.mxu0 %v1668
    %1982 = vmatprep.subr.bf16.mxu0 0
    %1983 = vmatpush1.bf16.msra.mxu0 %v1669
    %1984 = vmatprep.subr.bf16.mxu0 0
    %1985 = vmatpush1.bf16.msra.mxu0 %v1670
    %1986 = vmatprep.subr.bf16.mxu0 0
    %1987 = vmatpush1.bf16.msra.mxu0 %v1671
    %1988 = vmatprep.subr.bf16.mxu0 0
    %1989 = vmatpush1.bf16.msra.mxu0 %v1672
    %1990 = vmatprep.subr.bf16.mxu0 0
    %1991 = vmatpush1.bf16.msra.mxu0 %v1673
    %1992 = vmatprep.subr.bf16.mxu0 0
    %1993 = vmatpush1.bf16.msra.mxu0 %v1674
    %1994 = vmatprep.subr.bf16.mxu0 0
    %1995 = vmatpush1.bf16.msra.mxu0 %v1675
    %1996 = vmatprep.subr.bf16.mxu0 0
    %1997 = vmatpush1.bf16.msra.mxu0 %v1676
    %1998 = vmatprep.mubr.bf16.mxu0 %v1137
    %1999 = vmatmul.mubr.bf16.gmra.mrb[0].mxu0 %v1136
    %v2000 = vpop.f32.mrb[0].mxu0
    %v2001 = vadd.f32 %v1792, %v2000
    %v2002 = vpop.f32.mrb[0].mxu0
    %v2003 = vpop.f32.mrb[0].mxu0
    %v2004 = vadd.f32 %v1795, %v2003
    %v2005 = vpop.f32.mrb[0].mxu0
    %2006 = vmatprep.mubr.bf16.mxu0 %v1144
    %2007 = vmatmul.mubr.bf16.gmra.mrb[0].mxu0 %v1143
    %v2008 = vpop.f32.mrb[0].mxu0
    %v2009 = vpop.f32.mrb[0].mxu0
    %v2010 = vpop.f32.mrb[0].mxu0
    %v2011 = vadd.f32 %v1802, %v2010
    %v2012 = vpop.f32.mrb[0].mxu0
    %2013 = vmatprep.mubr.bf16.mxu0 %v1151
    %2014 = vmatmul.mubr.bf16.gmra.mrb[0].mxu0 %v1150
    %v2015 = vpop.f32.mrb[0].mxu0
    %v2016 = vadd.f32 %v1807, %v2015
    %v2017 = vpop.f32.mrb[0].mxu0
    %v2018 = vpop.f32.mrb[0].mxu0
    %v2019 = vpop.f32.mrb[0].mxu0
    %2020 = vmatprep.mubr.bf16.mxu0 %v1158
    %2021 = vmatmul.mubr.bf16.gmra.mrb[0].mxu0 %v1157
    %v2022 = vpop.f32.mrb[0].mxu0
    %v2023 = vadd.f32 %v1814, %v2022
    %v2024 = vpop.f32.mrb[0].mxu0
    %v2025 = vpop.f32.mrb[0].mxu0
    %v2026 = vadd.f32 %v1817, %v2025
    %v2027 = vpop.f32.mrb[0].mxu0
    %2028 = vmatprep.mubr.bf16.mxu0 %v1165
    %2029 = vmatmul.mubr.bf16.gmra.mrb[0].mxu0 %v1164
    %v2030 = vpop.f32.mrb[0].mxu0
    %v2031 = vpop.f32.mrb[0].mxu0
    %v2032 = vpop.f32.mrb[0].mxu0
    %v2033 = vadd.f32 %v1824, %v2032
    %v2034 = vpop.f32.mrb[0].mxu0
    %2035 = vmatprep.mubr.bf16.mxu0 %v1172
    %2036 = vmatmul.mubr.bf16.gmra.mrb[0].mxu0 %v1171
    %v2037 = vpop.f32.mrb[0].mxu0
    %v2038 = vadd.f32 %v1829, %v2037
    %v2039 = vpop.f32.mrb[0].mxu0
    %v2040 = vpop.f32.mrb[0].mxu0
    %v2041 = vpop.f32.mrb[0].mxu0
    %2042 = vmatprep.mubr.bf16.mxu0 %v1179
    %2043 = vmatmul.mubr.bf16.gmra.mrb[0].mxu0 %v1178
    %v2044 = vpop.f32.mrb[0].mxu0
    %v2045 = vadd.f32 %v1836, %v2044
    %v2046 = vpop.f32.mrb[0].mxu0
    %v2047 = vpop.f32.mrb[0].mxu0
    %v2048 = vadd.f32 %v1839, %v2047
    %v2049 = vpop.f32.mrb[0].mxu0
    %2050 = vmatprep.mubr.bf16.mxu0 %v1186
    %2051 = vmatmul.mubr.bf16.gmra.mrb[0].mxu0 %v1185
    %v2052 = vpop.f32.mrb[0].mxu0
    %v2053 = vpop.f32.mrb[0].mxu0
    %v2054 = vpop.f32.mrb[0].mxu0
    %v2055 = vadd.f32 %v1846, %v2054
    %v2056 = vpop.f32.mrb[0].mxu0
    %2057 = vmatprep.mubr.bf16.mxu0 %v1193
    %2058 = vmatmul.mubr.bf16.gmra.mrb[0].mxu0 %v1192
    %v2059 = vpop.f32.mrb[0].mxu0
    %v2060 = vadd.f32 %v1851, %v2059
    %v2061 = vpop.f32.mrb[0].mxu0
    %v2062 = vpop.f32.mrb[0].mxu0
    %v2063 = vpop.f32.mrb[0].mxu0
    %2064 = vmatprep.mubr.bf16.mxu0 %v1200
    %2065 = vmatmul.mubr.bf16.gmra.mrb[0].mxu0 %v1199
    %v2066 = vpop.f32.mrb[0].mxu0
    %v2067 = vadd.f32 %v1858, %v2066
    %v2068 = vpop.f32.mrb[0].mxu0
    %v2069 = vpop.f32.mrb[0].mxu0
    %v2070 = vadd.f32 %v1861, %v2069
    %v2071 = vpop.f32.mrb[0].mxu0
    %2072 = vmatprep.mubr.bf16.mxu0 %v1207
    %2073 = vmatmul.mubr.bf16.gmra.mrb[0].mxu0 %v1206
    %v2074 = vpop.f32.mrb[0].mxu0
    %v2075 = vpop.f32.mrb[0].mxu0
    %v2076 = vpop.f32.mrb[0].mxu0
    %v2077 = vadd.f32 %v1868, %v2076
    %v2078 = vpop.f32.mrb[0].mxu0
    %2079 = vmatprep.mubr.bf16.mxu0 %v1214
    %2080 = vmatmul.mubr.bf16.gmra.mrb[0].mxu0 %v1213
    %v2081 = vpop.f32.mrb[0].mxu0
    %v2082 = vadd.f32 %v1873, %v2081
    %v2083 = vpop.f32.mrb[0].mxu0
    %v2084 = vpop.f32.mrb[0].mxu0
    %v2085 = vpop.f32.mrb[0].mxu0
    %2086 = vmatprep.mubr.bf16.mxu0 %v1221
    %2087 = vmatmul.mubr.bf16.gmra.mrb[0].mxu0 %v1220
    %v2088 = vpop.f32.mrb[0].mxu0
    %v2089 = vadd.f32 %v1880, %v2088
    %v2090 = vpop.f32.mrb[0].mxu0
    %v2091 = vpop.f32.mrb[0].mxu0
    %v2092 = vadd.f32 %v1883, %v2091
    %v2093 = vpop.f32.mrb[0].mxu0
    %2094 = vmatprep.mubr.bf16.mxu0 %v1228
    %2095 = vmatmul.mubr.bf16.gmra.mrb[0].mxu0 %v1227
    %v2096 = vpop.f32.mrb[0].mxu0
    %v2097 = vpop.f32.mrb[0].mxu0
    %v2098 = vpop.f32.mrb[0].mxu0
    %v2099 = vadd.f32 %v1890, %v2098
    %v2100 = vpop.f32.mrb[0].mxu0
    %2101 = vmatprep.mubr.bf16.mxu0 %v1235
    %2102 = vmatmul.mubr.bf16.gmra.mrb[0].mxu0 %v1234
    %v2103 = vpop.f32.mrb[0].mxu0
    %v2104 = vadd.f32 %v1895, %v2103
    %v2105 = vpop.f32.mrb[0].mxu0
    %v2106 = vpop.f32.mrb[0].mxu0
    %v2107 = vpop.f32.mrb[0].mxu0
    %2108 = vmatprep.mubr.bf16.mxu0 %v1242
    %2109 = vmatmul.mubr.bf16.gmra.mrb[0].mxu0 %v1241
    %v2110 = vpop.f32.mrb[0].mxu0
    %v2111 = vadd.f32 %v1902, %v2110
    %v2112 = vpop.f32.mrb[0].mxu0
    %v2113 = vpop.f32.mrb[0].mxu0
    %v2114 = vadd.f32 %v1905, %v2113
    %v2115 = vpop.f32.mrb[0].mxu0
    %2116 = vmatprep.mubr.bf16.mxu0 %v1249
    %2117 = vmatmul.mubr.bf16.gmra.mrb[0].mxu0 %v1248
    %v2118 = vpop.f32.mrb[0].mxu0
    %v2119 = vpop.f32.mrb[0].mxu0
    %v2120 = vpop.f32.mrb[0].mxu0
    %v2121 = vadd.f32 %v1912, %v2120
    %v2122 = vpop.f32.mrb[0].mxu0
    %2123 = vmatprep.mubr.bf16.mxu0 %v1256
    %2124 = vmatmul.mubr.bf16.gmra.mrb[0].mxu0 %v1255
    %v2125 = vpop.f32.mrb[0].mxu0
    %v2126 = vadd.f32 %v1917, %v2125
    %v2127 = vpop.f32.mrb[0].mxu0
    %v2128 = vpop.f32.mrb[0].mxu0
    %v2129 = vpop.f32.mrb[0].mxu0
    %2130 = vmatprep.mubr.bf16.mxu0 %v1263
    %2131 = vmatmul.mubr.bf16.gmra.mrb[0].mxu0 %v1262
    %v2132 = vpop.f32.mrb[0].mxu0
    %v2133 = vadd.f32 %v1924, %v2132
    %v2134 = vpop.f32.mrb[0].mxu0
    %v2135 = vpop.f32.mrb[0].mxu0
    %v2136 = vadd.f32 %v1927, %v2135
    %v2137 = vpop.f32.mrb[0].mxu0
    %2138 = vmatprep.mubr.bf16.mxu0 %v1270
    %2139 = vmatmul.mubr.bf16.gmra.mrb[0].mxu0 %v1269
    %v2140 = vpop.f32.mrb[0].mxu0
    %v2141 = vpop.f32.mrb[0].mxu0
    %v2142 = vpop.f32.mrb[0].mxu0
    %v2143 = vadd.f32 %v1934, %v2142
    %v2144 = vpop.f32.mrb[0].mxu0
    %2145 = vmatprep.mubr.bf16.mxu0 %v1277
    %2146 = vmatmul.mubr.bf16.gmra.mrb[0].mxu0 %v1276
    %v2147 = vpop.f32.mrb[0].mxu0
    %v2148 = vadd.f32 %v1939, %v2147
    %v2149 = vpop.f32.mrb[0].mxu0
    %v2150 = vpop.f32.mrb[0].mxu0
    %v2151 = vpop.f32.mrb[0].mxu0
    %2152 = vmatprep.mubr.bf16.mxu0 %v1284
    %2153 = vmatmul.mubr.bf16.gmra.mrb[0].mxu0 %v1283
    %v2154 = vpop.f32.mrb[0].mxu0
    %v2155 = vadd.f32 %v1946, %v2154
    %v2156 = vpop.f32.mrb[0].mxu0
    %v2157 = vpop.f32.mrb[0].mxu0
    %v2158 = vadd.f32 %v1949, %v2157
    %v2159 = vpop.f32.mrb[0].mxu0
    %2160 = vmatprep.mubr.bf16.mxu0 %v1291
    %2161 = vmatmul.mubr.bf16.gmra.mrb[0].mxu0 %v1290
    %v2162 = vpop.f32.mrb[0].mxu0
    %v2163 = vpop.f32.mrb[0].mxu0
    %v2164 = vpop.f32.mrb[0].mxu0
    %v2165 = vadd.f32 %v1956, %v2164
    %v2166 = vpop.f32.mrb[0].mxu0
    %2167 = vmatprep.mubr.bf16.mxu0 %v1298
    %2168 = vmatmul.mubr.bf16.gmra.mrb[0].mxu0 %v1297
    %v2169 = vpop.f32.mrb[0].mxu0
    %v2170 = vadd.f32 %v1961, %v2169
    %v2171 = vpop.f32.mrb[0].mxu0
    %v2172 = vpop.f32.mrb[0].mxu0
    %v2173 = vpop.f32.mrb[0].mxu0
    %2174 = vdwg.mxu0
    %2175 = vmatprep.subr.bf16.mxu0 0
    %2176 = vmatpush1.bf16.msra.mxu0 %v1677
    %2177 = vmatprep.subr.bf16.mxu0 0
    %2178 = vmatpush1.bf16.msra.mxu0 %v1678
    %2179 = vmatprep.subr.bf16.mxu0 0
    %2180 = vmatpush1.bf16.msra.mxu0 %v1679
    %2181 = vmatprep.subr.bf16.mxu0 0
    %2182 = vmatpush1.bf16.msra.mxu0 %v1680
    %2183 = vmatprep.subr.bf16.mxu0 0
    %2184 = vmatpush1.bf16.msra.mxu0 %v1681
    %2185 = vmatprep.subr.bf16.mxu0 0
    %2186 = vmatpush1.bf16.msra.mxu0 %v1682
    %2187 = vmatprep.subr.bf16.mxu0 0
    %2188 = vmatpush1.bf16.msra.mxu0 %v1683
    %2189 = vmatprep.subr.bf16.mxu0 0
    %2190 = vmatpush1.bf16.msra.mxu0 %v1684
    %2191 = vmatprep.subr.bf16.mxu0 0
    %2192 = vmatpush1.bf16.msra.mxu0 %v1685
    %2193 = vmatprep.subr.bf16.mxu0 0
    %2194 = vmatpush1.bf16.msra.mxu0 %v1686
    %2195 = vmatprep.subr.bf16.mxu0 0
    %2196 = vmatpush1.bf16.msra.mxu0 %v1687
    %2197 = vmatprep.subr.bf16.mxu0 0
    %2198 = vmatpush1.bf16.msra.mxu0 %v1688
    %2199 = vmatprep.subr.bf16.mxu0 0
    %2200 = vmatpush1.bf16.msra.mxu0 %v1689
    %2201 = vmatprep.subr.bf16.mxu0 0
    %2202 = vmatpush1.bf16.msra.mxu0 %v1690
    %2203 = vmatprep.subr.bf16.mxu0 0
    %2204 = vmatpush1.bf16.msra.mxu0 %v1691
    %2205 = vmatprep.subr.bf16.mxu0 0
    %2206 = vmatpush1.bf16.msra.mxu0 %v1692
    %2207 = vmatprep.mubr.bf16.mxu0 %v1139
    %2208 = vmatmul.mubr.bf16.gmra.mrb[0].mxu0 %v1138
    %v2209 = vpop.f32.mrb[0].mxu0
    %v2210 = vadd.f32 %v2001, %v2209
    %v2211 = vpop.f32.mrb[0].mxu0
    %v2212 = vpop.f32.mrb[0].mxu0
    %v2213 = vadd.f32 %v2004, %v2212
    %v2214 = vpop.f32.mrb[0].mxu0
    %2215 = vmatprep.mubr.bf16.mxu0 %v1146
    %2216 = vmatmul.mubr.bf16.gmra.mrb[0].mxu0 %v1145
    %v2217 = vpop.f32.mrb[0].mxu0
    %v2218 = vpop.f32.mrb[0].mxu0
    %v2219 = vpop.f32.mrb[0].mxu0
    %v2220 = vadd.f32 %v2011, %v2219
    %v2221 = vpop.f32.mrb[0].mxu0
    %2222 = vmatprep.mubr.bf16.mxu0 %v1153
    %2223 = vmatmul.mubr.bf16.gmra.mrb[0].mxu0 %v1152
    %v2224 = vpop.f32.mrb[0].mxu0
    %v2225 = vadd.f32 %v2016, %v2224
    %v2226 = vpop.f32.mrb[0].mxu0
    %v2227 = vpop.f32.mrb[0].mxu0
    %v2228 = vpop.f32.mrb[0].mxu0
    %2229 = vmatprep.mubr.bf16.mxu0 %v1160
    %2230 = vmatmul.mubr.bf16.gmra.mrb[0].mxu0 %v1159
    %v2231 = vpop.f32.mrb[0].mxu0
    %v2232 = vadd.f32 %v2023, %v2231
    %v2233 = vpop.f32.mrb[0].mxu0
    %v2234 = vpop.f32.mrb[0].mxu0
    %v2235 = vadd.f32 %v2026, %v2234
    %v2236 = vpop.f32.mrb[0].mxu0
    %2237 = vmatprep.mubr.bf16.mxu0 %v1167
    %2238 = vmatmul.mubr.bf16.gmra.mrb[0].mxu0 %v1166
    %v2239 = vpop.f32.mrb[0].mxu0
    %v2240 = vpop.f32.mrb[0].mxu0
    %v2241 = vpop.f32.mrb[0].mxu0
    %v2242 = vadd.f32 %v2033, %v2241
    %v2243 = vpop.f32.mrb[0].mxu0
    %2244 = vmatprep.mubr.bf16.mxu0 %v1174
    %2245 = vmatmul.mubr.bf16.gmra.mrb[0].mxu0 %v1173
    %v2246 = vpop.f32.mrb[0].mxu0
    %v2247 = vadd.f32 %v2038, %v2246
    %v2248 = vpop.f32.mrb[0].mxu0
    %v2249 = vpop.f32.mrb[0].mxu0
    %v2250 = vpop.f32.mrb[0].mxu0
    %2251 = vmatprep.mubr.bf16.mxu0 %v1181
    %2252 = vmatmul.mubr.bf16.gmra.mrb[0].mxu0 %v1180
    %v2253 = vpop.f32.mrb[0].mxu0
    %v2254 = vadd.f32 %v2045, %v2253
    %v2255 = vpop.f32.mrb[0].mxu0
    %v2256 = vpop.f32.mrb[0].mxu0
    %v2257 = vadd.f32 %v2048, %v2256
    %v2258 = vpop.f32.mrb[0].mxu0
    %2259 = vmatprep.mubr.bf16.mxu0 %v1188
    %2260 = vmatmul.mubr.bf16.gmra.mrb[0].mxu0 %v1187
    %v2261 = vpop.f32.mrb[0].mxu0
    %v2262 = vpop.f32.mrb[0].mxu0
    %v2263 = vpop.f32.mrb[0].mxu0
    %v2264 = vadd.f32 %v2055, %v2263
    %v2265 = vpop.f32.mrb[0].mxu0
    %2266 = vmatprep.mubr.bf16.mxu0 %v1195
    %2267 = vmatmul.mubr.bf16.gmra.mrb[0].mxu0 %v1194
    %v2268 = vpop.f32.mrb[0].mxu0
    %v2269 = vadd.f32 %v2060, %v2268
    %v2270 = vpop.f32.mrb[0].mxu0
    %v2271 = vpop.f32.mrb[0].mxu0
    %v2272 = vpop.f32.mrb[0].mxu0
    %2273 = vmatprep.mubr.bf16.mxu0 %v1202
    %2274 = vmatmul.mubr.bf16.gmra.mrb[0].mxu0 %v1201
    %v2275 = vpop.f32.mrb[0].mxu0
    %v2276 = vadd.f32 %v2067, %v2275
    %v2277 = vpop.f32.mrb[0].mxu0
    %v2278 = vpop.f32.mrb[0].mxu0
    %v2279 = vadd.f32 %v2070, %v2278
    %v2280 = vpop.f32.mrb[0].mxu0
    %2281 = vmatprep.mubr.bf16.mxu0 %v1209
    %2282 = vmatmul.mubr.bf16.gmra.mrb[0].mxu0 %v1208
    %v2283 = vpop.f32.mrb[0].mxu0
    %v2284 = vpop.f32.mrb[0].mxu0
    %v2285 = vpop.f32.mrb[0].mxu0
    %v2286 = vadd.f32 %v2077, %v2285
    %v2287 = vpop.f32.mrb[0].mxu0
    %2288 = vmatprep.mubr.bf16.mxu0 %v1216
    %2289 = vmatmul.mubr.bf16.gmra.mrb[0].mxu0 %v1215
    %v2290 = vpop.f32.mrb[0].mxu0
    %v2291 = vadd.f32 %v2082, %v2290
    %v2292 = vpop.f32.mrb[0].mxu0
    %v2293 = vpop.f32.mrb[0].mxu0
    %v2294 = vpop.f32.mrb[0].mxu0
    %2295 = vmatprep.mubr.bf16.mxu0 %v1223
    %2296 = vmatmul.mubr.bf16.gmra.mrb[0].mxu0 %v1222
    %v2297 = vpop.f32.mrb[0].mxu0
    %v2298 = vadd.f32 %v2089, %v2297
    %v2299 = vpop.f32.mrb[0].mxu0
    %v2300 = vpop.f32.mrb[0].mxu0
    %v2301 = vadd.f32 %v2092, %v2300
    %v2302 = vpop.f32.mrb[0].mxu0
    %2303 = vmatprep.mubr.bf16.mxu0 %v1230
    %2304 = vmatmul.mubr.bf16.gmra.mrb[0].mxu0 %v1229
    %v2305 = vpop.f32.mrb[0].mxu0
    %v2306 = vpop.f32.mrb[0].mxu0
    %v2307 = vpop.f32.mrb[0].mxu0
    %v2308 = vadd.f32 %v2099, %v2307
    %v2309 = vpop.f32.mrb[0].mxu0
    %2310 = vmatprep.mubr.bf16.mxu0 %v1237
    %2311 = vmatmul.mubr.bf16.gmra.mrb[0].mxu0 %v1236
    %v2312 = vpop.f32.mrb[0].mxu0
    %v2313 = vadd.f32 %v2104, %v2312
    %v2314 = vpop.f32.mrb[0].mxu0
    %v2315 = vpop.f32.mrb[0].mxu0
    %v2316 = vpop.f32.mrb[0].mxu0
    %2317 = vmatprep.mubr.bf16.mxu0 %v1244
    %2318 = vmatmul.mubr.bf16.gmra.mrb[0].mxu0 %v1243
    %v2319 = vpop.f32.mrb[0].mxu0
    %v2320 = vadd.f32 %v2111, %v2319
    %v2321 = vpop.f32.mrb[0].mxu0
    %v2322 = vpop.f32.mrb[0].mxu0
    %v2323 = vadd.f32 %v2114, %v2322
    %v2324 = vpop.f32.mrb[0].mxu0
    %2325 = vmatprep.mubr.bf16.mxu0 %v1251
    %2326 = vmatmul.mubr.bf16.gmra.mrb[0].mxu0 %v1250
    %v2327 = vpop.f32.mrb[0].mxu0
    %v2328 = vpop.f32.mrb[0].mxu0
    %v2329 = vpop.f32.mrb[0].mxu0
    %v2330 = vadd.f32 %v2121, %v2329
    %v2331 = vpop.f32.mrb[0].mxu0
    %2332 = vmatprep.mubr.bf16.mxu0 %v1258
    %2333 = vmatmul.mubr.bf16.gmra.mrb[0].mxu0 %v1257
    %v2334 = vpop.f32.mrb[0].mxu0
    %v2335 = vadd.f32 %v2126, %v2334
    %v2336 = vpop.f32.mrb[0].mxu0
    %v2337 = vpop.f32.mrb[0].mxu0
    %v2338 = vpop.f32.mrb[0].mxu0
    %2339 = vmatprep.mubr.bf16.mxu0 %v1265
    %2340 = vmatmul.mubr.bf16.gmra.mrb[0].mxu0 %v1264
    %v2341 = vpop.f32.mrb[0].mxu0
    %v2342 = vadd.f32 %v2133, %v2341
    %v2343 = vpop.f32.mrb[0].mxu0
    %v2344 = vpop.f32.mrb[0].mxu0
    %v2345 = vadd.f32 %v2136, %v2344
    %v2346 = vpop.f32.mrb[0].mxu0
    %2347 = vmatprep.mubr.bf16.mxu0 %v1272
    %2348 = vmatmul.mubr.bf16.gmra.mrb[0].mxu0 %v1271
    %v2349 = vpop.f32.mrb[0].mxu0
    %v2350 = vpop.f32.mrb[0].mxu0
    %v2351 = vpop.f32.mrb[0].mxu0
    %v2352 = vadd.f32 %v2143, %v2351
    %v2353 = vpop.f32.mrb[0].mxu0
    %2354 = vmatprep.mubr.bf16.mxu0 %v1279
    %2355 = vmatmul.mubr.bf16.gmra.mrb[0].mxu0 %v1278
    %v2356 = vpop.f32.mrb[0].mxu0
    %v2357 = vadd.f32 %v2148, %v2356
    %v2358 = vpop.f32.mrb[0].mxu0
    %v2359 = vpop.f32.mrb[0].mxu0
    %v2360 = vpop.f32.mrb[0].mxu0
    %2361 = vmatprep.mubr.bf16.mxu0 %v1286
    %2362 = vmatmul.mubr.bf16.gmra.mrb[0].mxu0 %v1285
    %v2363 = vpop.f32.mrb[0].mxu0
    %v2364 = vadd.f32 %v2155, %v2363
    %v2365 = vpop.f32.mrb[0].mxu0
    %v2366 = vpop.f32.mrb[0].mxu0
    %v2367 = vadd.f32 %v2158, %v2366
    %v2368 = vpop.f32.mrb[0].mxu0
    %2369 = vmatprep.mubr.bf16.mxu0 %v1293
    %2370 = vmatmul.mubr.bf16.gmra.mrb[0].mxu0 %v1292
    %v2371 = vpop.f32.mrb[0].mxu0
    %v2372 = vpop.f32.mrb[0].mxu0
    %v2373 = vpop.f32.mrb[0].mxu0
    %v2374 = vadd.f32 %v2165, %v2373
    %v2375 = vpop.f32.mrb[0].mxu0
    %2376 = vmatprep.mubr.bf16.mxu0 %v1300
    %2377 = vmatmul.mubr.bf16.gmra.mrb[0].mxu0 %v1299
    %v2378 = vpop.f32.mrb[0].mxu0
    %v2379 = vadd.f32 %v2170, %v2378
    %v2380 = vpop.f32.mrb[0].mxu0
    %v2381 = vpop.f32.mrb[0].mxu0
    %v2382 = vpop.f32.mrb[0].mxu0
    %2383 = vdwg.mxu0
    %2384 = vmatprep.subr.bf16.mxu0 0
    %2385 = vmatpush1.bf16.msra.mxu0 %v1693
    %2386 = vmatprep.subr.bf16.mxu0 0
    %2387 = vmatpush1.bf16.msra.mxu0 %v1694
    %2388 = vmatprep.subr.bf16.mxu0 0
    %2389 = vmatpush1.bf16.msra.mxu0 %v1695
    %2390 = vmatprep.subr.bf16.mxu0 0
    %2391 = vmatpush1.bf16.msra.mxu0 %v1696
    %2392 = vmatprep.subr.bf16.mxu0 0
    %2393 = vmatpush1.bf16.msra.mxu0 %v1697
    %2394 = vmatprep.subr.bf16.mxu0 0
    %2395 = vmatpush1.bf16.msra.mxu0 %v1698
    %2396 = vmatprep.subr.bf16.mxu0 0
    %2397 = vmatpush1.bf16.msra.mxu0 %v1699
    %2398 = vmatprep.subr.bf16.mxu0 0
    %2399 = vmatpush1.bf16.msra.mxu0 %v1700
    %2400 = vmatprep.subr.bf16.mxu0 0
    %2401 = vmatpush1.bf16.msra.mxu0 0
    %2402 = vmatprep.subr.bf16.mxu0 0
    %2403 = vmatpush1.bf16.msra.mxu0 0
    %2404 = vmatprep.subr.bf16.mxu0 0
    %2405 = vmatpush1.bf16.msra.mxu0 0
    %2406 = vmatprep.subr.bf16.mxu0 0
    %2407 = vmatpush1.bf16.msra.mxu0 0
    %2408 = vmatprep.subr.bf16.mxu0 0
    %2409 = vmatpush1.bf16.msra.mxu0 0
    %2410 = vmatprep.subr.bf16.mxu0 0
    %2411 = vmatpush1.bf16.msra.mxu0 0
    %2412 = vmatprep.subr.bf16.mxu0 0
    %2413 = vmatpush1.bf16.msra.mxu0 0
    %2414 = vmatprep.subr.bf16.mxu0 0
    %2415 = vmatpush1.bf16.msra.mxu0 0
    %2416 = vmatprep.mubr.bf16.mxu0 0
    %2417 = vmatmul.mubr.bf16.gmra.mrb[0].mxu0 %v1140
    %v2418 = vpop.f32.mrb[0].mxu0
    %v2419 = vadd.f32 %v2210, %v2418
    %v2420 = vpop.f32.mrb[0].mxu0
    %v2421 = vpop.f32.mrb[0].mxu0
    %v2422 = vadd.f32 %v2213, %v2421
    %v2423 = vpop.f32.mrb[0].mxu0
    %2424 = vmatprep.mubr.bf16.mxu0 0
    %2425 = vmatmul.mubr.bf16.gmra.mrb[0].mxu0 %v1147
    %v2426 = vpop.f32.mrb[0].mxu0
    %v2427 = vpop.f32.mrb[0].mxu0
    %v2428 = vpop.f32.mrb[0].mxu0
    %v2429 = vadd.f32 %v2220, %v2428
    %v2430 = vpop.f32.mrb[0].mxu0
    %2431 = vmatprep.mubr.bf16.mxu0 0
    %2432 = vmatmul.mubr.bf16.gmra.mrb[0].mxu0 %v1154
    %v2433 = vpop.f32.mrb[0].mxu0
    %v2434 = vadd.f32 %v2225, %v2433
    %v2435 = vpop.f32.mrb[0].mxu0
    %v2436 = vpop.f32.mrb[0].mxu0
    %v2437 = vpop.f32.mrb[0].mxu0
    %2438 = vmatprep.mubr.bf16.mxu0 0
    %2439 = vmatmul.mubr.bf16.gmra.mrb[0].mxu0 %v1161
    %v2440 = vpop.f32.mrb[0].mxu0
    %v2441 = vadd.f32 %v2232, %v2440
    %v2442 = vpop.f32.mrb[0].mxu0
    %v2443 = vpop.f32.mrb[0].mxu0
    %v2444 = vadd.f32 %v2235, %v2443
    %v2445 = vpop.f32.mrb[0].mxu0
    %2446 = vmatprep.mubr.bf16.mxu0 0
    %2447 = vmatmul.mubr.bf16.gmra.mrb[0].mxu0 %v1168
    %v2448 = vpop.f32.mrb[0].mxu0
    %v2449 = vpop.f32.mrb[0].mxu0
    %v2450 = vpop.f32.mrb[0].mxu0
    %v2451 = vadd.f32 %v2242, %v2450
    %v2452 = vpop.f32.mrb[0].mxu0
    %2453 = vmatprep.mubr.bf16.mxu0 0
    %2454 = vmatmul.mubr.bf16.gmra.mrb[0].mxu0 %v1175
    %v2455 = vpop.f32.mrb[0].mxu0
    %v2456 = vadd.f32 %v2247, %v2455
    %v2457 = vpop.f32.mrb[0].mxu0
    %v2458 = vpop.f32.mrb[0].mxu0
    %v2459 = vpop.f32.mrb[0].mxu0
    %2460 = vmatprep.mubr.bf16.mxu0 0
    %2461 = vmatmul.mubr.bf16.gmra.mrb[0].mxu0 %v1182
    %v2462 = vpop.f32.mrb[0].mxu0
    %v2463 = vadd.f32 %v2254, %v2462
    %v2464 = vpop.f32.mrb[0].mxu0
    %v2465 = vpop.f32.mrb[0].mxu0
    %v2466 = vadd.f32 %v2257, %v2465
    %v2467 = vpop.f32.mrb[0].mxu0
    %2468 = vmatprep.mubr.bf16.mxu0 0
    %2469 = vmatmul.mubr.bf16.gmra.mrb[0].mxu0 %v1189
    %v2470 = vpop.f32.mrb[0].mxu0
    %v2471 = vpop.f32.mrb[0].mxu0
    %v2472 = vpop.f32.mrb[0].mxu0
    %v2473 = vadd.f32 %v2264, %v2472
    %v2474 = vpop.f32.mrb[0].mxu0
    %2475 = vmatprep.mubr.bf16.mxu0 0
    %2476 = vmatmul.mubr.bf16.gmra.mrb[0].mxu0 %v1196
    %v2477 = vpop.f32.mrb[0].mxu0
    %v2478 = vadd.f32 %v2269, %v2477
    %v2479 = vpop.f32.mrb[0].mxu0
    %v2480 = vpop.f32.mrb[0].mxu0
    %v2481 = vpop.f32.mrb[0].mxu0
    %2482 = vmatprep.mubr.bf16.mxu0 0
    %2483 = vmatmul.mubr.bf16.gmra.mrb[0].mxu0 %v1203
    %v2484 = vpop.f32.mrb[0].mxu0
    %v2485 = vadd.f32 %v2276, %v2484
    %v2486 = vpop.f32.mrb[0].mxu0
    %v2487 = vpop.f32.mrb[0].mxu0
    %v2488 = vadd.f32 %v2279, %v2487
    %v2489 = vpop.f32.mrb[0].mxu0
    %2490 = vmatprep.mubr.bf16.mxu0 0
    %2491 = vmatmul.mubr.bf16.gmra.mrb[0].mxu0 %v1210
    %v2492 = vpop.f32.mrb[0].mxu0
    %v2493 = vpop.f32.mrb[0].mxu0
    %v2494 = vpop.f32.mrb[0].mxu0
    %v2495 = vadd.f32 %v2286, %v2494
    %v2496 = vpop.f32.mrb[0].mxu0
    %2497 = vmatprep.mubr.bf16.mxu0 0
    %2498 = vmatmul.mubr.bf16.gmra.mrb[0].mxu0 %v1217
    %v2499 = vpop.f32.mrb[0].mxu0
    %v2500 = vadd.f32 %v2291, %v2499
    %v2501 = vpop.f32.mrb[0].mxu0
    %v2502 = vpop.f32.mrb[0].mxu0
    %v2503 = vpop.f32.mrb[0].mxu0
    %2504 = vmatprep.mubr.bf16.mxu0 0
    %2505 = vmatmul.mubr.bf16.gmra.mrb[0].mxu0 %v1224
    %v2506 = vpop.f32.mrb[0].mxu0
    %v2507 = vadd.f32 %v2298, %v2506
    %v2508 = vpop.f32.mrb[0].mxu0
    %v2509 = vpop.f32.mrb[0].mxu0
    %v2510 = vadd.f32 %v2301, %v2509
    %v2511 = vpop.f32.mrb[0].mxu0
    %2512 = vmatprep.mubr.bf16.mxu0 0
    %2513 = vmatmul.mubr.bf16.gmra.mrb[0].mxu0 %v1231
    %v2514 = vpop.f32.mrb[0].mxu0
    %v2515 = vpop.f32.mrb[0].mxu0
    %v2516 = vpop.f32.mrb[0].mxu0
    %v2517 = vadd.f32 %v2308, %v2516
    %v2518 = vpop.f32.mrb[0].mxu0
    %2519 = vmatprep.mubr.bf16.mxu0 0
    %2520 = vmatmul.mubr.bf16.gmra.mrb[0].mxu0 %v1238
    %v2521 = vpop.f32.mrb[0].mxu0
    %v2522 = vadd.f32 %v2313, %v2521
    %v2523 = vpop.f32.mrb[0].mxu0
    %v2524 = vpop.f32.mrb[0].mxu0
    %v2525 = vpop.f32.mrb[0].mxu0
    %2526 = vmatprep.mubr.bf16.mxu0 0
    %2527 = vmatmul.mubr.bf16.gmra.mrb[0].mxu0 %v1245
    %v2528 = vpop.f32.mrb[0].mxu0
    %v2529 = vadd.f32 %v2320, %v2528
    %v2530 = vpop.f32.mrb[0].mxu0
    %v2531 = vpop.f32.mrb[0].mxu0
    %v2532 = vadd.f32 %v2323, %v2531
    %v2533 = vpop.f32.mrb[0].mxu0
    %2534 = vmatprep.mubr.bf16.mxu0 0
    %2535 = vmatmul.mubr.bf16.gmra.mrb[0].mxu0 %v1252
    %v2536 = vpop.f32.mrb[0].mxu0
    %v2537 = vpop.f32.mrb[0].mxu0
    %v2538 = vpop.f32.mrb[0].mxu0
    %v2539 = vadd.f32 %v2330, %v2538
    %v2540 = vpop.f32.mrb[0].mxu0
    %2541 = vmatprep.mubr.bf16.mxu0 0
    %2542 = vmatmul.mubr.bf16.gmra.mrb[0].mxu0 %v1259
    %v2543 = vpop.f32.mrb[0].mxu0
    %v2544 = vadd.f32 %v2335, %v2543
    %v2545 = vpop.f32.mrb[0].mxu0
    %v2546 = vpop.f32.mrb[0].mxu0
    %v2547 = vpop.f32.mrb[0].mxu0
    %2548 = vmatprep.mubr.bf16.mxu0 0
    %2549 = vmatmul.mubr.bf16.gmra.mrb[0].mxu0 %v1266
    %v2550 = vpop.f32.mrb[0].mxu0
    %v2551 = vadd.f32 %v2342, %v2550
    %v2552 = vpop.f32.mrb[0].mxu0
    %v2553 = vpop.f32.mrb[0].mxu0
    %v2554 = vadd.f32 %v2345, %v2553
    %v2555 = vpop.f32.mrb[0].mxu0
    %2556 = vmatprep.mubr.bf16.mxu0 0
    %2557 = vmatmul.mubr.bf16.gmra.mrb[0].mxu0 %v1273
    %v2558 = vpop.f32.mrb[0].mxu0
    %v2559 = vpop.f32.mrb[0].mxu0
    %v2560 = vpop.f32.mrb[0].mxu0
    %v2561 = vadd.f32 %v2352, %v2560
    %v2562 = vpop.f32.mrb[0].mxu0
    %2563 = vmatprep.mubr.bf16.mxu0 0
    %2564 = vmatmul.mubr.bf16.gmra.mrb[0].mxu0 %v1280
    %v2565 = vpop.f32.mrb[0].mxu0
    %v2566 = vadd.f32 %v2357, %v2565
    %v2567 = vpop.f32.mrb[0].mxu0
    %v2568 = vpop.f32.mrb[0].mxu0
    %v2569 = vpop.f32.mrb[0].mxu0
    %2570 = vmatprep.mubr.bf16.mxu0 0
    %2571 = vmatmul.mubr.bf16.gmra.mrb[0].mxu0 %v1287
    %v2572 = vpop.f32.mrb[0].mxu0
    %v2573 = vadd.f32 %v2364, %v2572
    %v2574 = vpop.f32.mrb[0].mxu0
    %v2575 = vpop.f32.mrb[0].mxu0
    %v2576 = vadd.f32 %v2367, %v2575
    %v2577 = vpop.f32.mrb[0].mxu0
    %2578 = vmatprep.mubr.bf16.mxu0 0
    %2579 = vmatmul.mubr.bf16.gmra.mrb[0].mxu0 %v1294
    %v2580 = vpop.f32.mrb[0].mxu0
    %v2581 = vpop.f32.mrb[0].mxu0
    %v2582 = vpop.f32.mrb[0].mxu0
    %v2583 = vadd.f32 %v2374, %v2582
    %v2584 = vpop.f32.mrb[0].mxu0
    %2585 = vmatprep.mubr.bf16.mxu0 0
    %2586 = vmatmul.mubr.bf16.gmra.mrb[0].mxu0 %v1301
    %v2587 = vpop.f32.mrb[0].mxu0
    %v2588 = vadd.f32 %v2379, %v2587
    %v2589 = vpop.f32.mrb[0].mxu0
    %v2590 = vpop.f32.mrb[0].mxu0
    %v2591 = vpop.f32.mrb[0].mxu0
    %2592 = vdwg.mxu0
    %v2593 = vmax.f32 %v2419, 0.0
    %v2594 = vmax.f32 %v2422, 0.0
    %v2595 = vmax.f32 %v2429, 0.0
    %v2596 = vmax.f32 %v2434, 0.0
    %v2597 = vmax.f32 %v2441, 0.0
    %v2598 = vmax.f32 %v2444, 0.0
    %v2599 = vmax.f32 %v2451, 0.0
    %v2600 = vmax.f32 %v2456, 0.0
    %v2601 = vmax.f32 %v2463, 0.0
    %v2602 = vmax.f32 %v2466, 0.0
    %v2603 = vmax.f32 %v2473, 0.0
    %v2604 = vmax.f32 %v2478, 0.0
    %v2605 = vmax.f32 %v2485, 0.0
    %v2606 = vmax.f32 %v2488, 0.0
    %v2607 = vmax.f32 %v2495, 0.0
    %v2608 = vmax.f32 %v2500, 0.0
    %v2609 = vmax.f32 %v2507, 0.0
    %v2610 = vmax.f32 %v2510, 0.0
    %v2611 = vmax.f32 %v2517, 0.0
    %v2612 = vmax.f32 %v2522, 0.0
    %v2613 = vmax.f32 %v2529, 0.0
    %v2614 = vmax.f32 %v2532, 0.0
    %v2615 = vmax.f32 %v2539, 0.0
    %v2616 = vmax.f32 %v2544, 0.0
    %v2617 = vmax.f32 %v2551, 0.0
    %v2618 = vmax.f32 %v2554, 0.0
    %v2619 = vmax.f32 %v2561, 0.0
    %v2620 = vmax.f32 %v2566, 0.0
    %v2621 = vmax.f32 %v2573, 0.0
    %v2622 = vmax.f32 %v2576, 0.0
    %v2623 = vmax.f32 %v2583, 0.0
    %v2624 = vmax.f32 %v2588, 0.0
    %2625 = vst [vmem:[#allocation2] sm:$0xff] %v2593
    %2626 = vst [vmem:[#allocation2 + $0x8] sm:$0xff] %v2594
    %2627 = vst [vmem:[#allocation2 + $0x18] sm:$0xff] %v2595
    %2628 = vst [vmem:[#allocation2 + $0x20] sm:$0xff] %v2596
    %2629 = vst [vmem:[#allocation2 + $0x30] sm:$0xff] %v2597
    %2630 = vst [vmem:[#allocation2 + $0x38] sm:$0xff] %v2598
    %2631 = vst [vmem:[#allocation2 + $0x48] sm:$0xff] %v2599
    %2632 = vst [vmem:[#allocation2 + $0x50] sm:$0xff] %v2600
    %2633 = vst [vmem:[#allocation2 + $0x60] sm:$0xff] %v2601
    %2634 = vst [vmem:[#allocation2 + $0x68] sm:$0xff] %v2602
    %2635 = vst [vmem:[#allocation2 + $0x78] sm:$0xff] %v2603
    %2636 = vst [vmem:[#allocation2 + $0x80] sm:$0xff] %v2604
    %2637 = vst [vmem:[#allocation2 + $0x90] sm:$0xff] %v2605
    %2638 = vst [vmem:[#allocation2 + $0x98] sm:$0xff] %v2606
    %2639 = vst [vmem:[#allocation2 + $0xa8] sm:$0xff] %v2607
    %2640 = vst [vmem:[#allocation2 + $0xb0] sm:$0xff] %v2608
    %2641 = vst [vmem:[#allocation2 + $0xc0] sm:$0xff] %v2609
    %2642 = vst [vmem:[#allocation2 + $0xc8] sm:$0xff] %v2610
    %2643 = vst [vmem:[#allocation2 + $0xd8] sm:$0xff] %v2611
    %2644 = vst [vmem:[#allocation2 + $0xe0] sm:$0xff] %v2612
    %2645 = vst [vmem:[#allocation2 + $0xf0] sm:$0xff] %v2613
    %2646 = vst [vmem:[#allocation2 + $0xf8] sm:$0xff] %v2614
    %2647 = vst [vmem:[#allocation2 + $0x108] sm:$0xff] %v2615
    %2648 = vst [vmem:[#allocation2 + $0x110] sm:$0xff] %v2616
    %2649 = vst [vmem:[#allocation2 + $0x120] sm:$0xff] %v2617
    %2650 = vst [vmem:[#allocation2 + $0x128] sm:$0xff] %v2618
    %2651 = vst [vmem:[#allocation2 + $0x138] sm:$0xff] %v2619
    %2652 = vst [vmem:[#allocation2 + $0x140] sm:$0xff] %v2620
    %2653 = vst [vmem:[#allocation2 + $0x150] sm:$0xff] %v2621
    %2654 = vst [vmem:[#allocation2 + $0x158] sm:$0xff] %v2622
    %2655 = vst [vmem:[#allocation2 + $0x168] sm:$0xff] %v2623
    %2656 = vst [vmem:[#allocation2 + $0x170] sm:$0xff] %v2624
    %v2657 = vld [vmem:[#allocation2] sm:$0xff]
    %v2658 = vld [vmem:[#allocation2 + $0x8] sm:$0xff]
    %v2659 = vld [vmem:[#allocation2 + $0x10] sm:$0xff]
    %v2660 = vld [vmem:[#allocation2 + $0x18] sm:$0xff]
    %v2661 = vld [vmem:[#allocation2 + $0x20] sm:$0xff]
    %v2662 = vld [vmem:[#allocation2 + $0x28] sm:$0xff]
    %v2663 = vld [vmem:[#allocation2 + $0x30] sm:$0xff]
    %v2664 = vld [vmem:[#allocation2 + $0x38] sm:$0xff]
    %v2665 = vld [vmem:[#allocation2 + $0x40] sm:$0xff]
    %v2666 = vld [vmem:[#allocation2 + $0x48] sm:$0xff]
    %v2667 = vld [vmem:[#allocation2 + $0x50] sm:$0xff]
    %v2668 = vld [vmem:[#allocation2 + $0x58] sm:$0xff]
    %v2669 = vld [vmem:[#allocation2 + $0x60] sm:$0xff]
    %v2670 = vld [vmem:[#allocation2 + $0x68] sm:$0xff]
    %v2671 = vld [vmem:[#allocation2 + $0x70] sm:$0xff]
    %v2672 = vld [vmem:[#allocation2 + $0x78] sm:$0xff]
    %v2673 = vld [vmem:[#allocation2 + $0x80] sm:$0xff]
    %v2674 = vld [vmem:[#allocation2 + $0x88] sm:$0xff]
    %v2675 = vld [vmem:[#allocation2 + $0x90] sm:$0xff]
    %v2676 = vld [vmem:[#allocation2 + $0x98] sm:$0xff]
    %v2677 = vld [vmem:[#allocation2 + $0xa0] sm:$0xff]
    %v2678 = vld [vmem:[#allocation2 + $0xa8] sm:$0xff]
    %v2679 = vld [vmem:[#allocation2 + $0xb0] sm:$0xff]
    %v2680 = vld [vmem:[#allocation2 + $0xb8] sm:$0xff]
    %v2681 = vld [vmem:[#allocation2 + $0xc0] sm:$0xff]
    %v2682 = vld [vmem:[#allocation2 + $0xc8] sm:$0xff]
    %v2683 = vld [vmem:[#allocation2 + $0xd0] sm:$0xff]
    %v2684 = vld [vmem:[#allocation2 + $0xd8] sm:$0xff]
    %v2685 = vld [vmem:[#allocation2 + $0xe0] sm:$0xff]
    %v2686 = vld [vmem:[#allocation2 + $0xe8] sm:$0xff]
    %v2687 = vld [vmem:[#allocation2 + $0xf0] sm:$0xff]
    %v2688 = vld [vmem:[#allocation2 + $0xf8] sm:$0xff]
    %v2689 = vld [vmem:[#allocation2 + $0x100] sm:$0xff]
    %v2690 = vld [vmem:[#allocation2 + $0x108] sm:$0xff]
    %v2691 = vld [vmem:[#allocation2 + $0x110] sm:$0xff]
    %v2692 = vld [vmem:[#allocation2 + $0x118] sm:$0xff]
    %v2693 = vld [vmem:[#allocation2 + $0x120] sm:$0xff]
    %v2694 = vld [vmem:[#allocation2 + $0x128] sm:$0xff]
    %v2695 = vld [vmem:[#allocation2 + $0x130] sm:$0xff]
    %v2696 = vld [vmem:[#allocation2 + $0x138] sm:$0xff]
    %v2697 = vld [vmem:[#allocation2 + $0x140] sm:$0xff]
    %v2698 = vld [vmem:[#allocation2 + $0x148] sm:$0xff]
    %v2699 = vld [vmem:[#allocation2 + $0x150] sm:$0xff]
    %v2700 = vld [vmem:[#allocation2 + $0x158] sm:$0xff]
    %v2701 = vld [vmem:[#allocation2 + $0x160] sm:$0xff]
    %v2702 = vld [vmem:[#allocation2 + $0x168] sm:$0xff]
    %v2703 = vld [vmem:[#allocation2 + $0x170] sm:$0xff]
    %v2704 = vld [vmem:[#allocation2 + $0x178] sm:$0xff]
    %v2705 = vrot.slane %v2657, 5
    %v2706 = vrot.slane %v2658, 5
    %v2707 = vrot.slane %v2659, 5
    %v2708 = vrot.slane %v2660, 5
    %v2709 = vrot.slane %v2661, 5
    %v2710 = vrot.slane %v2662, 5
    %v2711 = vrot.slane %v2663, 5
    %v2712 = vrot.slane %v2664, 5
    %v2713 = vrot.slane %v2665, 5
    %v2714 = vrot.slane %v2666, 5
    %v2715 = vrot.slane %v2667, 5
    %v2716 = vrot.slane %v2668, 5
    %v2717 = vrot.slane %v2669, 5
    %v2718 = vrot.slane %v2670, 5
    %v2719 = vrot.slane %v2671, 5
    %v2720 = vrot.slane %v2672, 5
    %v2721 = vrot.slane %v2673, 5
    %v2722 = vrot.slane %v2674, 5
    %v2723 = vrot.slane %v2675, 5
    %v2724 = vrot.slane %v2676, 5
    %v2725 = vrot.slane %v2677, 5
    %v2726 = vrot.slane %v2678, 5
    %v2727 = vrot.slane %v2679, 5
    %v2728 = vrot.slane %v2680, 5
    %v2729 = vrot.slane %v2681, 5
    %v2730 = vrot.slane %v2682, 5
    %v2731 = vrot.slane %v2683, 5
    %v2732 = vrot.slane %v2684, 5
    %v2733 = vrot.slane %v2685, 5
    %v2734 = vrot.slane %v2686, 5
    %v2735 = vrot.slane %v2687, 5
    %v2736 = vrot.slane %v2688, 5
    %v2737 = vrot.slane %v2689, 5
    %v2738 = vrot.slane %v2690, 5
    %v2739 = vrot.slane %v2691, 5
    %v2740 = vrot.slane %v2692, 5
    %v2741 = vrot.slane %v2693, 5
    %v2742 = vrot.slane %v2694, 5
    %v2743 = vrot.slane %v2695, 5
    %v2744 = vrot.slane %v2696, 5
    %v2745 = vrot.slane %v2697, 5
    %v2746 = vrot.slane %v2698, 5
    %v2747 = vrot.slane %v2699, 5
    %v2748 = vrot.slane %v2700, 5
    %v2749 = vrot.slane %v2701, 5
    %v2750 = vrot.slane %v2702, 5
    %v2751 = vrot.slane %v2703, 5
    %v2752 = vrot.slane %v2704, 5
    %v2753 = vsel %vm264, %v2751, %v2752
    %v2754 = vsel %vm264, %v2750, %v2751
    %v2755 = vsel %vm264, %v2749, %v2750
    %v2756 = vsel %vm264, %v2748, %v2749
    %v2757 = vsel %vm264, %v2747, %v2748
    %v2758 = vsel %vm264, %v2746, %v2747
    %v2759 = vsel %vm264, %v2745, %v2746
    %v2760 = vsel %vm264, %v2744, %v2745
    %v2761 = vsel %vm264, %v2743, %v2744
    %v2762 = vsel %vm264, %v2742, %v2743
    %v2763 = vsel %vm264, %v2741, %v2742
    %v2764 = vsel %vm264, %v2740, %v2741
    %v2765 = vsel %vm264, %v2739, %v2740
    %v2766 = vsel %vm264, %v2738, %v2739
    %v2767 = vsel %vm264, %v2737, %v2738
    %v2768 = vsel %vm264, %v2736, %v2737
    %v2769 = vsel %vm264, %v2735, %v2736
    %v2770 = vsel %vm264, %v2734, %v2735
    %v2771 = vsel %vm264, %v2733, %v2734
    %v2772 = vsel %vm264, %v2732, %v2733
    %v2773 = vsel %vm264, %v2731, %v2732
    %v2774 = vsel %vm264, %v2730, %v2731
    %v2775 = vsel %vm264, %v2729, %v2730
    %v2776 = vsel %vm264, %v2728, %v2729
    %v2777 = vsel %vm264, %v2727, %v2728
    %v2778 = vsel %vm264, %v2726, %v2727
    %v2779 = vsel %vm264, %v2725, %v2726
    %v2780 = vsel %vm264, %v2724, %v2725
    %v2781 = vsel %vm264, %v2723, %v2724
    %v2782 = vsel %vm264, %v2722, %v2723
    %v2783 = vsel %vm264, %v2721, %v2722
    %v2784 = vsel %vm264, %v2720, %v2721
    %v2785 = vsel %vm264, %v2719, %v2720
    %v2786 = vsel %vm264, %v2718, %v2719
    %v2787 = vsel %vm264, %v2717, %v2718
    %v2788 = vsel %vm264, %v2716, %v2717
    %v2789 = vsel %vm264, %v2715, %v2716
    %v2790 = vsel %vm264, %v2714, %v2715
    %v2791 = vsel %vm264, %v2713, %v2714
    %v2792 = vsel %vm264, %v2712, %v2713
    %v2793 = vsel %vm264, %v2711, %v2712
    %v2794 = vsel %vm264, %v2710, %v2711
    %v2795 = vsel %vm264, %v2709, %v2710
    %v2796 = vsel %vm264, %v2708, %v2709
    %v2797 = vsel %vm264, %v2707, %v2708
    %v2798 = vsel %vm264, %v2706, %v2707
    %v2799 = vsel %vm264, %v2705, %v2706
    %v2800 = vsel %vm264, %v2752, %v2705
    %v2801 = vpack.c.bf16 %v2799, %v2800
    %v2802 = vpack.c.bf16 %v2797, %v2798
    %v2803 = vpack.c.bf16 %v2795, %v2796
    %v2804 = vpack.c.bf16 %v2793, %v2794
    %v2805 = vpack.c.bf16 %v2791, %v2792
    %v2806 = vpack.c.bf16 %v2789, %v2790
    %v2807 = vpack.c.bf16 %v2787, %v2788
    %v2808 = vpack.c.bf16 %v2785, %v2786
    %v2809 = vpack.c.bf16 %v2783, %v2784
    %v2810 = vpack.c.bf16 %v2781, %v2782
    %v2811 = vpack.c.bf16 %v2779, %v2780
    %v2812 = vpack.c.bf16 %v2777, %v2778
    %v2813 = vpack.c.bf16 %v2775, %v2776
    %v2814 = vpack.c.bf16 %v2773, %v2774
    %v2815 = vpack.c.bf16 %v2771, %v2772
    %v2816 = vpack.c.bf16 %v2769, %v2770
    %v2817 = vpack.c.bf16 %v2767, %v2768
    %v2818 = vpack.c.bf16 %v2765, %v2766
    %v2819 = vpack.c.bf16 %v2763, %v2764
    %v2820 = vpack.c.bf16 %v2761, %v2762
    %v2821 = vpack.c.bf16 %v2759, %v2760
    %v2822 = vpack.c.bf16 %v2757, %v2758
    %v2823 = vpack.c.bf16 %v2755, %v2756
    %v2824 = vpack.c.bf16 %v2753, %v2754
    %2825 = vst [vmem:[#allocation3] sm:$0xff] %v2801
    %2826 = vst [vmem:[#allocation3 + $0x38] sm:$0xff] %v2802
    %2827 = vst [vmem:[#allocation3 + $0x70] sm:$0xff] %v2803
    %2828 = vst [vmem:[#allocation3 + $0xa8] sm:$0xff] %v2804
    %2829 = vst [vmem:[#allocation3 + $0xe0] sm:$0xff] %v2805
    %2830 = vst [vmem:[#allocation3 + $0x118] sm:$0xff] %v2806
    %2831 = vst [vmem:[#allocation3 + $0x150] sm:$0xff] %v2807
    %2832 = vst [vmem:[#allocation3 + $0x188] sm:$0xff] %v2808
    %2833 = vst [vmem:[#allocation3 + $0x1c0] sm:$0xff] %v2809
    %2834 = vst [vmem:[#allocation3 + $0x1f8] sm:$0xff] %v2810
    %2835 = vst [vmem:[#allocation3 + $0x230] sm:$0xff] %v2811
    %2836 = vst [vmem:[#allocation3 + $0x268] sm:$0xff] %v2812
    %2837 = vst [vmem:[#allocation3 + $0x2a0] sm:$0xff] %v2813
    %2838 = vst [vmem:[#allocation3 + $0x2d8] sm:$0xff] %v2814
    %2839 = vst [vmem:[#allocation3 + $0x310] sm:$0xff] %v2815
    %2840 = vst [vmem:[#allocation3 + $0x348] sm:$0xff] %v2816
    %2841 = vst [vmem:[#allocation3 + $0x380] sm:$0xff] %v2817
    %2842 = vst [vmem:[#allocation3 + $0x3b8] sm:$0xff] %v2818
    %2843 = vst [vmem:[#allocation3 + $0x3f0] sm:$0xff] %v2819
    %2844 = vst [vmem:[#allocation3 + $0x428] sm:$0xff] %v2820
    %2845 = vst [vmem:[#allocation3 + $0x460] sm:$0xff] %v2821
    %2846 = vst [vmem:[#allocation3 + $0x498] sm:$0xff] %v2822
    %2847 = vst [vmem:[#allocation3 + $0x4d0] sm:$0xff] %v2823
    %2848 = vst [vmem:[#allocation3 + $0x508] sm:$0xff] %v2824
    %v2849 = vrot.slane %v2657, 6
    %v2850 = vrot.slane %v2658, 6
    %v2851 = vrot.slane %v2659, 6
    %v2852 = vrot.slane %v2660, 6
    %v2853 = vrot.slane %v2661, 6
    %v2854 = vrot.slane %v2662, 6
    %v2855 = vrot.slane %v2663, 6
    %v2856 = vrot.slane %v2664, 6
    %v2857 = vrot.slane %v2665, 6
    %v2858 = vrot.slane %v2666, 6
    %v2859 = vrot.slane %v2667, 6
    %v2860 = vrot.slane %v2668, 6
    %v2861 = vrot.slane %v2669, 6
    %v2862 = vrot.slane %v2670, 6
    %v2863 = vrot.slane %v2671, 6
    %v2864 = vrot.slane %v2672, 6
    %v2865 = vrot.slane %v2673, 6
    %v2866 = vrot.slane %v2674, 6
    %v2867 = vrot.slane %v2675, 6
    %v2868 = vrot.slane %v2676, 6
    %v2869 = vrot.slane %v2677, 6
    %v2870 = vrot.slane %v2678, 6
    %v2871 = vrot.slane %v2679, 6
    %v2872 = vrot.slane %v2680, 6
    %v2873 = vrot.slane %v2681, 6
    %v2874 = vrot.slane %v2682, 6
    %v2875 = vrot.slane %v2683, 6
    %v2876 = vrot.slane %v2684, 6
    %v2877 = vrot.slane %v2685, 6
    %v2878 = vrot.slane %v2686, 6
    %v2879 = vrot.slane %v2687, 6
    %v2880 = vrot.slane %v2688, 6
    %v2881 = vrot.slane %v2689, 6
    %v2882 = vrot.slane %v2690, 6
    %v2883 = vrot.slane %v2691, 6
    %v2884 = vrot.slane %v2692, 6
    %v2885 = vrot.slane %v2693, 6
    %v2886 = vrot.slane %v2694, 6
    %v2887 = vrot.slane %v2695, 6
    %v2888 = vrot.slane %v2696, 6
    %v2889 = vrot.slane %v2697, 6
    %v2890 = vrot.slane %v2698, 6
    %v2891 = vrot.slane %v2699, 6
    %v2892 = vrot.slane %v2700, 6
    %v2893 = vrot.slane %v2701, 6
    %v2894 = vrot.slane %v2702, 6
    %v2895 = vrot.slane %v2703, 6
    %v2896 = vrot.slane %v2704, 6
    %v2897 = vsel %vm409, %v2895, %v2896
    %v2898 = vsel %vm409, %v2894, %v2895
    %v2899 = vsel %vm409, %v2893, %v2894
    %v2900 = vsel %vm409, %v2892, %v2893
    %v2901 = vsel %vm409, %v2891, %v2892
    %v2902 = vsel %vm409, %v2890, %v2891
    %v2903 = vsel %vm409, %v2889, %v2890
    %v2904 = vsel %vm409, %v2888, %v2889
    %v2905 = vsel %vm409, %v2887, %v2888
    %v2906 = vsel %vm409, %v2886, %v2887
    %v2907 = vsel %vm409, %v2885, %v2886
    %v2908 = vsel %vm409, %v2884, %v2885
    %v2909 = vsel %vm409, %v2883, %v2884
    %v2910 = vsel %vm409, %v2882, %v2883
    %v2911 = vsel %vm409, %v2881, %v2882
    %v2912 = vsel %vm409, %v2880, %v2881
    %v2913 = vsel %vm409, %v2879, %v2880
    %v2914 = vsel %vm409, %v2878, %v2879
    %v2915 = vsel %vm409, %v2877, %v2878
    %v2916 = vsel %vm409, %v2876, %v2877
    %v2917 = vsel %vm409, %v2875, %v2876
    %v2918 = vsel %vm409, %v2874, %v2875
    %v2919 = vsel %vm409, %v2873, %v2874
    %v2920 = vsel %vm409, %v2872, %v2873
    %v2921 = vsel %vm409, %v2871, %v2872
    %v2922 = vsel %vm409, %v2870, %v2871
    %v2923 = vsel %vm409, %v2869, %v2870
    %v2924 = vsel %vm409, %v2868, %v2869
    %v2925 = vsel %vm409, %v2867, %v2868
    %v2926 = vsel %vm409, %v2866, %v2867
    %v2927 = vsel %vm409, %v2865, %v2866
    %v2928 = vsel %vm409, %v2864, %v2865
    %v2929 = vsel %vm409, %v2863, %v2864
    %v2930 = vsel %vm409, %v2862, %v2863
    %v2931 = vsel %vm409, %v2861, %v2862
    %v2932 = vsel %vm409, %v2860, %v2861
    %v2933 = vsel %vm409, %v2859, %v2860
    %v2934 = vsel %vm409, %v2858, %v2859
    %v2935 = vsel %vm409, %v2857, %v2858
    %v2936 = vsel %vm409, %v2856, %v2857
    %v2937 = vsel %vm409, %v2855, %v2856
    %v2938 = vsel %vm409, %v2854, %v2855
    %v2939 = vsel %vm409, %v2853, %v2854
    %v2940 = vsel %vm409, %v2852, %v2853
    %v2941 = vsel %vm409, %v2851, %v2852
    %v2942 = vsel %vm409, %v2850, %v2851
    %v2943 = vsel %vm409, %v2849, %v2850
    %v2944 = vsel %vm409, %v2896, %v2849
    %v2945 = vpack.c.bf16 %v2943, %v2944
    %v2946 = vpack.c.bf16 %v2941, %v2942
    %v2947 = vpack.c.bf16 %v2939, %v2940
    %v2948 = vpack.c.bf16 %v2937, %v2938
    %v2949 = vpack.c.bf16 %v2935, %v2936
    %v2950 = vpack.c.bf16 %v2933, %v2934
    %v2951 = vpack.c.bf16 %v2931, %v2932
    %v2952 = vpack.c.bf16 %v2929, %v2930
    %v2953 = vpack.c.bf16 %v2927, %v2928
    %v2954 = vpack.c.bf16 %v2925, %v2926
    %v2955 = vpack.c.bf16 %v2923, %v2924
    %v2956 = vpack.c.bf16 %v2921, %v2922
    %v2957 = vpack.c.bf16 %v2919, %v2920
    %v2958 = vpack.c.bf16 %v2917, %v2918
    %v2959 = vpack.c.bf16 %v2915, %v2916
    %v2960 = vpack.c.bf16 %v2913, %v2914
    %v2961 = vpack.c.bf16 %v2911, %v2912
    %v2962 = vpack.c.bf16 %v2909, %v2910
    %v2963 = vpack.c.bf16 %v2907, %v2908
    %v2964 = vpack.c.bf16 %v2905, %v2906
    %v2965 = vpack.c.bf16 %v2903, %v2904
    %v2966 = vpack.c.bf16 %v2901, %v2902
    %v2967 = vpack.c.bf16 %v2899, %v2900
    %v2968 = vpack.c.bf16 %v2897, %v2898
    %2969 = vst [vmem:[#allocation3 + $0x8] sm:$0xff] %v2945
    %2970 = vst [vmem:[#allocation3 + $0x40] sm:$0xff] %v2946
    %2971 = vst [vmem:[#allocation3 + $0x78] sm:$0xff] %v2947
    %2972 = vst [vmem:[#allocation3 + $0xb0] sm:$0xff] %v2948
    %2973 = vst [vmem:[#allocation3 + $0xe8] sm:$0xff] %v2949
    %2974 = vst [vmem:[#allocation3 + $0x120] sm:$0xff] %v2950
    %2975 = vst [vmem:[#allocation3 + $0x158] sm:$0xff] %v2951
    %2976 = vst [vmem:[#allocation3 + $0x190] sm:$0xff] %v2952
    %2977 = vst [vmem:[#allocation3 + $0x1c8] sm:$0xff] %v2953
    %2978 = vst [vmem:[#allocation3 + $0x200] sm:$0xff] %v2954
    %2979 = vst [vmem:[#allocation3 + $0x238] sm:$0xff] %v2955
    %2980 = vst [vmem:[#allocation3 + $0x270] sm:$0xff] %v2956
    %2981 = vst [vmem:[#allocation3 + $0x2a8] sm:$0xff] %v2957
    %2982 = vst [vmem:[#allocation3 + $0x2e0] sm:$0xff] %v2958
    %2983 = vst [vmem:[#allocation3 + $0x318] sm:$0xff] %v2959
    %2984 = vst [vmem:[#allocation3 + $0x350] sm:$0xff] %v2960
    %2985 = vst [vmem:[#allocation3 + $0x388] sm:$0xff] %v2961
    %2986 = vst [vmem:[#allocation3 + $0x3c0] sm:$0xff] %v2962
    %2987 = vst [vmem:[#allocation3 + $0x3f8] sm:$0xff] %v2963
    %2988 = vst [vmem:[#allocation3 + $0x430] sm:$0xff] %v2964
    %2989 = vst [vmem:[#allocation3 + $0x468] sm:$0xff] %v2965
    %2990 = vst [vmem:[#allocation3 + $0x4a0] sm:$0xff] %v2966
    %2991 = vst [vmem:[#allocation3 + $0x4d8] sm:$0xff] %v2967
    %2992 = vst [vmem:[#allocation3 + $0x510] sm:$0xff] %v2968
    %v2993 = vrot.slane %v2657, 7
    %v2994 = vrot.slane %v2658, 7
    %v2995 = vrot.slane %v2659, 7
    %v2996 = vrot.slane %v2660, 7
    %v2997 = vrot.slane %v2661, 7
    %v2998 = vrot.slane %v2662, 7
    %v2999 = vrot.slane %v2663, 7
    %v3000 = vrot.slane %v2664, 7
    %v3001 = vrot.slane %v2665, 7
    %v3002 = vrot.slane %v2666, 7
    %v3003 = vrot.slane %v2667, 7
    %v3004 = vrot.slane %v2668, 7
    %v3005 = vrot.slane %v2669, 7
    %v3006 = vrot.slane %v2670, 7
    %v3007 = vrot.slane %v2671, 7
    %v3008 = vrot.slane %v2672, 7
    %v3009 = vrot.slane %v2673, 7
    %v3010 = vrot.slane %v2674, 7
    %v3011 = vrot.slane %v2675, 7
    %v3012 = vrot.slane %v2676, 7
    %v3013 = vrot.slane %v2677, 7
    %v3014 = vrot.slane %v2678, 7
    %v3015 = vrot.slane %v2679, 7
    %v3016 = vrot.slane %v2680, 7
    %v3017 = vrot.slane %v2681, 7
    %v3018 = vrot.slane %v2682, 7
    %v3019 = vrot.slane %v2683, 7
    %v3020 = vrot.slane %v2684, 7
    %v3021 = vrot.slane %v2685, 7
    %v3022 = vrot.slane %v2686, 7
    %v3023 = vrot.slane %v2687, 7
    %v3024 = vrot.slane %v2688, 7
    %v3025 = vrot.slane %v2689, 7
    %v3026 = vrot.slane %v2690, 7
    %v3027 = vrot.slane %v2691, 7
    %v3028 = vrot.slane %v2692, 7
    %v3029 = vrot.slane %v2693, 7
    %v3030 = vrot.slane %v2694, 7
    %v3031 = vrot.slane %v2695, 7
    %v3032 = vrot.slane %v2696, 7
    %v3033 = vrot.slane %v2697, 7
    %v3034 = vrot.slane %v2698, 7
    %v3035 = vrot.slane %v2699, 7
    %v3036 = vrot.slane %v2700, 7
    %v3037 = vrot.slane %v2701, 7
    %v3038 = vrot.slane %v2702, 7
    %v3039 = vrot.slane %v2703, 7
    %v3040 = vrot.slane %v2704, 7
    %v3041 = vsel %vm554, %v3039, %v3040
    %v3042 = vsel %vm554, %v3038, %v3039
    %v3043 = vsel %vm554, %v3037, %v3038
    %v3044 = vsel %vm554, %v3036, %v3037
    %v3045 = vsel %vm554, %v3035, %v3036
    %v3046 = vsel %vm554, %v3034, %v3035
    %v3047 = vsel %vm554, %v3033, %v3034
    %v3048 = vsel %vm554, %v3032, %v3033
    %v3049 = vsel %vm554, %v3031, %v3032
    %v3050 = vsel %vm554, %v3030, %v3031
    %v3051 = vsel %vm554, %v3029, %v3030
    %v3052 = vsel %vm554, %v3028, %v3029
    %v3053 = vsel %vm554, %v3027, %v3028
    %v3054 = vsel %vm554, %v3026, %v3027
    %v3055 = vsel %vm554, %v3025, %v3026
    %v3056 = vsel %vm554, %v3024, %v3025
    %v3057 = vsel %vm554, %v3023, %v3024
    %v3058 = vsel %vm554, %v3022, %v3023
    %v3059 = vsel %vm554, %v3021, %v3022
    %v3060 = vsel %vm554, %v3020, %v3021
    %v3061 = vsel %vm554, %v3019, %v3020
    %v3062 = vsel %vm554, %v3018, %v3019
    %v3063 = vsel %vm554, %v3017, %v3018
    %v3064 = vsel %vm554, %v3016, %v3017
    %v3065 = vsel %vm554, %v3015, %v3016
    %v3066 = vsel %vm554, %v3014, %v3015
    %v3067 = vsel %vm554, %v3013, %v3014
    %v3068 = vsel %vm554, %v3012, %v3013
    %v3069 = vsel %vm554, %v3011, %v3012
    %v3070 = vsel %vm554, %v3010, %v3011
    %v3071 = vsel %vm554, %v3009, %v3010
    %v3072 = vsel %vm554, %v3008, %v3009
    %v3073 = vsel %vm554, %v3007, %v3008
    %v3074 = vsel %vm554, %v3006, %v3007
    %v3075 = vsel %vm554, %v3005, %v3006
    %v3076 = vsel %vm554, %v3004, %v3005
    %v3077 = vsel %vm554, %v3003, %v3004
    %v3078 = vsel %vm554, %v3002, %v3003
    %v3079 = vsel %vm554, %v3001, %v3002
    %v3080 = vsel %vm554, %v3000, %v3001
    %v3081 = vsel %vm554, %v2999, %v3000
    %v3082 = vsel %vm554, %v2998, %v2999
    %v3083 = vsel %vm554, %v2997, %v2998
    %v3084 = vsel %vm554, %v2996, %v2997
    %v3085 = vsel %vm554, %v2995, %v2996
    %v3086 = vsel %vm554, %v2994, %v2995
    %v3087 = vsel %vm554, %v2993, %v2994
    %v3088 = vsel %vm554, %v3040, %v2993
    %v3089 = vpack.c.bf16 %v3087, %v3088
    %v3090 = vpack.c.bf16 %v3085, %v3086
    %v3091 = vpack.c.bf16 %v3083, %v3084
    %v3092 = vpack.c.bf16 %v3081, %v3082
    %v3093 = vpack.c.bf16 %v3079, %v3080
    %v3094 = vpack.c.bf16 %v3077, %v3078
    %v3095 = vpack.c.bf16 %v3075, %v3076
    %v3096 = vpack.c.bf16 %v3073, %v3074
    %v3097 = vpack.c.bf16 %v3071, %v3072
    %v3098 = vpack.c.bf16 %v3069, %v3070
    %v3099 = vpack.c.bf16 %v3067, %v3068
    %v3100 = vpack.c.bf16 %v3065, %v3066
    %v3101 = vpack.c.bf16 %v3063, %v3064
    %v3102 = vpack.c.bf16 %v3061, %v3062
    %v3103 = vpack.c.bf16 %v3059, %v3060
    %v3104 = vpack.c.bf16 %v3057, %v3058
    %v3105 = vpack.c.bf16 %v3055, %v3056
    %v3106 = vpack.c.bf16 %v3053, %v3054
    %v3107 = vpack.c.bf16 %v3051, %v3052
    %v3108 = vpack.c.bf16 %v3049, %v3050
    %v3109 = vpack.c.bf16 %v3047, %v3048
    %v3110 = vpack.c.bf16 %v3045, %v3046
    %v3111 = vpack.c.bf16 %v3043, %v3044
    %v3112 = vpack.c.bf16 %v3041, %v3042
    %3113 = vst [vmem:[#allocation3 + $0x10] sm:$0xff] %v3089
    %3114 = vst [vmem:[#allocation3 + $0x48] sm:$0xff] %v3090
    %3115 = vst [vmem:[#allocation3 + $0x80] sm:$0xff] %v3091
    %3116 = vst [vmem:[#allocation3 + $0xb8] sm:$0xff] %v3092
    %3117 = vst [vmem:[#allocation3 + $0xf0] sm:$0xff] %v3093
    %3118 = vst [vmem:[#allocation3 + $0x128] sm:$0xff] %v3094
    %3119 = vst [vmem:[#allocation3 + $0x160] sm:$0xff] %v3095
    %3120 = vst [vmem:[#allocation3 + $0x198] sm:$0xff] %v3096
    %3121 = vst [vmem:[#allocation3 + $0x1d0] sm:$0xff] %v3097
    %3122 = vst [vmem:[#allocation3 + $0x208] sm:$0xff] %v3098
    %3123 = vst [vmem:[#allocation3 + $0x240] sm:$0xff] %v3099
    %3124 = vst [vmem:[#allocation3 + $0x278] sm:$0xff] %v3100
    %3125 = vst [vmem:[#allocation3 + $0x2b0] sm:$0xff] %v3101
    %3126 = vst [vmem:[#allocation3 + $0x2e8] sm:$0xff] %v3102
    %3127 = vst [vmem:[#allocation3 + $0x320] sm:$0xff] %v3103
    %3128 = vst [vmem:[#allocation3 + $0x358] sm:$0xff] %v3104
    %3129 = vst [vmem:[#allocation3 + $0x390] sm:$0xff] %v3105
    %3130 = vst [vmem:[#allocation3 + $0x3c8] sm:$0xff] %v3106
    %3131 = vst [vmem:[#allocation3 + $0x400] sm:$0xff] %v3107
    %3132 = vst [vmem:[#allocation3 + $0x438] sm:$0xff] %v3108
    %3133 = vst [vmem:[#allocation3 + $0x470] sm:$0xff] %v3109
    %3134 = vst [vmem:[#allocation3 + $0x4a8] sm:$0xff] %v3110
    %3135 = vst [vmem:[#allocation3 + $0x4e0] sm:$0xff] %v3111
    %3136 = vst [vmem:[#allocation3 + $0x518] sm:$0xff] %v3112
    %v3137 = vpack.c.bf16 %v2658, %v2657
    %v3138 = vpack.c.bf16 %v2660, %v2659
    %v3139 = vpack.c.bf16 %v2662, %v2661
    %v3140 = vpack.c.bf16 %v2664, %v2663
    %v3141 = vpack.c.bf16 %v2666, %v2665
    %v3142 = vpack.c.bf16 %v2668, %v2667
    %v3143 = vpack.c.bf16 %v2670, %v2669
    %v3144 = vpack.c.bf16 %v2672, %v2671
    %v3145 = vpack.c.bf16 %v2674, %v2673
    %v3146 = vpack.c.bf16 %v2676, %v2675
    %v3147 = vpack.c.bf16 %v2678, %v2677
    %v3148 = vpack.c.bf16 %v2680, %v2679
    %v3149 = vpack.c.bf16 %v2682, %v2681
    %v3150 = vpack.c.bf16 %v2684, %v2683
    %v3151 = vpack.c.bf16 %v2686, %v2685
    %v3152 = vpack.c.bf16 %v2688, %v2687
    %v3153 = vpack.c.bf16 %v2690, %v2689
    %v3154 = vpack.c.bf16 %v2692, %v2691
    %v3155 = vpack.c.bf16 %v2694, %v2693
    %v3156 = vpack.c.bf16 %v2696, %v2695
    %v3157 = vpack.c.bf16 %v2698, %v2697
    %v3158 = vpack.c.bf16 %v2700, %v2699
    %v3159 = vpack.c.bf16 %v2702, %v2701
    %v3160 = vpack.c.bf16 %v2704, %v2703
    %3161 = vst [vmem:[#allocation3 + $0x18] sm:$0xff] %v3137
    %3162 = vst [vmem:[#allocation3 + $0x50] sm:$0xff] %v3138
    %3163 = vst [vmem:[#allocation3 + $0x88] sm:$0xff] %v3139
    %3164 = vst [vmem:[#allocation3 + $0xc0] sm:$0xff] %v3140
    %3165 = vst [vmem:[#allocation3 + $0xf8] sm:$0xff] %v3141
    %3166 = vst [vmem:[#allocation3 + $0x130] sm:$0xff] %v3142
    %3167 = vst [vmem:[#allocation3 + $0x168] sm:$0xff] %v3143
    %3168 = vst [vmem:[#allocation3 + $0x1a0] sm:$0xff] %v3144
    %3169 = vst [vmem:[#allocation3 + $0x1d8] sm:$0xff] %v3145
    %3170 = vst [vmem:[#allocation3 + $0x210] sm:$0xff] %v3146
    %3171 = vst [vmem:[#allocation3 + $0x248] sm:$0xff] %v3147
    %3172 = vst [vmem:[#allocation3 + $0x280] sm:$0xff] %v3148
    %3173 = vst [vmem:[#allocation3 + $0x2b8] sm:$0xff] %v3149
    %3174 = vst [vmem:[#allocation3 + $0x2f0] sm:$0xff] %v3150
    %3175 = vst [vmem:[#allocation3 + $0x328] sm:$0xff] %v3151
    %3176 = vst [vmem:[#allocation3 + $0x360] sm:$0xff] %v3152
    %3177 = vst [vmem:[#allocation3 + $0x398] sm:$0xff] %v3153
    %3178 = vst [vmem:[#allocation3 + $0x3d0] sm:$0xff] %v3154
    %3179 = vst [vmem:[#allocation3 + $0x408] sm:$0xff] %v3155
    %3180 = vst [vmem:[#allocation3 + $0x440] sm:$0xff] %v3156
    %3181 = vst [vmem:[#allocation3 + $0x478] sm:$0xff] %v3157
    %3182 = vst [vmem:[#allocation3 + $0x4b0] sm:$0xff] %v3158
    %3183 = vst [vmem:[#allocation3 + $0x4e8] sm:$0xff] %v3159
    %3184 = vst [vmem:[#allocation3 + $0x520] sm:$0xff] %v3160
    %v3185 = vrot.slane %v2657, 1
    %v3186 = vrot.slane %v2658, 1
    %v3187 = vrot.slane %v2659, 1
    %v3188 = vrot.slane %v2660, 1
    %v3189 = vrot.slane %v2661, 1
    %v3190 = vrot.slane %v2662, 1
    %v3191 = vrot.slane %v2663, 1
    %v3192 = vrot.slane %v2664, 1
    %v3193 = vrot.slane %v2665, 1
    %v3194 = vrot.slane %v2666, 1
    %v3195 = vrot.slane %v2667, 1
    %v3196 = vrot.slane %v2668, 1
    %v3197 = vrot.slane %v2669, 1
    %v3198 = vrot.slane %v2670, 1
    %v3199 = vrot.slane %v2671, 1
    %v3200 = vrot.slane %v2672, 1
    %v3201 = vrot.slane %v2673, 1
    %v3202 = vrot.slane %v2674, 1
    %v3203 = vrot.slane %v2675, 1
    %v3204 = vrot.slane %v2676, 1
    %v3205 = vrot.slane %v2677, 1
    %v3206 = vrot.slane %v2678, 1
    %v3207 = vrot.slane %v2679, 1
    %v3208 = vrot.slane %v2680, 1
    %v3209 = vrot.slane %v2681, 1
    %v3210 = vrot.slane %v2682, 1
    %v3211 = vrot.slane %v2683, 1
    %v3212 = vrot.slane %v2684, 1
    %v3213 = vrot.slane %v2685, 1
    %v3214 = vrot.slane %v2686, 1
    %v3215 = vrot.slane %v2687, 1
    %v3216 = vrot.slane %v2688, 1
    %v3217 = vrot.slane %v2689, 1
    %v3218 = vrot.slane %v2690, 1
    %v3219 = vrot.slane %v2691, 1
    %v3220 = vrot.slane %v2692, 1
    %v3221 = vrot.slane %v2693, 1
    %v3222 = vrot.slane %v2694, 1
    %v3223 = vrot.slane %v2695, 1
    %v3224 = vrot.slane %v2696, 1
    %v3225 = vrot.slane %v2697, 1
    %v3226 = vrot.slane %v2698, 1
    %v3227 = vrot.slane %v2699, 1
    %v3228 = vrot.slane %v2700, 1
    %v3229 = vrot.slane %v2701, 1
    %v3230 = vrot.slane %v2702, 1
    %v3231 = vrot.slane %v2703, 1
    %v3232 = vrot.slane %v2704, 1
    %v3233 = vsel %vm747, %v3231, %v3232
    %v3234 = vsel %vm747, %v3230, %v3231
    %v3235 = vsel %vm747, %v3229, %v3230
    %v3236 = vsel %vm747, %v3228, %v3229
    %v3237 = vsel %vm747, %v3227, %v3228
    %v3238 = vsel %vm747, %v3226, %v3227
    %v3239 = vsel %vm747, %v3225, %v3226
    %v3240 = vsel %vm747, %v3224, %v3225
    %v3241 = vsel %vm747, %v3223, %v3224
    %v3242 = vsel %vm747, %v3222, %v3223
    %v3243 = vsel %vm747, %v3221, %v3222
    %v3244 = vsel %vm747, %v3220, %v3221
    %v3245 = vsel %vm747, %v3219, %v3220
    %v3246 = vsel %vm747, %v3218, %v3219
    %v3247 = vsel %vm747, %v3217, %v3218
    %v3248 = vsel %vm747, %v3216, %v3217
    %v3249 = vsel %vm747, %v3215, %v3216
    %v3250 = vsel %vm747, %v3214, %v3215
    %v3251 = vsel %vm747, %v3213, %v3214
    %v3252 = vsel %vm747, %v3212, %v3213
    %v3253 = vsel %vm747, %v3211, %v3212
    %v3254 = vsel %vm747, %v3210, %v3211
    %v3255 = vsel %vm747, %v3209, %v3210
    %v3256 = vsel %vm747, %v3208, %v3209
    %v3257 = vsel %vm747, %v3207, %v3208
    %v3258 = vsel %vm747, %v3206, %v3207
    %v3259 = vsel %vm747, %v3205, %v3206
    %v3260 = vsel %vm747, %v3204, %v3205
    %v3261 = vsel %vm747, %v3203, %v3204
    %v3262 = vsel %vm747, %v3202, %v3203
    %v3263 = vsel %vm747, %v3201, %v3202
    %v3264 = vsel %vm747, %v3200, %v3201
    %v3265 = vsel %vm747, %v3199, %v3200
    %v3266 = vsel %vm747, %v3198, %v3199
    %v3267 = vsel %vm747, %v3197, %v3198
    %v3268 = vsel %vm747, %v3196, %v3197
    %v3269 = vsel %vm747, %v3195, %v3196
    %v3270 = vsel %vm747, %v3194, %v3195
    %v3271 = vsel %vm747, %v3193, %v3194
    %v3272 = vsel %vm747, %v3192, %v3193
    %v3273 = vsel %vm747, %v3191, %v3192
    %v3274 = vsel %vm747, %v3190, %v3191
    %v3275 = vsel %vm747, %v3189, %v3190
    %v3276 = vsel %vm747, %v3188, %v3189
    %v3277 = vsel %vm747, %v3187, %v3188
    %v3278 = vsel %vm747, %v3186, %v3187
    %v3279 = vsel %vm747, %v3185, %v3186
    %v3280 = vsel %vm747, %v3232, %v3185
    %v3281 = vpack.c.bf16 %v3278, %v3279
    %v3282 = vpack.c.bf16 %v3276, %v3277
    %v3283 = vpack.c.bf16 %v3274, %v3275
    %v3284 = vpack.c.bf16 %v3272, %v3273
    %v3285 = vpack.c.bf16 %v3270, %v3271
    %v3286 = vpack.c.bf16 %v3268, %v3269
    %v3287 = vpack.c.bf16 %v3266, %v3267
    %v3288 = vpack.c.bf16 %v3264, %v3265
    %v3289 = vpack.c.bf16 %v3262, %v3263
    %v3290 = vpack.c.bf16 %v3260, %v3261
    %v3291 = vpack.c.bf16 %v3258, %v3259
    %v3292 = vpack.c.bf16 %v3256, %v3257
    %v3293 = vpack.c.bf16 %v3254, %v3255
    %v3294 = vpack.c.bf16 %v3252, %v3253
    %v3295 = vpack.c.bf16 %v3250, %v3251
    %v3296 = vpack.c.bf16 %v3248, %v3249
    %v3297 = vpack.c.bf16 %v3246, %v3247
    %v3298 = vpack.c.bf16 %v3244, %v3245
    %v3299 = vpack.c.bf16 %v3242, %v3243
    %v3300 = vpack.c.bf16 %v3240, %v3241
    %v3301 = vpack.c.bf16 %v3238, %v3239
    %v3302 = vpack.c.bf16 %v3236, %v3237
    %v3303 = vpack.c.bf16 %v3234, %v3235
    %v3304 = vpack.c.bf16 %v3280, %v3233
    %3305 = vst [vmem:[#allocation3 + $0x20] sm:$0xff] %v3281
    %3306 = vst [vmem:[#allocation3 + $0x58] sm:$0xff] %v3282
    %3307 = vst [vmem:[#allocation3 + $0x90] sm:$0xff] %v3283
    %3308 = vst [vmem:[#allocation3 + $0xc8] sm:$0xff] %v3284
    %3309 = vst [vmem:[#allocation3 + $0x100] sm:$0xff] %v3285
    %3310 = vst [vmem:[#allocation3 + $0x138] sm:$0xff] %v3286
    %3311 = vst [vmem:[#allocation3 + $0x170] sm:$0xff] %v3287
    %3312 = vst [vmem:[#allocation3 + $0x1a8] sm:$0xff] %v3288
    %3313 = vst [vmem:[#allocation3 + $0x1e0] sm:$0xff] %v3289
    %3314 = vst [vmem:[#allocation3 + $0x218] sm:$0xff] %v3290
    %3315 = vst [vmem:[#allocation3 + $0x250] sm:$0xff] %v3291
    %3316 = vst [vmem:[#allocation3 + $0x288] sm:$0xff] %v3292
    %3317 = vst [vmem:[#allocation3 + $0x2c0] sm:$0xff] %v3293
    %3318 = vst [vmem:[#allocation3 + $0x2f8] sm:$0xff] %v3294
    %3319 = vst [vmem:[#allocation3 + $0x330] sm:$0xff] %v3295
    %3320 = vst [vmem:[#allocation3 + $0x368] sm:$0xff] %v3296
    %3321 = vst [vmem:[#allocation3 + $0x3a0] sm:$0xff] %v3297
    %3322 = vst [vmem:[#allocation3 + $0x3d8] sm:$0xff] %v3298
    %3323 = vst [vmem:[#allocation3 + $0x410] sm:$0xff] %v3299
    %3324 = vst [vmem:[#allocation3 + $0x448] sm:$0xff] %v3300
    %3325 = vst [vmem:[#allocation3 + $0x480] sm:$0xff] %v3301
    %3326 = vst [vmem:[#allocation3 + $0x4b8] sm:$0xff] %v3302
    %3327 = vst [vmem:[#allocation3 + $0x4f0] sm:$0xff] %v3303
    %3328 = vst [vmem:[#allocation3 + $0x528] sm:$0xff] %v3304
    %v3329 = vrot.slane %v2657, 2
    %v3330 = vrot.slane %v2658, 2
    %v3331 = vrot.slane %v2659, 2
    %v3332 = vrot.slane %v2660, 2
    %v3333 = vrot.slane %v2661, 2
    %v3334 = vrot.slane %v2662, 2
    %v3335 = vrot.slane %v2663, 2
    %v3336 = vrot.slane %v2664, 2
    %v3337 = vrot.slane %v2665, 2
    %v3338 = vrot.slane %v2666, 2
    %v3339 = vrot.slane %v2667, 2
    %v3340 = vrot.slane %v2668, 2
    %v3341 = vrot.slane %v2669, 2
    %v3342 = vrot.slane %v2670, 2
    %v3343 = vrot.slane %v2671, 2
    %v3344 = vrot.slane %v2672, 2
    %v3345 = vrot.slane %v2673, 2
    %v3346 = vrot.slane %v2674, 2
    %v3347 = vrot.slane %v2675, 2
    %v3348 = vrot.slane %v2676, 2
    %v3349 = vrot.slane %v2677, 2
    %v3350 = vrot.slane %v2678, 2
    %v3351 = vrot.slane %v2679, 2
    %v3352 = vrot.slane %v2680, 2
    %v3353 = vrot.slane %v2681, 2
    %v3354 = vrot.slane %v2682, 2
    %v3355 = vrot.slane %v2683, 2
    %v3356 = vrot.slane %v2684, 2
    %v3357 = vrot.slane %v2685, 2
    %v3358 = vrot.slane %v2686, 2
    %v3359 = vrot.slane %v2687, 2
    %v3360 = vrot.slane %v2688, 2
    %v3361 = vrot.slane %v2689, 2
    %v3362 = vrot.slane %v2690, 2
    %v3363 = vrot.slane %v2691, 2
    %v3364 = vrot.slane %v2692, 2
    %v3365 = vrot.slane %v2693, 2
    %v3366 = vrot.slane %v2694, 2
    %v3367 = vrot.slane %v2695, 2
    %v3368 = vrot.slane %v2696, 2
    %v3369 = vrot.slane %v2697, 2
    %v3370 = vrot.slane %v2698, 2
    %v3371 = vrot.slane %v2699, 2
    %v3372 = vrot.slane %v2700, 2
    %v3373 = vrot.slane %v2701, 2
    %v3374 = vrot.slane %v2702, 2
    %v3375 = vrot.slane %v2703, 2
    %v3376 = vrot.slane %v2704, 2
    %v3377 = vsel %vm892, %v3375, %v3376
    %v3378 = vsel %vm892, %v3374, %v3375
    %v3379 = vsel %vm892, %v3373, %v3374
    %v3380 = vsel %vm892, %v3372, %v3373
    %v3381 = vsel %vm892, %v3371, %v3372
    %v3382 = vsel %vm892, %v3370, %v3371
    %v3383 = vsel %vm892, %v3369, %v3370
    %v3384 = vsel %vm892, %v3368, %v3369
    %v3385 = vsel %vm892, %v3367, %v3368
    %v3386 = vsel %vm892, %v3366, %v3367
    %v3387 = vsel %vm892, %v3365, %v3366
    %v3388 = vsel %vm892, %v3364, %v3365
    %v3389 = vsel %vm892, %v3363, %v3364
    %v3390 = vsel %vm892, %v3362, %v3363
    %v3391 = vsel %vm892, %v3361, %v3362
    %v3392 = vsel %vm892, %v3360, %v3361
    %v3393 = vsel %vm892, %v3359, %v3360
    %v3394 = vsel %vm892, %v3358, %v3359
    %v3395 = vsel %vm892, %v3357, %v3358
    %v3396 = vsel %vm892, %v3356, %v3357
    %v3397 = vsel %vm892, %v3355, %v3356
    %v3398 = vsel %vm892, %v3354, %v3355
    %v3399 = vsel %vm892, %v3353, %v3354
    %v3400 = vsel %vm892, %v3352, %v3353
    %v3401 = vsel %vm892, %v3351, %v3352
    %v3402 = vsel %vm892, %v3350, %v3351
    %v3403 = vsel %vm892, %v3349, %v3350
    %v3404 = vsel %vm892, %v3348, %v3349
    %v3405 = vsel %vm892, %v3347, %v3348
    %v3406 = vsel %vm892, %v3346, %v3347
    %v3407 = vsel %vm892, %v3345, %v3346
    %v3408 = vsel %vm892, %v3344, %v3345
    %v3409 = vsel %vm892, %v3343, %v3344
    %v3410 = vsel %vm892, %v3342, %v3343
    %v3411 = vsel %vm892, %v3341, %v3342
    %v3412 = vsel %vm892, %v3340, %v3341
    %v3413 = vsel %vm892, %v3339, %v3340
    %v3414 = vsel %vm892, %v3338, %v3339
    %v3415 = vsel %vm892, %v3337, %v3338
    %v3416 = vsel %vm892, %v3336, %v3337
    %v3417 = vsel %vm892, %v3335, %v3336
    %v3418 = vsel %vm892, %v3334, %v3335
    %v3419 = vsel %vm892, %v3333, %v3334
    %v3420 = vsel %vm892, %v3332, %v3333
    %v3421 = vsel %vm892, %v3331, %v3332
    %v3422 = vsel %vm892, %v3330, %v3331
    %v3423 = vsel %vm892, %v3329, %v3330
    %v3424 = vsel %vm892, %v3376, %v3329
    %v3425 = vpack.c.bf16 %v3422, %v3423
    %v3426 = vpack.c.bf16 %v3420, %v3421
    %v3427 = vpack.c.bf16 %v3418, %v3419
    %v3428 = vpack.c.bf16 %v3416, %v3417
    %v3429 = vpack.c.bf16 %v3414, %v3415
    %v3430 = vpack.c.bf16 %v3412, %v3413
    %v3431 = vpack.c.bf16 %v3410, %v3411
    %v3432 = vpack.c.bf16 %v3408, %v3409
    %v3433 = vpack.c.bf16 %v3406, %v3407
    %v3434 = vpack.c.bf16 %v3404, %v3405
    %v3435 = vpack.c.bf16 %v3402, %v3403
    %v3436 = vpack.c.bf16 %v3400, %v3401
    %v3437 = vpack.c.bf16 %v3398, %v3399
    %v3438 = vpack.c.bf16 %v3396, %v3397
    %v3439 = vpack.c.bf16 %v3394, %v3395
    %v3440 = vpack.c.bf16 %v3392, %v3393
    %v3441 = vpack.c.bf16 %v3390, %v3391
    %v3442 = vpack.c.bf16 %v3388, %v3389
    %v3443 = vpack.c.bf16 %v3386, %v3387
    %v3444 = vpack.c.bf16 %v3384, %v3385
    %v3445 = vpack.c.bf16 %v3382, %v3383
    %v3446 = vpack.c.bf16 %v3380, %v3381
    %v3447 = vpack.c.bf16 %v3378, %v3379
    %v3448 = vpack.c.bf16 %v3424, %v3377
    %3449 = vst [vmem:[#allocation3 + $0x28] sm:$0xff] %v3425
    %3450 = vst [vmem:[#allocation3 + $0x60] sm:$0xff] %v3426
    %3451 = vst [vmem:[#allocation3 + $0x98] sm:$0xff] %v3427
    %3452 = vst [vmem:[#allocation3 + $0xd0] sm:$0xff] %v3428
    %3453 = vst [vmem:[#allocation3 + $0x108] sm:$0xff] %v3429
    %3454 = vst [vmem:[#allocation3 + $0x140] sm:$0xff] %v3430
    %3455 = vst [vmem:[#allocation3 + $0x178] sm:$0xff] %v3431
    %3456 = vst [vmem:[#allocation3 + $0x1b0] sm:$0xff] %v3432
    %3457 = vst [vmem:[#allocation3 + $0x1e8] sm:$0xff] %v3433
    %3458 = vst [vmem:[#allocation3 + $0x220] sm:$0xff] %v3434
    %3459 = vst [vmem:[#allocation3 + $0x258] sm:$0xff] %v3435
    %3460 = vst [vmem:[#allocation3 + $0x290] sm:$0xff] %v3436
    %3461 = vst [vmem:[#allocation3 + $0x2c8] sm:$0xff] %v3437
    %3462 = vst [vmem:[#allocation3 + $0x300] sm:$0xff] %v3438
    %3463 = vst [vmem:[#allocation3 + $0x338] sm:$0xff] %v3439
    %3464 = vst [vmem:[#allocation3 + $0x370] sm:$0xff] %v3440
    %3465 = vst [vmem:[#allocation3 + $0x3a8] sm:$0xff] %v3441
    %3466 = vst [vmem:[#allocation3 + $0x3e0] sm:$0xff] %v3442
    %3467 = vst [vmem:[#allocation3 + $0x418] sm:$0xff] %v3443
    %3468 = vst [vmem:[#allocation3 + $0x450] sm:$0xff] %v3444
    %3469 = vst [vmem:[#allocation3 + $0x488] sm:$0xff] %v3445
    %3470 = vst [vmem:[#allocation3 + $0x4c0] sm:$0xff] %v3446
    %3471 = vst [vmem:[#allocation3 + $0x4f8] sm:$0xff] %v3447
    %3472 = vst [vmem:[#allocation3 + $0x530] sm:$0xff] %v3448
    %v3473 = vrot.slane %v2657, 3
    %v3474 = vrot.slane %v2658, 3
    %v3475 = vrot.slane %v2659, 3
    %v3476 = vrot.slane %v2660, 3
    %v3477 = vrot.slane %v2661, 3
    %v3478 = vrot.slane %v2662, 3
    %v3479 = vrot.slane %v2663, 3
    %v3480 = vrot.slane %v2664, 3
    %v3481 = vrot.slane %v2665, 3
    %v3482 = vrot.slane %v2666, 3
    %v3483 = vrot.slane %v2667, 3
    %v3484 = vrot.slane %v2668, 3
    %v3485 = vrot.slane %v2669, 3
    %v3486 = vrot.slane %v2670, 3
    %v3487 = vrot.slane %v2671, 3
    %v3488 = vrot.slane %v2672, 3
    %v3489 = vrot.slane %v2673, 3
    %v3490 = vrot.slane %v2674, 3
    %v3491 = vrot.slane %v2675, 3
    %v3492 = vrot.slane %v2676, 3
    %v3493 = vrot.slane %v2677, 3
    %v3494 = vrot.slane %v2678, 3
    %v3495 = vrot.slane %v2679, 3
    %v3496 = vrot.slane %v2680, 3
    %v3497 = vrot.slane %v2681, 3
    %v3498 = vrot.slane %v2682, 3
    %v3499 = vrot.slane %v2683, 3
    %v3500 = vrot.slane %v2684, 3
    %v3501 = vrot.slane %v2685, 3
    %v3502 = vrot.slane %v2686, 3
    %v3503 = vrot.slane %v2687, 3
    %v3504 = vrot.slane %v2688, 3
    %v3505 = vrot.slane %v2689, 3
    %v3506 = vrot.slane %v2690, 3
    %v3507 = vrot.slane %v2691, 3
    %v3508 = vrot.slane %v2692, 3
    %v3509 = vrot.slane %v2693, 3
    %v3510 = vrot.slane %v2694, 3
    %v3511 = vrot.slane %v2695, 3
    %v3512 = vrot.slane %v2696, 3
    %v3513 = vrot.slane %v2697, 3
    %v3514 = vrot.slane %v2698, 3
    %v3515 = vrot.slane %v2699, 3
    %v3516 = vrot.slane %v2700, 3
    %v3517 = vrot.slane %v2701, 3
    %v3518 = vrot.slane %v2702, 3
    %v3519 = vrot.slane %v2703, 3
    %v3520 = vrot.slane %v2704, 3
    %v3521 = vsel %vm1037, %v3519, %v3520
    %v3522 = vsel %vm1037, %v3518, %v3519
    %v3523 = vsel %vm1037, %v3517, %v3518
    %v3524 = vsel %vm1037, %v3516, %v3517
    %v3525 = vsel %vm1037, %v3515, %v3516
    %v3526 = vsel %vm1037, %v3514, %v3515
    %v3527 = vsel %vm1037, %v3513, %v3514
    %v3528 = vsel %vm1037, %v3512, %v3513
    %v3529 = vsel %vm1037, %v3511, %v3512
    %v3530 = vsel %vm1037, %v3510, %v3511
    %v3531 = vsel %vm1037, %v3509, %v3510
    %v3532 = vsel %vm1037, %v3508, %v3509
    %v3533 = vsel %vm1037, %v3507, %v3508
    %v3534 = vsel %vm1037, %v3506, %v3507
    %v3535 = vsel %vm1037, %v3505, %v3506
    %v3536 = vsel %vm1037, %v3504, %v3505
    %v3537 = vsel %vm1037, %v3503, %v3504
    %v3538 = vsel %vm1037, %v3502, %v3503
    %v3539 = vsel %vm1037, %v3501, %v3502
    %v3540 = vsel %vm1037, %v3500, %v3501
    %v3541 = vsel %vm1037, %v3499, %v3500
    %v3542 = vsel %vm1037, %v3498, %v3499
    %v3543 = vsel %vm1037, %v3497, %v3498
    %v3544 = vsel %vm1037, %v3496, %v3497
    %v3545 = vsel %vm1037, %v3495, %v3496
    %v3546 = vsel %vm1037, %v3494, %v3495
    %v3547 = vsel %vm1037, %v3493, %v3494
    %v3548 = vsel %vm1037, %v3492, %v3493
    %v3549 = vsel %vm1037, %v3491, %v3492
    %v3550 = vsel %vm1037, %v3490, %v3491
    %v3551 = vsel %vm1037, %v3489, %v3490
    %v3552 = vsel %vm1037, %v3488, %v3489
    %v3553 = vsel %vm1037, %v3487, %v3488
    %v3554 = vsel %vm1037, %v3486, %v3487
    %v3555 = vsel %vm1037, %v3485, %v3486
    %v3556 = vsel %vm1037, %v3484, %v3485
    %v3557 = vsel %vm1037, %v3483, %v3484
    %v3558 = vsel %vm1037, %v3482, %v3483
    %v3559 = vsel %vm1037, %v3481, %v3482
    %v3560 = vsel %vm1037, %v3480, %v3481
    %v3561 = vsel %vm1037, %v3479, %v3480
    %v3562 = vsel %vm1037, %v3478, %v3479
    %v3563 = vsel %vm1037, %v3477, %v3478
    %v3564 = vsel %vm1037, %v3476, %v3477
    %v3565 = vsel %vm1037, %v3475, %v3476
    %v3566 = vsel %vm1037, %v3474, %v3475
    %v3567 = vsel %vm1037, %v3473, %v3474
    %v3568 = vsel %vm1037, %v3520, %v3473
    %v3569 = vpack.c.bf16 %v3566, %v3567
    %v3570 = vpack.c.bf16 %v3564, %v3565
    %v3571 = vpack.c.bf16 %v3562, %v3563
    %v3572 = vpack.c.bf16 %v3560, %v3561
    %v3573 = vpack.c.bf16 %v3558, %v3559
    %v3574 = vpack.c.bf16 %v3556, %v3557
    %v3575 = vpack.c.bf16 %v3554, %v3555
    %v3576 = vpack.c.bf16 %v3552, %v3553
    %v3577 = vpack.c.bf16 %v3550, %v3551
    %v3578 = vpack.c.bf16 %v3548, %v3549
    %v3579 = vpack.c.bf16 %v3546, %v3547
    %v3580 = vpack.c.bf16 %v3544, %v3545
    %v3581 = vpack.c.bf16 %v3542, %v3543
    %v3582 = vpack.c.bf16 %v3540, %v3541
    %v3583 = vpack.c.bf16 %v3538, %v3539
    %v3584 = vpack.c.bf16 %v3536, %v3537
    %v3585 = vpack.c.bf16 %v3534, %v3535
    %v3586 = vpack.c.bf16 %v3532, %v3533
    %v3587 = vpack.c.bf16 %v3530, %v3531
    %v3588 = vpack.c.bf16 %v3528, %v3529
    %v3589 = vpack.c.bf16 %v3526, %v3527
    %v3590 = vpack.c.bf16 %v3524, %v3525
    %v3591 = vpack.c.bf16 %v3522, %v3523
    %v3592 = vpack.c.bf16 %v3568, %v3521
    %3593 = vst [vmem:[#allocation3 + $0x30] sm:$0xff] %v3569
    %3594 = vst [vmem:[#allocation3 + $0x68] sm:$0xff] %v3570
    %3595 = vst [vmem:[#allocation3 + $0xa0] sm:$0xff] %v3571
    %3596 = vst [vmem:[#allocation3 + $0xd8] sm:$0xff] %v3572
    %3597 = vst [vmem:[#allocation3 + $0x110] sm:$0xff] %v3573
    %3598 = vst [vmem:[#allocation3 + $0x148] sm:$0xff] %v3574
    %3599 = vst [vmem:[#allocation3 + $0x180] sm:$0xff] %v3575
    %3600 = vst [vmem:[#allocation3 + $0x1b8] sm:$0xff] %v3576
    %3601 = vst [vmem:[#allocation3 + $0x1f0] sm:$0xff] %v3577
    %3602 = vst [vmem:[#allocation3 + $0x228] sm:$0xff] %v3578
    %3603 = vst [vmem:[#allocation3 + $0x260] sm:$0xff] %v3579
    %3604 = vst [vmem:[#allocation3 + $0x298] sm:$0xff] %v3580
    %3605 = vst [vmem:[#allocation3 + $0x2d0] sm:$0xff] %v3581
    %3606 = vst [vmem:[#allocation3 + $0x308] sm:$0xff] %v3582
    %3607 = vst [vmem:[#allocation3 + $0x340] sm:$0xff] %v3583
    %3608 = vst [vmem:[#allocation3 + $0x378] sm:$0xff] %v3584
    %3609 = vst [vmem:[#allocation3 + $0x3b0] sm:$0xff] %v3585
    %3610 = vst [vmem:[#allocation3 + $0x3e8] sm:$0xff] %v3586
    %3611 = vst [vmem:[#allocation3 + $0x420] sm:$0xff] %v3587
    %3612 = vst [vmem:[#allocation3 + $0x458] sm:$0xff] %v3588
    %3613 = vst [vmem:[#allocation3 + $0x490] sm:$0xff] %v3589
    %3614 = vst [vmem:[#allocation3 + $0x4c8] sm:$0xff] %v3590
    %3615 = vst [vmem:[#allocation3 + $0x500] sm:$0xff] %v3591
    %3616 = vst [vmem:[#allocation3 + $0x538] sm:$0xff] %v3592
    %v3617 = vld [vmem:[#allocation3] sm:$0xff]
    %v3618 = vld [vmem:[#allocation3 + $0x8] sm:$0xff]
    %v3619 = vld [vmem:[#allocation3 + $0x10] sm:$0xff]
    %v3620 = vld [vmem:[#allocation3 + $0x18] sm:$0xff]
    %v3621 = vld [vmem:[#allocation3 + $0x20] sm:$0xff]
    %v3622 = vld [vmem:[#allocation3 + $0x28] sm:$0xff]
    %v3623 = vld [vmem:[#allocation3 + $0x30] sm:$0xff]
    %v3624 = vld [vmem:[#allocation3 + $0x38] sm:$0xff]
    %v3625 = vld [vmem:[#allocation3 + $0x40] sm:$0xff]
    %v3626 = vld [vmem:[#allocation3 + $0x48] sm:$0xff]
    %v3627 = vld [vmem:[#allocation3 + $0x50] sm:$0xff]
    %v3628 = vld [vmem:[#allocation3 + $0x58] sm:$0xff]
    %v3629 = vld [vmem:[#allocation3 + $0x60] sm:$0xff]
    %v3630 = vld [vmem:[#allocation3 + $0x68] sm:$0xff]
    %v3631 = vld [vmem:[#allocation3 + $0x70] sm:$0xff]
    %v3632 = vld [vmem:[#allocation3 + $0x78] sm:$0xff]
    %v3633 = vld [vmem:[#allocation3 + $0x80] sm:$0xff]
    %v3634 = vld [vmem:[#allocation3 + $0x88] sm:$0xff]
    %v3635 = vld [vmem:[#allocation3 + $0x90] sm:$0xff]
    %v3636 = vld [vmem:[#allocation3 + $0x98] sm:$0xff]
    %v3637 = vld [vmem:[#allocation3 + $0xa0] sm:$0xff]
    %v3638 = vld [vmem:[#allocation3 + $0xa8] sm:$0xff]
    %v3639 = vld [vmem:[#allocation3 + $0xb0] sm:$0xff]
    %v3640 = vld [vmem:[#allocation3 + $0xb8] sm:$0xff]
    %v3641 = vld [vmem:[#allocation3 + $0xc0] sm:$0xff]
    %v3642 = vld [vmem:[#allocation3 + $0xc8] sm:$0xff]
    %v3643 = vld [vmem:[#allocation3 + $0xd0] sm:$0xff]
    %v3644 = vld [vmem:[#allocation3 + $0xd8] sm:$0xff]
    %v3645 = vld [vmem:[#allocation3 + $0xe0] sm:$0xff]
    %v3646 = vld [vmem:[#allocation3 + $0xe8] sm:$0xff]
    %v3647 = vld [vmem:[#allocation3 + $0xf0] sm:$0xff]
    %v3648 = vld [vmem:[#allocation3 + $0xf8] sm:$0xff]
    %v3649 = vld [vmem:[#allocation3 + $0x100] sm:$0xff]
    %v3650 = vld [vmem:[#allocation3 + $0x108] sm:$0xff]
    %v3651 = vld [vmem:[#allocation3 + $0x110] sm:$0xff]
    %v3652 = vld [vmem:[#allocation3 + $0x118] sm:$0xff]
    %v3653 = vld [vmem:[#allocation3 + $0x120] sm:$0xff]
    %v3654 = vld [vmem:[#allocation3 + $0x128] sm:$0xff]
    %v3655 = vld [vmem:[#allocation3 + $0x130] sm:$0xff]
    %v3656 = vld [vmem:[#allocation3 + $0x138] sm:$0xff]
    %v3657 = vld [vmem:[#allocation3 + $0x140] sm:$0xff]
    %v3658 = vld [vmem:[#allocation3 + $0x148] sm:$0xff]
    %v3659 = vld [vmem:[#allocation3 + $0x150] sm:$0xff]
    %v3660 = vld [vmem:[#allocation3 + $0x158] sm:$0xff]
    %v3661 = vld [vmem:[#allocation3 + $0x160] sm:$0xff]
    %v3662 = vld [vmem:[#allocation3 + $0x168] sm:$0xff]
    %v3663 = vld [vmem:[#allocation3 + $0x170] sm:$0xff]
    %v3664 = vld [vmem:[#allocation3 + $0x178] sm:$0xff]
    %v3665 = vld [vmem:[#allocation3 + $0x180] sm:$0xff]
    %v3666 = vld [vmem:[#allocation3 + $0x188] sm:$0xff]
    %v3667 = vld [vmem:[#allocation3 + $0x190] sm:$0xff]
    %v3668 = vld [vmem:[#allocation3 + $0x198] sm:$0xff]
    %v3669 = vld [vmem:[#allocation3 + $0x1a0] sm:$0xff]
    %v3670 = vld [vmem:[#allocation3 + $0x1a8] sm:$0xff]
    %v3671 = vld [vmem:[#allocation3 + $0x1b0] sm:$0xff]
    %v3672 = vld [vmem:[#allocation3 + $0x1b8] sm:$0xff]
    %v3673 = vld [vmem:[#allocation3 + $0x1c0] sm:$0xff]
    %v3674 = vld [vmem:[#allocation3 + $0x1c8] sm:$0xff]
    %v3675 = vld [vmem:[#allocation3 + $0x1d0] sm:$0xff]
    %v3676 = vld [vmem:[#allocation3 + $0x1d8] sm:$0xff]
    %v3677 = vld [vmem:[#allocation3 + $0x1e0] sm:$0xff]
    %v3678 = vld [vmem:[#allocation3 + $0x1e8] sm:$0xff]
    %v3679 = vld [vmem:[#allocation3 + $0x1f0] sm:$0xff]
    %v3680 = vld [vmem:[#allocation3 + $0x1f8] sm:$0xff]
    %v3681 = vld [vmem:[#allocation3 + $0x200] sm:$0xff]
    %v3682 = vld [vmem:[#allocation3 + $0x208] sm:$0xff]
    %v3683 = vld [vmem:[#allocation3 + $0x210] sm:$0xff]
    %v3684 = vld [vmem:[#allocation3 + $0x218] sm:$0xff]
    %v3685 = vld [vmem:[#allocation3 + $0x220] sm:$0xff]
    %v3686 = vld [vmem:[#allocation3 + $0x228] sm:$0xff]
    %v3687 = vld [vmem:[#allocation3 + $0x230] sm:$0xff]
    %v3688 = vld [vmem:[#allocation3 + $0x238] sm:$0xff]
    %v3689 = vld [vmem:[#allocation3 + $0x240] sm:$0xff]
    %v3690 = vld [vmem:[#allocation3 + $0x248] sm:$0xff]
    %v3691 = vld [vmem:[#allocation3 + $0x250] sm:$0xff]
    %v3692 = vld [vmem:[#allocation3 + $0x258] sm:$0xff]
    %v3693 = vld [vmem:[#allocation3 + $0x260] sm:$0xff]
    %v3694 = vld [vmem:[#allocation3 + $0x268] sm:$0xff]
    %v3695 = vld [vmem:[#allocation3 + $0x270] sm:$0xff]
    %v3696 = vld [vmem:[#allocation3 + $0x278] sm:$0xff]
    %v3697 = vld [vmem:[#allocation3 + $0x280] sm:$0xff]
    %v3698 = vld [vmem:[#allocation3 + $0x288] sm:$0xff]
    %v3699 = vld [vmem:[#allocation3 + $0x290] sm:$0xff]
    %v3700 = vld [vmem:[#allocation3 + $0x298] sm:$0xff]
    %v3701 = vld [vmem:[#allocation3 + $0x2a0] sm:$0xff]
    %v3702 = vld [vmem:[#allocation3 + $0x2a8] sm:$0xff]
    %v3703 = vld [vmem:[#allocation3 + $0x2b0] sm:$0xff]
    %v3704 = vld [vmem:[#allocation3 + $0x2b8] sm:$0xff]
    %v3705 = vld [vmem:[#allocation3 + $0x2c0] sm:$0xff]
    %v3706 = vld [vmem:[#allocation3 + $0x2c8] sm:$0xff]
    %v3707 = vld [vmem:[#allocation3 + $0x2d0] sm:$0xff]
    %v3708 = vld [vmem:[#allocation3 + $0x2d8] sm:$0xff]
    %v3709 = vld [vmem:[#allocation3 + $0x2e0] sm:$0xff]
    %v3710 = vld [vmem:[#allocation3 + $0x2e8] sm:$0xff]
    %v3711 = vld [vmem:[#allocation3 + $0x2f0] sm:$0xff]
    %v3712 = vld [vmem:[#allocation3 + $0x2f8] sm:$0xff]
    %v3713 = vld [vmem:[#allocation3 + $0x300] sm:$0xff]
    %v3714 = vld [vmem:[#allocation3 + $0x308] sm:$0xff]
    %v3715 = vld [vmem:[#allocation3 + $0x310] sm:$0xff]
    %v3716 = vld [vmem:[#allocation3 + $0x318] sm:$0xff]
    %v3717 = vld [vmem:[#allocation3 + $0x320] sm:$0xff]
    %v3718 = vld [vmem:[#allocation3 + $0x328] sm:$0xff]
    %v3719 = vld [vmem:[#allocation3 + $0x330] sm:$0xff]
    %v3720 = vld [vmem:[#allocation3 + $0x338] sm:$0xff]
    %v3721 = vld [vmem:[#allocation3 + $0x340] sm:$0xff]
    %v3722 = vld [vmem:[#allocation3 + $0x348] sm:$0xff]
    %v3723 = vld [vmem:[#allocation3 + $0x350] sm:$0xff]
    %v3724 = vld [vmem:[#allocation3 + $0x358] sm:$0xff]
    %v3725 = vld [vmem:[#allocation3 + $0x360] sm:$0xff]
    %v3726 = vld [vmem:[#allocation3 + $0x368] sm:$0xff]
    %v3727 = vld [vmem:[#allocation3 + $0x370] sm:$0xff]
    %v3728 = vld [vmem:[#allocation3 + $0x378] sm:$0xff]
    %v3729 = vld [vmem:[#allocation3 + $0x380] sm:$0xff]
    %v3730 = vld [vmem:[#allocation3 + $0x388] sm:$0xff]
    %v3731 = vld [vmem:[#allocation3 + $0x390] sm:$0xff]
    %v3732 = vld [vmem:[#allocation3 + $0x398] sm:$0xff]
    %v3733 = vld [vmem:[#allocation3 + $0x3a0] sm:$0xff]
    %v3734 = vld [vmem:[#allocation3 + $0x3a8] sm:$0xff]
    %v3735 = vld [vmem:[#allocation3 + $0x3b0] sm:$0xff]
    %v3736 = vld [vmem:[#allocation3 + $0x3b8] sm:$0xff]
    %v3737 = vld [vmem:[#allocation3 + $0x3c0] sm:$0xff]
    %v3738 = vld [vmem:[#allocation3 + $0x3c8] sm:$0xff]
    %v3739 = vld [vmem:[#allocation3 + $0x3d0] sm:$0xff]
    %v3740 = vld [vmem:[#allocation3 + $0x3d8] sm:$0xff]
    %v3741 = vld [vmem:[#allocation3 + $0x3e0] sm:$0xff]
    %v3742 = vld [vmem:[#allocation3 + $0x3e8] sm:$0xff]
    %v3743 = vld [vmem:[#allocation3 + $0x3f0] sm:$0xff]
    %v3744 = vld [vmem:[#allocation3 + $0x3f8] sm:$0xff]
    %v3745 = vld [vmem:[#allocation3 + $0x400] sm:$0xff]
    %v3746 = vld [vmem:[#allocation3 + $0x408] sm:$0xff]
    %v3747 = vld [vmem:[#allocation3 + $0x410] sm:$0xff]
    %v3748 = vld [vmem:[#allocation3 + $0x418] sm:$0xff]
    %v3749 = vld [vmem:[#allocation3 + $0x420] sm:$0xff]
    %v3750 = vld [vmem:[#allocation3 + $0x428] sm:$0xff]
    %v3751 = vld [vmem:[#allocation3 + $0x430] sm:$0xff]
    %v3752 = vld [vmem:[#allocation3 + $0x438] sm:$0xff]
    %v3753 = vld [vmem:[#allocation3 + $0x440] sm:$0xff]
    %v3754 = vld [vmem:[#allocation3 + $0x448] sm:$0xff]
    %v3755 = vld [vmem:[#allocation3 + $0x450] sm:$0xff]
    %v3756 = vld [vmem:[#allocation3 + $0x458] sm:$0xff]
    %v3757 = vld [vmem:[#allocation3 + $0x460] sm:$0xff]
    %v3758 = vld [vmem:[#allocation3 + $0x468] sm:$0xff]
    %v3759 = vld [vmem:[#allocation3 + $0x470] sm:$0xff]
    %v3760 = vld [vmem:[#allocation3 + $0x478] sm:$0xff]
    %v3761 = vld [vmem:[#allocation3 + $0x480] sm:$0xff]
    %v3762 = vld [vmem:[#allocation3 + $0x488] sm:$0xff]
    %v3763 = vld [vmem:[#allocation3 + $0x490] sm:$0xff]
    %v3764 = vld [vmem:[#allocation3 + $0x498] sm:$0xff]
    %v3765 = vld [vmem:[#allocation3 + $0x4a0] sm:$0xff]
    %v3766 = vld [vmem:[#allocation3 + $0x4a8] sm:$0xff]
    %v3767 = vld [vmem:[#allocation3 + $0x4b0] sm:$0xff]
    %v3768 = vld [vmem:[#allocation3 + $0x4b8] sm:$0xff]
    %v3769 = vld [vmem:[#allocation3 + $0x4c0] sm:$0xff]
    %v3770 = vld [vmem:[#allocation3 + $0x4c8] sm:$0xff]
    %v3771 = vld [vmem:[#allocation3 + $0x4d0] sm:$0xff]
    %v3772 = vld [vmem:[#allocation3 + $0x4d8] sm:$0xff]
    %v3773 = vld [vmem:[#allocation3 + $0x4e0] sm:$0xff]
    %v3774 = vld [vmem:[#allocation3 + $0x4e8] sm:$0xff]
    %v3775 = vld [vmem:[#allocation3 + $0x4f0] sm:$0xff]
    %v3776 = vld [vmem:[#allocation3 + $0x4f8] sm:$0xff]
    %v3777 = vld [vmem:[#allocation3 + $0x500] sm:$0xff]
    %v3778 = vld [vmem:[#allocation3 + $0x508] sm:$0xff]
    %v3779 = vld [vmem:[#allocation3 + $0x510] sm:$0xff]
    %v3780 = vld [vmem:[#allocation3 + $0x518] sm:$0xff]
    %v3781 = vld [vmem:[#allocation3 + $0x520] sm:$0xff]
    %v3782 = vld [vmem:[#allocation3 + $0x528] sm:$0xff]
    %v3783 = vld [vmem:[#allocation3 + $0x530] sm:$0xff]
    %v3784 = vld [vmem:[#allocation3 + $0x538] sm:$0xff]
    %v3785 = vld [vmem:[#allocation10] sm:$0xf]
    %v3786 = vld [vmem:[#allocation10 + $0x4] sm:$0xf]
    %v3787 = vld [vmem:[#allocation10 + $0x8] sm:$0xf]
    %v3788 = vld [vmem:[#allocation10 + $0xc] sm:$0xf]
    %v3789 = vld [vmem:[#allocation10 + $0x10] sm:$0xf]
    %v3790 = vld [vmem:[#allocation10 + $0x14] sm:$0xf]
    %v3791 = vld [vmem:[#allocation10 + $0x18] sm:$0xf]
    %v3792 = vld [vmem:[#allocation10 + $0x1c] sm:$0xf]
    %v3793 = vld [vmem:[#allocation10 + $0x20] sm:$0xf]
    %v3794 = vld [vmem:[#allocation10 + $0x24] sm:$0xf]
    %v3795 = vld [vmem:[#allocation10 + $0x28] sm:$0xf]
    %v3796 = vld [vmem:[#allocation10 + $0x2c] sm:$0xf]
    %v3797 = vld [vmem:[#allocation10 + $0x30] sm:$0xf]
    %v3798 = vld [vmem:[#allocation10 + $0x34] sm:$0xf]
    %v3799 = vld [vmem:[#allocation10 + $0x38] sm:$0xf]
    %v3800 = vld [vmem:[#allocation10 + $0x3c] sm:$0xf]
    %v3801 = vld [vmem:[#allocation10 + $0x40] sm:$0xf]
    %v3802 = vld [vmem:[#allocation10 + $0x44] sm:$0xf]
    %v3803 = vld [vmem:[#allocation10 + $0x48] sm:$0xf]
    %v3804 = vld [vmem:[#allocation10 + $0x4c] sm:$0xf]
    %v3805 = vld [vmem:[#allocation10 + $0x50] sm:$0xf]
    %v3806 = vld [vmem:[#allocation10 + $0x54] sm:$0xf]
    %v3807 = vld [vmem:[#allocation10 + $0x58] sm:$0xf]
    %v3808 = vld [vmem:[#allocation10 + $0x5c] sm:$0xf]
    %v3809 = vld [vmem:[#allocation10 + $0x60] sm:$0xf]
    %v3810 = vld [vmem:[#allocation10 + $0x64] sm:$0xf]
    %v3811 = vld [vmem:[#allocation10 + $0x68] sm:$0xf]
    %v3812 = vld [vmem:[#allocation10 + $0x6c] sm:$0xf]
    %v3813 = vld [vmem:[#allocation10 + $0x70] sm:$0xf]
    %v3814 = vld [vmem:[#allocation10 + $0x74] sm:$0xf]
    %v3815 = vld [vmem:[#allocation10 + $0x78] sm:$0xf]
    %v3816 = vld [vmem:[#allocation10 + $0x7c] sm:$0xf]
    %v3817 = vld [vmem:[#allocation10 + $0x80] sm:$0xf]
    %v3818 = vld [vmem:[#allocation10 + $0x84] sm:$0xf]
    %v3819 = vld [vmem:[#allocation10 + $0x88] sm:$0xf]
    %v3820 = vld [vmem:[#allocation10 + $0x8c] sm:$0xf]
    %v3821 = vld [vmem:[#allocation10 + $0x90] sm:$0xf]
    %v3822 = vld [vmem:[#allocation10 + $0x94] sm:$0xf]
    %v3823 = vld [vmem:[#allocation10 + $0x98] sm:$0xf]
    %v3824 = vld [vmem:[#allocation10 + $0x9c] sm:$0xf]
    %v3825 = vld [vmem:[#allocation10 + $0xa0] sm:$0xf]
    %v3826 = vld [vmem:[#allocation10 + $0xa4] sm:$0xf]
    %v3827 = vld [vmem:[#allocation10 + $0xa8] sm:$0xf]
    %v3828 = vld [vmem:[#allocation10 + $0xac] sm:$0xf]
    %v3829 = vld [vmem:[#allocation10 + $0xb0] sm:$0xf]
    %v3830 = vld [vmem:[#allocation10 + $0xb4] sm:$0xf]
    %v3831 = vld [vmem:[#allocation10 + $0xb8] sm:$0xf]
    %v3832 = vld [vmem:[#allocation10 + $0xbc] sm:$0xf]
    %v3833 = vld [vmem:[#allocation10 + $0xc0] sm:$0xf]
    %v3834 = vld [vmem:[#allocation10 + $0xc4] sm:$0xf]
    %v3835 = vld [vmem:[#allocation10 + $0xc8] sm:$0xf]
    %v3836 = vld [vmem:[#allocation10 + $0xcc] sm:$0xf]
    %v3837 = vld [vmem:[#allocation10 + $0xd0] sm:$0xf]
    %v3838 = vld [vmem:[#allocation10 + $0xd4] sm:$0xf]
    %v3839 = vld [vmem:[#allocation10 + $0xd8] sm:$0xf]
    %v3840 = vld [vmem:[#allocation10 + $0xdc] sm:$0xf]
    %v3841 = vld [vmem:[#allocation10 + $0xe0] sm:$0xf]
    %v3842 = vld [vmem:[#allocation10 + $0xe4] sm:$0xf]
    %v3843 = vld [vmem:[#allocation10 + $0xe8] sm:$0xf]
    %v3844 = vld [vmem:[#allocation10 + $0xec] sm:$0xf]
    %v3845 = vld [vmem:[#allocation10 + $0xf0] sm:$0xf]
    %v3846 = vld [vmem:[#allocation10 + $0xf4] sm:$0xf]
    %v3847 = vld [vmem:[#allocation10 + $0xf8] sm:$0xf]
    %v3848 = vld [vmem:[#allocation10 + $0xfc] sm:$0xf]
    %v3849 = vld [vmem:[#allocation10 + $0x100] sm:$0xf]
    %v3850 = vld [vmem:[#allocation10 + $0x104] sm:$0xf]
    %v3851 = vld [vmem:[#allocation10 + $0x108] sm:$0xf]
    %v3852 = vld [vmem:[#allocation10 + $0x10c] sm:$0xf]
    %v3853 = vld [vmem:[#allocation10 + $0x110] sm:$0xf]
    %v3854 = vld [vmem:[#allocation10 + $0x114] sm:$0xf]
    %v3855 = vld [vmem:[#allocation10 + $0x118] sm:$0xf]
    %v3856 = vld [vmem:[#allocation10 + $0x11c] sm:$0xf]
    %v3857 = vld [vmem:[#allocation10 + $0x120] sm:$0xf]
    %v3858 = vld [vmem:[#allocation10 + $0x124] sm:$0xf]
    %v3859 = vld [vmem:[#allocation10 + $0x128] sm:$0xf]
    %v3860 = vld [vmem:[#allocation10 + $0x12c] sm:$0xf]
    %v3861 = vld [vmem:[#allocation10 + $0x130] sm:$0xf]
    %v3862 = vld [vmem:[#allocation10 + $0x134] sm:$0xf]
    %v3863 = vld [vmem:[#allocation10 + $0x138] sm:$0xf]
    %v3864 = vld [vmem:[#allocation10 + $0x13c] sm:$0xf]
    %v3865 = vld [vmem:[#allocation10 + $0x140] sm:$0xf]
    %v3866 = vld [vmem:[#allocation10 + $0x144] sm:$0xf]
    %v3867 = vld [vmem:[#allocation10 + $0x148] sm:$0xf]
    %v3868 = vld [vmem:[#allocation10 + $0x14c] sm:$0xf]
    %v3869 = vld [vmem:[#allocation10 + $0x150] sm:$0xf]
    %v3870 = vld [vmem:[#allocation10 + $0x154] sm:$0xf]
    %v3871 = vld [vmem:[#allocation10 + $0x158] sm:$0xf]
    %v3872 = vld [vmem:[#allocation10 + $0x15c] sm:$0xf]
    %v3873 = vld [vmem:[#allocation10 + $0x160] sm:$0xf]
    %v3874 = vld [vmem:[#allocation10 + $0x164] sm:$0xf]
    %v3875 = vld [vmem:[#allocation10 + $0x168] sm:$0xf]
    %v3876 = vld [vmem:[#allocation10 + $0x16c] sm:$0xf]
    %v3877 = vld [vmem:[#allocation10 + $0x170] sm:$0xf]
    %v3878 = vld [vmem:[#allocation10 + $0x174] sm:$0xf]
    %v3879 = vld [vmem:[#allocation10 + $0x178] sm:$0xf]
    %v3880 = vld [vmem:[#allocation10 + $0x17c] sm:$0xf]
    %v3881 = vld [vmem:[#allocation10 + $0x180] sm:$0xf]
    %v3882 = vld [vmem:[#allocation10 + $0x184] sm:$0xf]
    %v3883 = vld [vmem:[#allocation10 + $0x188] sm:$0xf]
    %v3884 = vld [vmem:[#allocation10 + $0x18c] sm:$0xf]
    %v3885 = vld [vmem:[#allocation10 + $0x190] sm:$0xf]
    %v3886 = vld [vmem:[#allocation10 + $0x194] sm:$0xf]
    %v3887 = vld [vmem:[#allocation10 + $0x198] sm:$0xf]
    %v3888 = vld [vmem:[#allocation10 + $0x19c] sm:$0xf]
    %v3889 = vld [vmem:[#allocation10 + $0x1a0] sm:$0xf]
    %v3890 = vld [vmem:[#allocation10 + $0x1a4] sm:$0xf]
    %v3891 = vld [vmem:[#allocation10 + $0x1a8] sm:$0xf]
    %v3892 = vld [vmem:[#allocation10 + $0x1ac] sm:$0xf]
    %v3893 = vld [vmem:[#allocation10 + $0x1b0] sm:$0xf]
    %v3894 = vld [vmem:[#allocation10 + $0x1b4] sm:$0xf]
    %v3895 = vld [vmem:[#allocation10 + $0x1b8] sm:$0xf]
    %v3896 = vld [vmem:[#allocation10 + $0x1bc] sm:$0xf]
    %v3897 = vld [vmem:[#allocation12] sm:$0x1]
    %v3899 = vlaneseq
    %v3900 = vshrl.u32 %v3899, 7
    %v3901 = vsub.s32 0, %v3900
    %v3902 = vrot.slane %v3897, %v3901
    %v4016 = vunpack.c.l.b16 %v3785
    %v4017 = vunpack.c.l.b16 %v3786
    %v4018 = vunpack.c.l.b16 %v3787
    %v4019 = vunpack.c.l.b16 %v3788
    %v4020 = vunpack.c.l.b16 %v3789
    %v4021 = vunpack.c.l.b16 %v3790
    %v4022 = vunpack.c.l.b16 %v3791
    %v4023 = vunpack.c.l.b16 %v3792
    %v4024 = vunpack.c.l.b16 %v3793
    %v4025 = vunpack.c.l.b16 %v3794
    %v4026 = vunpack.c.l.b16 %v3795
    %v4027 = vunpack.c.l.b16 %v3796
    %v4028 = vunpack.c.l.b16 %v3797
    %v4029 = vunpack.c.l.b16 %v3798
    %v4030 = vunpack.c.l.b16 %v3799
    %v4031 = vunpack.c.l.b16 %v3800
    %v4032 = vunpack.c.l.b16 %v3801
    %v4033 = vunpack.c.l.b16 %v3802
    %v4034 = vunpack.c.l.b16 %v3803
    %v4035 = vunpack.c.l.b16 %v3804
    %v4036 = vunpack.c.l.b16 %v3805
    %v4037 = vunpack.c.l.b16 %v3806
    %v4038 = vunpack.c.l.b16 %v3807
    %v4039 = vunpack.c.l.b16 %v3808
    %v4040 = vunpack.c.l.b16 %v3809
    %v4041 = vunpack.c.l.b16 %v3810
    %v4042 = vunpack.c.l.b16 %v3811
    %v4043 = vunpack.c.l.b16 %v3812
    %v4044 = vunpack.c.l.b16 %v3813
    %v4045 = vunpack.c.l.b16 %v3814
    %v4046 = vunpack.c.l.b16 %v3815
    %v4047 = vunpack.c.l.b16 %v3816
    %v4048 = vunpack.c.l.b16 %v3817
    %v4049 = vunpack.c.l.b16 %v3818
    %v4050 = vunpack.c.l.b16 %v3819
    %v4051 = vunpack.c.l.b16 %v3820
    %v4052 = vunpack.c.l.b16 %v3821
    %v4053 = vunpack.c.l.b16 %v3822
    %v4054 = vunpack.c.l.b16 %v3823
    %v4055 = vunpack.c.l.b16 %v3824
    %v4056 = vunpack.c.l.b16 %v3825
    %v4057 = vunpack.c.l.b16 %v3826
    %v4058 = vunpack.c.l.b16 %v3827
    %v4059 = vunpack.c.l.b16 %v3828
    %v4060 = vunpack.c.l.b16 %v3829
    %v4061 = vunpack.c.l.b16 %v3830
    %v4062 = vunpack.c.l.b16 %v3831
    %v4063 = vunpack.c.l.b16 %v3832
    %v4064 = vunpack.c.l.b16 %v3833
    %v4065 = vunpack.c.l.b16 %v3834
    %v4066 = vunpack.c.l.b16 %v3835
    %v4067 = vunpack.c.l.b16 %v3836
    %v4068 = vunpack.c.l.b16 %v3837
    %v4069 = vunpack.c.l.b16 %v3838
    %v4070 = vunpack.c.l.b16 %v3839
    %v4071 = vunpack.c.l.b16 %v3840
    %v4072 = vunpack.c.l.b16 %v3841
    %v4073 = vunpack.c.l.b16 %v3842
    %v4074 = vunpack.c.l.b16 %v3843
    %v4075 = vunpack.c.l.b16 %v3844
    %v4076 = vunpack.c.l.b16 %v3845
    %v4077 = vunpack.c.l.b16 %v3846
    %v4078 = vunpack.c.l.b16 %v3847
    %v4079 = vunpack.c.l.b16 %v3848
    %v4080 = vunpack.c.l.b16 %v3849
    %v4081 = vunpack.c.l.b16 %v3850
    %v4082 = vunpack.c.l.b16 %v3851
    %v4083 = vunpack.c.l.b16 %v3852
    %v4084 = vunpack.c.l.b16 %v3853
    %v4085 = vunpack.c.l.b16 %v3854
    %v4086 = vunpack.c.l.b16 %v3855
    %v4087 = vunpack.c.l.b16 %v3856
    %v4088 = vunpack.c.l.b16 %v3857
    %v4089 = vunpack.c.l.b16 %v3858
    %v4090 = vunpack.c.l.b16 %v3859
    %v4091 = vunpack.c.l.b16 %v3860
    %v4092 = vunpack.c.l.b16 %v3861
    %v4093 = vunpack.c.l.b16 %v3862
    %v4094 = vunpack.c.l.b16 %v3863
    %v4095 = vunpack.c.l.b16 %v3864
    %v4096 = vunpack.c.l.b16 %v3865
    %v4097 = vunpack.c.l.b16 %v3866
    %v4098 = vunpack.c.l.b16 %v3867
    %v4099 = vunpack.c.l.b16 %v3868
    %v4100 = vunpack.c.l.b16 %v3869
    %v4101 = vunpack.c.l.b16 %v3870
    %v4102 = vunpack.c.l.b16 %v3871
    %v4103 = vunpack.c.l.b16 %v3872
    %v4104 = vunpack.c.l.b16 %v3873
    %v4105 = vunpack.c.l.b16 %v3874
    %v4106 = vunpack.c.l.b16 %v3875
    %v4107 = vunpack.c.l.b16 %v3876
    %v4108 = vunpack.c.l.b16 %v3877
    %v4109 = vunpack.c.l.b16 %v3878
    %v4110 = vunpack.c.l.b16 %v3879
    %v4111 = vunpack.c.l.b16 %v3880
    %v4112 = vunpack.c.l.b16 %v3881
    %v4113 = vunpack.c.l.b16 %v3882
    %v4114 = vunpack.c.l.b16 %v3883
    %v4115 = vunpack.c.l.b16 %v3884
    %v4116 = vunpack.c.l.b16 %v3885
    %v4117 = vunpack.c.l.b16 %v3886
    %v4118 = vunpack.c.l.b16 %v3887
    %v4119 = vunpack.c.l.b16 %v3888
    %v4120 = vunpack.c.l.b16 %v3889
    %v4121 = vunpack.c.l.b16 %v3890
    %v4122 = vunpack.c.l.b16 %v3891
    %v4123 = vunpack.c.l.b16 %v3892
    %v4124 = vunpack.c.l.b16 %v3893
    %v4125 = vunpack.c.l.b16 %v3894
    %v4126 = vunpack.c.l.b16 %v3895
    %v4127 = vunpack.c.l.b16 %v3896
    %v4128 = vpack.c.b16 %v4017, %v4016
    %v4129 = vpack.c.b16 %v4019, %v4018
    %v4130 = vpack.c.b16 %v4021, %v4020
    %v4131 = vpack.c.b16 %v4023, %v4022
    %v4132 = vpack.c.b16 %v4025, %v4024
    %v4133 = vpack.c.b16 %v4027, %v4026
    %v4134 = vpack.c.b16 %v4029, %v4028
    %v4135 = vpack.c.b16 %v4031, %v4030
    %v4136 = vpack.c.b16 %v4033, %v4032
    %v4137 = vpack.c.b16 %v4035, %v4034
    %v4138 = vpack.c.b16 %v4037, %v4036
    %v4139 = vpack.c.b16 %v4039, %v4038
    %v4140 = vpack.c.b16 %v4041, %v4040
    %v4141 = vpack.c.b16 %v4043, %v4042
    %v4142 = vpack.c.b16 %v4045, %v4044
    %v4143 = vpack.c.b16 %v4047, %v4046
    %v4144 = vpack.c.b16 %v4049, %v4048
    %v4145 = vpack.c.b16 %v4051, %v4050
    %v4146 = vpack.c.b16 %v4053, %v4052
    %v4147 = vpack.c.b16 %v4055, %v4054
    %v4148 = vpack.c.b16 %v4057, %v4056
    %v4149 = vpack.c.b16 %v4059, %v4058
    %v4150 = vpack.c.b16 %v4061, %v4060
    %v4151 = vpack.c.b16 %v4063, %v4062
    %v4152 = vpack.c.b16 %v4065, %v4064
    %v4153 = vpack.c.b16 %v4067, %v4066
    %v4154 = vpack.c.b16 %v4069, %v4068
    %v4155 = vpack.c.b16 %v4071, %v4070
    %v4156 = vpack.c.b16 %v4073, %v4072
    %v4157 = vpack.c.b16 %v4075, %v4074
    %v4158 = vpack.c.b16 %v4077, %v4076
    %v4159 = vpack.c.b16 %v4079, %v4078
    %v4160 = vpack.c.b16 %v4081, %v4080
    %v4161 = vpack.c.b16 %v4083, %v4082
    %v4162 = vpack.c.b16 %v4085, %v4084
    %v4163 = vpack.c.b16 %v4087, %v4086
    %v4164 = vpack.c.b16 %v4089, %v4088
    %v4165 = vpack.c.b16 %v4091, %v4090
    %v4166 = vpack.c.b16 %v4093, %v4092
    %v4167 = vpack.c.b16 %v4095, %v4094
    %v4168 = vpack.c.b16 %v4097, %v4096
    %v4169 = vpack.c.b16 %v4099, %v4098
    %v4170 = vpack.c.b16 %v4101, %v4100
    %v4171 = vpack.c.b16 %v4103, %v4102
    %v4172 = vpack.c.b16 %v4105, %v4104
    %v4173 = vpack.c.b16 %v4107, %v4106
    %v4174 = vpack.c.b16 %v4109, %v4108
    %v4175 = vpack.c.b16 %v4111, %v4110
    %v4176 = vpack.c.b16 %v4113, %v4112
    %v4177 = vpack.c.b16 %v4115, %v4114
    %v4178 = vpack.c.b16 %v4117, %v4116
    %v4179 = vpack.c.b16 %v4119, %v4118
    %v4180 = vpack.c.b16 %v4121, %v4120
    %v4181 = vpack.c.b16 %v4123, %v4122
    %v4182 = vpack.c.b16 %v4125, %v4124
    %v4183 = vpack.c.b16 %v4127, %v4126
    %4240 = vmatprep.subr.bf16.mxu0 0
    %4241 = vmatpush1.bf16.msra.mxu0 %v4128
    %4242 = vmatprep.subr.bf16.mxu0 0
    %4243 = vmatpush1.bf16.msra.mxu0 %v4129
    %4244 = vmatprep.subr.bf16.mxu0 0
    %4245 = vmatpush1.bf16.msra.mxu0 %v4130
    %4246 = vmatprep.subr.bf16.mxu0 0
    %4247 = vmatpush1.bf16.msra.mxu0 %v4131
    %4248 = vmatprep.subr.bf16.mxu0 0
    %4249 = vmatpush1.bf16.msra.mxu0 %v4132
    %4250 = vmatprep.subr.bf16.mxu0 0
    %4251 = vmatpush1.bf16.msra.mxu0 %v4133
    %4252 = vmatprep.subr.bf16.mxu0 0
    %4253 = vmatpush1.bf16.msra.mxu0 %v4134
    %4254 = vmatprep.subr.bf16.mxu0 0
    %4255 = vmatpush1.bf16.msra.mxu0 %v4135
    %4256 = vmatprep.subr.bf16.mxu0 0
    %4257 = vmatpush1.bf16.msra.mxu0 %v4136
    %4258 = vmatprep.subr.bf16.mxu0 0
    %4259 = vmatpush1.bf16.msra.mxu0 %v4137
    %4260 = vmatprep.subr.bf16.mxu0 0
    %4261 = vmatpush1.bf16.msra.mxu0 %v4138
    %4262 = vmatprep.subr.bf16.mxu0 0
    %4263 = vmatpush1.bf16.msra.mxu0 %v4139
    %4264 = vmatprep.subr.bf16.mxu0 0
    %4265 = vmatpush1.bf16.msra.mxu0 %v4140
    %4266 = vmatprep.subr.bf16.mxu0 0
    %4267 = vmatpush1.bf16.msra.mxu0 %v4141
    %4268 = vmatprep.subr.bf16.mxu0 0
    %4269 = vmatpush1.bf16.msra.mxu0 %v4142
    %4270 = vmatprep.subr.bf16.mxu0 0
    %4271 = vmatpush1.bf16.msra.mxu0 %v4143
    %4272 = vmatprep.mubr.bf16.mxu0 %v3618
    %4273 = vmatmul.mubr.bf16.gmra.mrb[0].mxu0 %v3617
    %v4274 = vpop.f32.mrb[0].mxu0
    %v4275 = vadd.f32 %v3902, %v4274
    %v4276 = vpop.f32.mrb[0].mxu0
    %v4277 = vpop.f32.mrb[0].mxu0
    %v4278 = vadd.f32 %v3902, %v4277
    %v4279 = vpop.f32.mrb[0].mxu0
    %4280 = vmatprep.mubr.bf16.mxu0 %v3625
    %4281 = vmatmul.mubr.bf16.gmra.mrb[0].mxu0 %v3624
    %v4282 = vpop.f32.mrb[0].mxu0
    %v4283 = vpop.f32.mrb[0].mxu0
    %v4284 = vpop.f32.mrb[0].mxu0
    %v4285 = vadd.f32 %v3902, %v4284
    %v4286 = vpop.f32.mrb[0].mxu0
    %4287 = vmatprep.mubr.bf16.mxu0 %v3632
    %4288 = vmatmul.mubr.bf16.gmra.mrb[0].mxu0 %v3631
    %v4289 = vpop.f32.mrb[0].mxu0
    %v4290 = vadd.f32 %v3902, %v4289
    %v4291 = vpop.f32.mrb[0].mxu0
    %v4292 = vpop.f32.mrb[0].mxu0
    %v4293 = vpop.f32.mrb[0].mxu0
    %4294 = vmatprep.mubr.bf16.mxu0 %v3639
    %4295 = vmatmul.mubr.bf16.gmra.mrb[0].mxu0 %v3638
    %v4296 = vpop.f32.mrb[0].mxu0
    %v4297 = vadd.f32 %v3902, %v4296
    %v4298 = vpop.f32.mrb[0].mxu0
    %v4299 = vpop.f32.mrb[0].mxu0
    %v4300 = vadd.f32 %v3902, %v4299
    %v4301 = vpop.f32.mrb[0].mxu0
    %4302 = vmatprep.mubr.bf16.mxu0 %v3646
    %4303 = vmatmul.mubr.bf16.gmra.mrb[0].mxu0 %v3645
    %v4304 = vpop.f32.mrb[0].mxu0
    %v4305 = vpop.f32.mrb[0].mxu0
    %v4306 = vpop.f32.mrb[0].mxu0
    %v4307 = vadd.f32 %v3902, %v4306
    %v4308 = vpop.f32.mrb[0].mxu0
    %4309 = vmatprep.mubr.bf16.mxu0 %v3653
    %4310 = vmatmul.mubr.bf16.gmra.mrb[0].mxu0 %v3652
    %v4311 = vpop.f32.mrb[0].mxu0
    %v4312 = vadd.f32 %v3902, %v4311
    %v4313 = vpop.f32.mrb[0].mxu0
    %v4314 = vpop.f32.mrb[0].mxu0
    %v4315 = vpop.f32.mrb[0].mxu0
    %4316 = vmatprep.mubr.bf16.mxu0 %v3660
    %4317 = vmatmul.mubr.bf16.gmra.mrb[0].mxu0 %v3659
    %v4318 = vpop.f32.mrb[0].mxu0
    %v4319 = vadd.f32 %v3902, %v4318
    %v4320 = vpop.f32.mrb[0].mxu0
    %v4321 = vpop.f32.mrb[0].mxu0
    %v4322 = vadd.f32 %v3902, %v4321
    %v4323 = vpop.f32.mrb[0].mxu0
    %4324 = vmatprep.mubr.bf16.mxu0 %v3667
    %4325 = vmatmul.mubr.bf16.gmra.mrb[0].mxu0 %v3666
    %v4326 = vpop.f32.mrb[0].mxu0
    %v4327 = vpop.f32.mrb[0].mxu0
    %v4328 = vpop.f32.mrb[0].mxu0
    %v4329 = vadd.f32 %v3902, %v4328
    %v4330 = vpop.f32.mrb[0].mxu0
    %4331 = vmatprep.mubr.bf16.mxu0 %v3674
    %4332 = vmatmul.mubr.bf16.gmra.mrb[0].mxu0 %v3673
    %v4333 = vpop.f32.mrb[0].mxu0
    %v4334 = vadd.f32 %v3902, %v4333
    %v4335 = vpop.f32.mrb[0].mxu0
    %v4336 = vpop.f32.mrb[0].mxu0
    %v4337 = vpop.f32.mrb[0].mxu0
    %4338 = vmatprep.mubr.bf16.mxu0 %v3681
    %4339 = vmatmul.mubr.bf16.gmra.mrb[0].mxu0 %v3680
    %v4340 = vpop.f32.mrb[0].mxu0
    %v4341 = vadd.f32 %v3902, %v4340
    %v4342 = vpop.f32.mrb[0].mxu0
    %v4343 = vpop.f32.mrb[0].mxu0
    %v4344 = vadd.f32 %v3902, %v4343
    %v4345 = vpop.f32.mrb[0].mxu0
    %4346 = vmatprep.mubr.bf16.mxu0 %v3688
    %4347 = vmatmul.mubr.bf16.gmra.mrb[0].mxu0 %v3687
    %v4348 = vpop.f32.mrb[0].mxu0
    %v4349 = vpop.f32.mrb[0].mxu0
    %v4350 = vpop.f32.mrb[0].mxu0
    %v4351 = vadd.f32 %v3902, %v4350
    %v4352 = vpop.f32.mrb[0].mxu0
    %4353 = vmatprep.mubr.bf16.mxu0 %v3695
    %4354 = vmatmul.mubr.bf16.gmra.mrb[0].mxu0 %v3694
    %v4355 = vpop.f32.mrb[0].mxu0
    %v4356 = vadd.f32 %v3902, %v4355
    %v4357 = vpop.f32.mrb[0].mxu0
    %v4358 = vpop.f32.mrb[0].mxu0
    %v4359 = vpop.f32.mrb[0].mxu0
    %4360 = vmatprep.mubr.bf16.mxu0 %v3702
    %4361 = vmatmul.mubr.bf16.gmra.mrb[0].mxu0 %v3701
    %v4362 = vpop.f32.mrb[0].mxu0
    %v4363 = vadd.f32 %v3902, %v4362
    %v4364 = vpop.f32.mrb[0].mxu0
    %v4365 = vpop.f32.mrb[0].mxu0
    %v4366 = vadd.f32 %v3902, %v4365
    %v4367 = vpop.f32.mrb[0].mxu0
    %4368 = vmatprep.mubr.bf16.mxu0 %v3709
    %4369 = vmatmul.mubr.bf16.gmra.mrb[0].mxu0 %v3708
    %v4370 = vpop.f32.mrb[0].mxu0
    %v4371 = vpop.f32.mrb[0].mxu0
    %v4372 = vpop.f32.mrb[0].mxu0
    %v4373 = vadd.f32 %v3902, %v4372
    %v4374 = vpop.f32.mrb[0].mxu0
    %4375 = vmatprep.mubr.bf16.mxu0 %v3716
    %4376 = vmatmul.mubr.bf16.gmra.mrb[0].mxu0 %v3715
    %v4377 = vpop.f32.mrb[0].mxu0
    %v4378 = vadd.f32 %v3902, %v4377
    %v4379 = vpop.f32.mrb[0].mxu0
    %v4380 = vpop.f32.mrb[0].mxu0
    %v4381 = vpop.f32.mrb[0].mxu0
    %4382 = vmatprep.mubr.bf16.mxu0 %v3723
    %4383 = vmatmul.mubr.bf16.gmra.mrb[0].mxu0 %v3722
    %v4384 = vpop.f32.mrb[0].mxu0
    %v4385 = vadd.f32 %v3902, %v4384
    %v4386 = vpop.f32.mrb[0].mxu0
    %v4387 = vpop.f32.mrb[0].mxu0
    %v4388 = vadd.f32 %v3902, %v4387
    %v4389 = vpop.f32.mrb[0].mxu0
    %4390 = vmatprep.mubr.bf16.mxu0 %v3730
    %4391 = vmatmul.mubr.bf16.gmra.mrb[0].mxu0 %v3729
    %v4392 = vpop.f32.mrb[0].mxu0
    %v4393 = vpop.f32.mrb[0].mxu0
    %v4394 = vpop.f32.mrb[0].mxu0
    %v4395 = vadd.f32 %v3902, %v4394
    %v4396 = vpop.f32.mrb[0].mxu0
    %4397 = vmatprep.mubr.bf16.mxu0 %v3737
    %4398 = vmatmul.mubr.bf16.gmra.mrb[0].mxu0 %v3736
    %v4399 = vpop.f32.mrb[0].mxu0
    %v4400 = vadd.f32 %v3902, %v4399
    %v4401 = vpop.f32.mrb[0].mxu0
    %v4402 = vpop.f32.mrb[0].mxu0
    %v4403 = vpop.f32.mrb[0].mxu0
    %4404 = vmatprep.mubr.bf16.mxu0 %v3744
    %4405 = vmatmul.mubr.bf16.gmra.mrb[0].mxu0 %v3743
    %v4406 = vpop.f32.mrb[0].mxu0
    %v4407 = vadd.f32 %v3902, %v4406
    %v4408 = vpop.f32.mrb[0].mxu0
    %v4409 = vpop.f32.mrb[0].mxu0
    %v4410 = vadd.f32 %v3902, %v4409
    %v4411 = vpop.f32.mrb[0].mxu0
    %4412 = vmatprep.mubr.bf16.mxu0 %v3751
    %4413 = vmatmul.mubr.bf16.gmra.mrb[0].mxu0 %v3750
    %v4414 = vpop.f32.mrb[0].mxu0
    %v4415 = vpop.f32.mrb[0].mxu0
    %v4416 = vpop.f32.mrb[0].mxu0
    %v4417 = vadd.f32 %v3902, %v4416
    %v4418 = vpop.f32.mrb[0].mxu0
    %4419 = vmatprep.mubr.bf16.mxu0 %v3758
    %4420 = vmatmul.mubr.bf16.gmra.mrb[0].mxu0 %v3757
    %v4421 = vpop.f32.mrb[0].mxu0
    %v4422 = vadd.f32 %v3902, %v4421
    %v4423 = vpop.f32.mrb[0].mxu0
    %v4424 = vpop.f32.mrb[0].mxu0
    %v4425 = vpop.f32.mrb[0].mxu0
    %4426 = vmatprep.mubr.bf16.mxu0 %v3765
    %4427 = vmatmul.mubr.bf16.gmra.mrb[0].mxu0 %v3764
    %v4428 = vpop.f32.mrb[0].mxu0
    %v4429 = vadd.f32 %v3902, %v4428
    %v4430 = vpop.f32.mrb[0].mxu0
    %v4431 = vpop.f32.mrb[0].mxu0
    %v4432 = vadd.f32 %v3902, %v4431
    %v4433 = vpop.f32.mrb[0].mxu0
    %4434 = vmatprep.mubr.bf16.mxu0 %v3772
    %4435 = vmatmul.mubr.bf16.gmra.mrb[0].mxu0 %v3771
    %v4436 = vpop.f32.mrb[0].mxu0
    %v4437 = vpop.f32.mrb[0].mxu0
    %v4438 = vpop.f32.mrb[0].mxu0
    %v4439 = vadd.f32 %v3902, %v4438
    %v4440 = vpop.f32.mrb[0].mxu0
    %4441 = vmatprep.mubr.bf16.mxu0 %v3779
    %4442 = vmatmul.mubr.bf16.gmra.mrb[0].mxu0 %v3778
    %v4443 = vpop.f32.mrb[0].mxu0
    %v4444 = vadd.f32 %v3902, %v4443
    %v4445 = vpop.f32.mrb[0].mxu0
    %v4446 = vpop.f32.mrb[0].mxu0
    %v4447 = vpop.f32.mrb[0].mxu0
    %4448 = vdwg.mxu0
    %4449 = vmatprep.subr.bf16.mxu0 0
    %4450 = vmatpush1.bf16.msra.mxu0 %v4144
    %4451 = vmatprep.subr.bf16.mxu0 0
    %4452 = vmatpush1.bf16.msra.mxu0 %v4145
    %4453 = vmatprep.subr.bf16.mxu0 0
    %4454 = vmatpush1.bf16.msra.mxu0 %v4146
    %4455 = vmatprep.subr.bf16.mxu0 0
    %4456 = vmatpush1.bf16.msra.mxu0 %v4147
    %4457 = vmatprep.subr.bf16.mxu0 0
    %4458 = vmatpush1.bf16.msra.mxu0 %v4148
    %4459 = vmatprep.subr.bf16.mxu0 0
    %4460 = vmatpush1.bf16.msra.mxu0 %v4149
    %4461 = vmatprep.subr.bf16.mxu0 0
    %4462 = vmatpush1.bf16.msra.mxu0 %v4150
    %4463 = vmatprep.subr.bf16.mxu0 0
    %4464 = vmatpush1.bf16.msra.mxu0 %v4151
    %4465 = vmatprep.subr.bf16.mxu0 0
    %4466 = vmatpush1.bf16.msra.mxu0 %v4152
    %4467 = vmatprep.subr.bf16.mxu0 0
    %4468 = vmatpush1.bf16.msra.mxu0 %v4153
    %4469 = vmatprep.subr.bf16.mxu0 0
    %4470 = vmatpush1.bf16.msra.mxu0 %v4154
    %4471 = vmatprep.subr.bf16.mxu0 0
    %4472 = vmatpush1.bf16.msra.mxu0 %v4155
    %4473 = vmatprep.subr.bf16.mxu0 0
    %4474 = vmatpush1.bf16.msra.mxu0 %v4156
    %4475 = vmatprep.subr.bf16.mxu0 0
    %4476 = vmatpush1.bf16.msra.mxu0 %v4157
    %4477 = vmatprep.subr.bf16.mxu0 0
    %4478 = vmatpush1.bf16.msra.mxu0 %v4158
    %4479 = vmatprep.subr.bf16.mxu0 0
    %4480 = vmatpush1.bf16.msra.mxu0 %v4159
    %4481 = vmatprep.mubr.bf16.mxu0 %v3620
    %4482 = vmatmul.mubr.bf16.gmra.mrb[0].mxu0 %v3619
    %v4483 = vpop.f32.mrb[0].mxu0
    %v4484 = vadd.f32 %v4275, %v4483
    %v4485 = vpop.f32.mrb[0].mxu0
    %v4486 = vpop.f32.mrb[0].mxu0
    %v4487 = vadd.f32 %v4278, %v4486
    %v4488 = vpop.f32.mrb[0].mxu0
    %4489 = vmatprep.mubr.bf16.mxu0 %v3627
    %4490 = vmatmul.mubr.bf16.gmra.mrb[0].mxu0 %v3626
    %v4491 = vpop.f32.mrb[0].mxu0
    %v4492 = vpop.f32.mrb[0].mxu0
    %v4493 = vpop.f32.mrb[0].mxu0
    %v4494 = vadd.f32 %v4285, %v4493
    %v4495 = vpop.f32.mrb[0].mxu0
    %4496 = vmatprep.mubr.bf16.mxu0 %v3634
    %4497 = vmatmul.mubr.bf16.gmra.mrb[0].mxu0 %v3633
    %v4498 = vpop.f32.mrb[0].mxu0
    %v4499 = vadd.f32 %v4290, %v4498
    %v4500 = vpop.f32.mrb[0].mxu0
    %v4501 = vpop.f32.mrb[0].mxu0
    %v4502 = vpop.f32.mrb[0].mxu0
    %4503 = vmatprep.mubr.bf16.mxu0 %v3641
    %4504 = vmatmul.mubr.bf16.gmra.mrb[0].mxu0 %v3640
    %v4505 = vpop.f32.mrb[0].mxu0
    %v4506 = vadd.f32 %v4297, %v4505
    %v4507 = vpop.f32.mrb[0].mxu0
    %v4508 = vpop.f32.mrb[0].mxu0
    %v4509 = vadd.f32 %v4300, %v4508
    %v4510 = vpop.f32.mrb[0].mxu0
    %4511 = vmatprep.mubr.bf16.mxu0 %v3648
    %4512 = vmatmul.mubr.bf16.gmra.mrb[0].mxu0 %v3647
    %v4513 = vpop.f32.mrb[0].mxu0
    %v4514 = vpop.f32.mrb[0].mxu0
    %v4515 = vpop.f32.mrb[0].mxu0
    %v4516 = vadd.f32 %v4307, %v4515
    %v4517 = vpop.f32.mrb[0].mxu0
    %4518 = vmatprep.mubr.bf16.mxu0 %v3655
    %4519 = vmatmul.mubr.bf16.gmra.mrb[0].mxu0 %v3654
    %v4520 = vpop.f32.mrb[0].mxu0
    %v4521 = vadd.f32 %v4312, %v4520
    %v4522 = vpop.f32.mrb[0].mxu0
    %v4523 = vpop.f32.mrb[0].mxu0
    %v4524 = vpop.f32.mrb[0].mxu0
    %4525 = vmatprep.mubr.bf16.mxu0 %v3662
    %4526 = vmatmul.mubr.bf16.gmra.mrb[0].mxu0 %v3661
    %v4527 = vpop.f32.mrb[0].mxu0
    %v4528 = vadd.f32 %v4319, %v4527
    %v4529 = vpop.f32.mrb[0].mxu0
    %v4530 = vpop.f32.mrb[0].mxu0
    %v4531 = vadd.f32 %v4322, %v4530
    %v4532 = vpop.f32.mrb[0].mxu0
    %4533 = vmatprep.mubr.bf16.mxu0 %v3669
    %4534 = vmatmul.mubr.bf16.gmra.mrb[0].mxu0 %v3668
    %v4535 = vpop.f32.mrb[0].mxu0
    %v4536 = vpop.f32.mrb[0].mxu0
    %v4537 = vpop.f32.mrb[0].mxu0
    %v4538 = vadd.f32 %v4329, %v4537
    %v4539 = vpop.f32.mrb[0].mxu0
    %4540 = vmatprep.mubr.bf16.mxu0 %v3676
    %4541 = vmatmul.mubr.bf16.gmra.mrb[0].mxu0 %v3675
    %v4542 = vpop.f32.mrb[0].mxu0
    %v4543 = vadd.f32 %v4334, %v4542
    %v4544 = vpop.f32.mrb[0].mxu0
    %v4545 = vpop.f32.mrb[0].mxu0
    %v4546 = vpop.f32.mrb[0].mxu0
    %4547 = vmatprep.mubr.bf16.mxu0 %v3683
    %4548 = vmatmul.mubr.bf16.gmra.mrb[0].mxu0 %v3682
    %v4549 = vpop.f32.mrb[0].mxu0
    %v4550 = vadd.f32 %v4341, %v4549
    %v4551 = vpop.f32.mrb[0].mxu0
    %v4552 = vpop.f32.mrb[0].mxu0
    %v4553 = vadd.f32 %v4344, %v4552
    %v4554 = vpop.f32.mrb[0].mxu0
    %4555 = vmatprep.mubr.bf16.mxu0 %v3690
    %4556 = vmatmul.mubr.bf16.gmra.mrb[0].mxu0 %v3689
    %v4557 = vpop.f32.mrb[0].mxu0
    %v4558 = vpop.f32.mrb[0].mxu0
    %v4559 = vpop.f32.mrb[0].mxu0
    %v4560 = vadd.f32 %v4351, %v4559
    %v4561 = vpop.f32.mrb[0].mxu0
    %4562 = vmatprep.mubr.bf16.mxu0 %v3697
    %4563 = vmatmul.mubr.bf16.gmra.mrb[0].mxu0 %v3696
    %v4564 = vpop.f32.mrb[0].mxu0
    %v4565 = vadd.f32 %v4356, %v4564
    %v4566 = vpop.f32.mrb[0].mxu0
    %v4567 = vpop.f32.mrb[0].mxu0
    %v4568 = vpop.f32.mrb[0].mxu0
    %4569 = vmatprep.mubr.bf16.mxu0 %v3704
    %4570 = vmatmul.mubr.bf16.gmra.mrb[0].mxu0 %v3703
    %v4571 = vpop.f32.mrb[0].mxu0
    %v4572 = vadd.f32 %v4363, %v4571
    %v4573 = vpop.f32.mrb[0].mxu0
    %v4574 = vpop.f32.mrb[0].mxu0
    %v4575 = vadd.f32 %v4366, %v4574
    %v4576 = vpop.f32.mrb[0].mxu0
    %4577 = vmatprep.mubr.bf16.mxu0 %v3711
    %4578 = vmatmul.mubr.bf16.gmra.mrb[0].mxu0 %v3710
    %v4579 = vpop.f32.mrb[0].mxu0
    %v4580 = vpop.f32.mrb[0].mxu0
    %v4581 = vpop.f32.mrb[0].mxu0
    %v4582 = vadd.f32 %v4373, %v4581
    %v4583 = vpop.f32.mrb[0].mxu0
    %4584 = vmatprep.mubr.bf16.mxu0 %v3718
    %4585 = vmatmul.mubr.bf16.gmra.mrb[0].mxu0 %v3717
    %v4586 = vpop.f32.mrb[0].mxu0
    %v4587 = vadd.f32 %v4378, %v4586
    %v4588 = vpop.f32.mrb[0].mxu0
    %v4589 = vpop.f32.mrb[0].mxu0
    %v4590 = vpop.f32.mrb[0].mxu0
    %4591 = vmatprep.mubr.bf16.mxu0 %v3725
    %4592 = vmatmul.mubr.bf16.gmra.mrb[0].mxu0 %v3724
    %v4593 = vpop.f32.mrb[0].mxu0
    %v4594 = vadd.f32 %v4385, %v4593
    %v4595 = vpop.f32.mrb[0].mxu0
    %v4596 = vpop.f32.mrb[0].mxu0
    %v4597 = vadd.f32 %v4388, %v4596
    %v4598 = vpop.f32.mrb[0].mxu0
    %4599 = vmatprep.mubr.bf16.mxu0 %v3732
    %4600 = vmatmul.mubr.bf16.gmra.mrb[0].mxu0 %v3731
    %v4601 = vpop.f32.mrb[0].mxu0
    %v4602 = vpop.f32.mrb[0].mxu0
    %v4603 = vpop.f32.mrb[0].mxu0
    %v4604 = vadd.f32 %v4395, %v4603
    %v4605 = vpop.f32.mrb[0].mxu0
    %4606 = vmatprep.mubr.bf16.mxu0 %v3739
    %4607 = vmatmul.mubr.bf16.gmra.mrb[0].mxu0 %v3738
    %v4608 = vpop.f32.mrb[0].mxu0
    %v4609 = vadd.f32 %v4400, %v4608
    %v4610 = vpop.f32.mrb[0].mxu0
    %v4611 = vpop.f32.mrb[0].mxu0
    %v4612 = vpop.f32.mrb[0].mxu0
    %4613 = vmatprep.mubr.bf16.mxu0 %v3746
    %4614 = vmatmul.mubr.bf16.gmra.mrb[0].mxu0 %v3745
    %v4615 = vpop.f32.mrb[0].mxu0
    %v4616 = vadd.f32 %v4407, %v4615
    %v4617 = vpop.f32.mrb[0].mxu0
    %v4618 = vpop.f32.mrb[0].mxu0
    %v4619 = vadd.f32 %v4410, %v4618
    %v4620 = vpop.f32.mrb[0].mxu0
    %4621 = vmatprep.mubr.bf16.mxu0 %v3753
    %4622 = vmatmul.mubr.bf16.gmra.mrb[0].mxu0 %v3752
    %v4623 = vpop.f32.mrb[0].mxu0
    %v4624 = vpop.f32.mrb[0].mxu0
    %v4625 = vpop.f32.mrb[0].mxu0
    %v4626 = vadd.f32 %v4417, %v4625
    %v4627 = vpop.f32.mrb[0].mxu0
    %4628 = vmatprep.mubr.bf16.mxu0 %v3760
    %4629 = vmatmul.mubr.bf16.gmra.mrb[0].mxu0 %v3759
    %v4630 = vpop.f32.mrb[0].mxu0
    %v4631 = vadd.f32 %v4422, %v4630
    %v4632 = vpop.f32.mrb[0].mxu0
    %v4633 = vpop.f32.mrb[0].mxu0
    %v4634 = vpop.f32.mrb[0].mxu0
    %4635 = vmatprep.mubr.bf16.mxu0 %v3767
    %4636 = vmatmul.mubr.bf16.gmra.mrb[0].mxu0 %v3766
    %v4637 = vpop.f32.mrb[0].mxu0
    %v4638 = vadd.f32 %v4429, %v4637
    %v4639 = vpop.f32.mrb[0].mxu0
    %v4640 = vpop.f32.mrb[0].mxu0
    %v4641 = vadd.f32 %v4432, %v4640
    %v4642 = vpop.f32.mrb[0].mxu0
    %4643 = vmatprep.mubr.bf16.mxu0 %v3774
    %4644 = vmatmul.mubr.bf16.gmra.mrb[0].mxu0 %v3773
    %v4645 = vpop.f32.mrb[0].mxu0
    %v4646 = vpop.f32.mrb[0].mxu0
    %v4647 = vpop.f32.mrb[0].mxu0
    %v4648 = vadd.f32 %v4439, %v4647
    %v4649 = vpop.f32.mrb[0].mxu0
    %4650 = vmatprep.mubr.bf16.mxu0 %v3781
    %4651 = vmatmul.mubr.bf16.gmra.mrb[0].mxu0 %v3780
    %v4652 = vpop.f32.mrb[0].mxu0
    %v4653 = vadd.f32 %v4444, %v4652
    %v4654 = vpop.f32.mrb[0].mxu0
    %v4655 = vpop.f32.mrb[0].mxu0
    %v4656 = vpop.f32.mrb[0].mxu0
    %4657 = vdwg.mxu0
    %4658 = vmatprep.subr.bf16.mxu0 0
    %4659 = vmatpush1.bf16.msra.mxu0 %v4160
    %4660 = vmatprep.subr.bf16.mxu0 0
    %4661 = vmatpush1.bf16.msra.mxu0 %v4161
    %4662 = vmatprep.subr.bf16.mxu0 0
    %4663 = vmatpush1.bf16.msra.mxu0 %v4162
    %4664 = vmatprep.subr.bf16.mxu0 0
    %4665 = vmatpush1.bf16.msra.mxu0 %v4163
    %4666 = vmatprep.subr.bf16.mxu0 0
    %4667 = vmatpush1.bf16.msra.mxu0 %v4164
    %4668 = vmatprep.subr.bf16.mxu0 0
    %4669 = vmatpush1.bf16.msra.mxu0 %v4165
    %4670 = vmatprep.subr.bf16.mxu0 0
    %4671 = vmatpush1.bf16.msra.mxu0 %v4166
    %4672 = vmatprep.subr.bf16.mxu0 0
    %4673 = vmatpush1.bf16.msra.mxu0 %v4167
    %4674 = vmatprep.subr.bf16.mxu0 0
    %4675 = vmatpush1.bf16.msra.mxu0 %v4168
    %4676 = vmatprep.subr.bf16.mxu0 0
    %4677 = vmatpush1.bf16.msra.mxu0 %v4169
    %4678 = vmatprep.subr.bf16.mxu0 0
    %4679 = vmatpush1.bf16.msra.mxu0 %v4170
    %4680 = vmatprep.subr.bf16.mxu0 0
    %4681 = vmatpush1.bf16.msra.mxu0 %v4171
    %4682 = vmatprep.subr.bf16.mxu0 0
    %4683 = vmatpush1.bf16.msra.mxu0 %v4172
    %4684 = vmatprep.subr.bf16.mxu0 0
    %4685 = vmatpush1.bf16.msra.mxu0 %v4173
    %4686 = vmatprep.subr.bf16.mxu0 0
    %4687 = vmatpush1.bf16.msra.mxu0 %v4174
    %4688 = vmatprep.subr.bf16.mxu0 0
    %4689 = vmatpush1.bf16.msra.mxu0 %v4175
    %4690 = vmatprep.mubr.bf16.mxu0 %v3622
    %4691 = vmatmul.mubr.bf16.gmra.mrb[0].mxu0 %v3621
    %v4692 = vpop.f32.mrb[0].mxu0
    %v4693 = vadd.f32 %v4484, %v4692
    %v4694 = vpop.f32.mrb[0].mxu0
    %v4695 = vpop.f32.mrb[0].mxu0
    %v4696 = vadd.f32 %v4487, %v4695
    %v4697 = vpop.f32.mrb[0].mxu0
    %4698 = vmatprep.mubr.bf16.mxu0 %v3629
    %4699 = vmatmul.mubr.bf16.gmra.mrb[0].mxu0 %v3628
    %v4700 = vpop.f32.mrb[0].mxu0
    %v4701 = vpop.f32.mrb[0].mxu0
    %v4702 = vpop.f32.mrb[0].mxu0
    %v4703 = vadd.f32 %v4494, %v4702
    %v4704 = vpop.f32.mrb[0].mxu0
    %4705 = vmatprep.mubr.bf16.mxu0 %v3636
    %4706 = vmatmul.mubr.bf16.gmra.mrb[0].mxu0 %v3635
    %v4707 = vpop.f32.mrb[0].mxu0
    %v4708 = vadd.f32 %v4499, %v4707
    %v4709 = vpop.f32.mrb[0].mxu0
    %v4710 = vpop.f32.mrb[0].mxu0
    %v4711 = vpop.f32.mrb[0].mxu0
    %4712 = vmatprep.mubr.bf16.mxu0 %v3643
    %4713 = vmatmul.mubr.bf16.gmra.mrb[0].mxu0 %v3642
    %v4714 = vpop.f32.mrb[0].mxu0
    %v4715 = vadd.f32 %v4506, %v4714
    %v4716 = vpop.f32.mrb[0].mxu0
    %v4717 = vpop.f32.mrb[0].mxu0
    %v4718 = vadd.f32 %v4509, %v4717
    %v4719 = vpop.f32.mrb[0].mxu0
    %4720 = vmatprep.mubr.bf16.mxu0 %v3650
    %4721 = vmatmul.mubr.bf16.gmra.mrb[0].mxu0 %v3649
    %v4722 = vpop.f32.mrb[0].mxu0
    %v4723 = vpop.f32.mrb[0].mxu0
    %v4724 = vpop.f32.mrb[0].mxu0
    %v4725 = vadd.f32 %v4516, %v4724
    %v4726 = vpop.f32.mrb[0].mxu0
    %4727 = vmatprep.mubr.bf16.mxu0 %v3657
    %4728 = vmatmul.mubr.bf16.gmra.mrb[0].mxu0 %v3656
    %v4729 = vpop.f32.mrb[0].mxu0
    %v4730 = vadd.f32 %v4521, %v4729
    %v4731 = vpop.f32.mrb[0].mxu0
    %v4732 = vpop.f32.mrb[0].mxu0
    %v4733 = vpop.f32.mrb[0].mxu0
    %4734 = vmatprep.mubr.bf16.mxu0 %v3664
    %4735 = vmatmul.mubr.bf16.gmra.mrb[0].mxu0 %v3663
    %v4736 = vpop.f32.mrb[0].mxu0
    %v4737 = vadd.f32 %v4528, %v4736
    %v4738 = vpop.f32.mrb[0].mxu0
    %v4739 = vpop.f32.mrb[0].mxu0
    %v4740 = vadd.f32 %v4531, %v4739
    %v4741 = vpop.f32.mrb[0].mxu0
    %4742 = vmatprep.mubr.bf16.mxu0 %v3671
    %4743 = vmatmul.mubr.bf16.gmra.mrb[0].mxu0 %v3670
    %v4744 = vpop.f32.mrb[0].mxu0
    %v4745 = vpop.f32.mrb[0].mxu0
    %v4746 = vpop.f32.mrb[0].mxu0
    %v4747 = vadd.f32 %v4538, %v4746
    %v4748 = vpop.f32.mrb[0].mxu0
    %4749 = vmatprep.mubr.bf16.mxu0 %v3678
    %4750 = vmatmul.mubr.bf16.gmra.mrb[0].mxu0 %v3677
    %v4751 = vpop.f32.mrb[0].mxu0
    %v4752 = vadd.f32 %v4543, %v4751
    %v4753 = vpop.f32.mrb[0].mxu0
    %v4754 = vpop.f32.mrb[0].mxu0
    %v4755 = vpop.f32.mrb[0].mxu0
    %4756 = vmatprep.mubr.bf16.mxu0 %v3685
    %4757 = vmatmul.mubr.bf16.gmra.mrb[0].mxu0 %v3684
    %v4758 = vpop.f32.mrb[0].mxu0
    %v4759 = vadd.f32 %v4550, %v4758
    %v4760 = vpop.f32.mrb[0].mxu0
    %v4761 = vpop.f32.mrb[0].mxu0
    %v4762 = vadd.f32 %v4553, %v4761
    %v4763 = vpop.f32.mrb[0].mxu0
    %4764 = vmatprep.mubr.bf16.mxu0 %v3692
    %4765 = vmatmul.mubr.bf16.gmra.mrb[0].mxu0 %v3691
    %v4766 = vpop.f32.mrb[0].mxu0
    %v4767 = vpop.f32.mrb[0].mxu0
    %v4768 = vpop.f32.mrb[0].mxu0
    %v4769 = vadd.f32 %v4560, %v4768
    %v4770 = vpop.f32.mrb[0].mxu0
    %4771 = vmatprep.mubr.bf16.mxu0 %v3699
    %4772 = vmatmul.mubr.bf16.gmra.mrb[0].mxu0 %v3698
    %v4773 = vpop.f32.mrb[0].mxu0
    %v4774 = vadd.f32 %v4565, %v4773
    %v4775 = vpop.f32.mrb[0].mxu0
    %v4776 = vpop.f32.mrb[0].mxu0
    %v4777 = vpop.f32.mrb[0].mxu0
    %4778 = vmatprep.mubr.bf16.mxu0 %v3706
    %4779 = vmatmul.mubr.bf16.gmra.mrb[0].mxu0 %v3705
    %v4780 = vpop.f32.mrb[0].mxu0
    %v4781 = vadd.f32 %v4572, %v4780
    %v4782 = vpop.f32.mrb[0].mxu0
    %v4783 = vpop.f32.mrb[0].mxu0
    %v4784 = vadd.f32 %v4575, %v4783
    %v4785 = vpop.f32.mrb[0].mxu0
    %4786 = vmatprep.mubr.bf16.mxu0 %v3713
    %4787 = vmatmul.mubr.bf16.gmra.mrb[0].mxu0 %v3712
    %v4788 = vpop.f32.mrb[0].mxu0
    %v4789 = vpop.f32.mrb[0].mxu0
    %v4790 = vpop.f32.mrb[0].mxu0
    %v4791 = vadd.f32 %v4582, %v4790
    %v4792 = vpop.f32.mrb[0].mxu0
    %4793 = vmatprep.mubr.bf16.mxu0 %v3720
    %4794 = vmatmul.mubr.bf16.gmra.mrb[0].mxu0 %v3719
    %v4795 = vpop.f32.mrb[0].mxu0
    %v4796 = vadd.f32 %v4587, %v4795
    %v4797 = vpop.f32.mrb[0].mxu0
    %v4798 = vpop.f32.mrb[0].mxu0
    %v4799 = vpop.f32.mrb[0].mxu0
    %4800 = vmatprep.mubr.bf16.mxu0 %v3727
    %4801 = vmatmul.mubr.bf16.gmra.mrb[0].mxu0 %v3726
    %v4802 = vpop.f32.mrb[0].mxu0
    %v4803 = vadd.f32 %v4594, %v4802
    %v4804 = vpop.f32.mrb[0].mxu0
    %v4805 = vpop.f32.mrb[0].mxu0
    %v4806 = vadd.f32 %v4597, %v4805
    %v4807 = vpop.f32.mrb[0].mxu0
    %4808 = vmatprep.mubr.bf16.mxu0 %v3734
    %4809 = vmatmul.mubr.bf16.gmra.mrb[0].mxu0 %v3733
    %v4810 = vpop.f32.mrb[0].mxu0
    %v4811 = vpop.f32.mrb[0].mxu0
    %v4812 = vpop.f32.mrb[0].mxu0
    %v4813 = vadd.f32 %v4604, %v4812
    %v4814 = vpop.f32.mrb[0].mxu0
    %4815 = vmatprep.mubr.bf16.mxu0 %v3741
    %4816 = vmatmul.mubr.bf16.gmra.mrb[0].mxu0 %v3740
    %v4817 = vpop.f32.mrb[0].mxu0
    %v4818 = vadd.f32 %v4609, %v4817
    %v4819 = vpop.f32.mrb[0].mxu0
    %v4820 = vpop.f32.mrb[0].mxu0
    %v4821 = vpop.f32.mrb[0].mxu0
    %4822 = vmatprep.mubr.bf16.mxu0 %v3748
    %4823 = vmatmul.mubr.bf16.gmra.mrb[0].mxu0 %v3747
    %v4824 = vpop.f32.mrb[0].mxu0
    %v4825 = vadd.f32 %v4616, %v4824
    %v4826 = vpop.f32.mrb[0].mxu0
    %v4827 = vpop.f32.mrb[0].mxu0
    %v4828 = vadd.f32 %v4619, %v4827
    %v4829 = vpop.f32.mrb[0].mxu0
    %4830 = vmatprep.mubr.bf16.mxu0 %v3755
    %4831 = vmatmul.mubr.bf16.gmra.mrb[0].mxu0 %v3754
    %v4832 = vpop.f32.mrb[0].mxu0
    %v4833 = vpop.f32.mrb[0].mxu0
    %v4834 = vpop.f32.mrb[0].mxu0
    %v4835 = vadd.f32 %v4626, %v4834
    %v4836 = vpop.f32.mrb[0].mxu0
    %4837 = vmatprep.mubr.bf16.mxu0 %v3762
    %4838 = vmatmul.mubr.bf16.gmra.mrb[0].mxu0 %v3761
    %v4839 = vpop.f32.mrb[0].mxu0
    %v4840 = vadd.f32 %v4631, %v4839
    %v4841 = vpop.f32.mrb[0].mxu0
    %v4842 = vpop.f32.mrb[0].mxu0
    %v4843 = vpop.f32.mrb[0].mxu0
    %4844 = vmatprep.mubr.bf16.mxu0 %v3769
    %4845 = vmatmul.mubr.bf16.gmra.mrb[0].mxu0 %v3768
    %v4846 = vpop.f32.mrb[0].mxu0
    %v4847 = vadd.f32 %v4638, %v4846
    %v4848 = vpop.f32.mrb[0].mxu0
    %v4849 = vpop.f32.mrb[0].mxu0
    %v4850 = vadd.f32 %v4641, %v4849
    %v4851 = vpop.f32.mrb[0].mxu0
    %4852 = vmatprep.mubr.bf16.mxu0 %v3776
    %4853 = vmatmul.mubr.bf16.gmra.mrb[0].mxu0 %v3775
    %v4854 = vpop.f32.mrb[0].mxu0
    %v4855 = vpop.f32.mrb[0].mxu0
    %v4856 = vpop.f32.mrb[0].mxu0
    %v4857 = vadd.f32 %v4648, %v4856
    %v4858 = vpop.f32.mrb[0].mxu0
    %4859 = vmatprep.mubr.bf16.mxu0 %v3783
    %4860 = vmatmul.mubr.bf16.gmra.mrb[0].mxu0 %v3782
    %v4861 = vpop.f32.mrb[0].mxu0
    %v4862 = vadd.f32 %v4653, %v4861
    %v4863 = vpop.f32.mrb[0].mxu0
    %v4864 = vpop.f32.mrb[0].mxu0
    %v4865 = vpop.f32.mrb[0].mxu0
    %4866 = vdwg.mxu0
    %4867 = vmatprep.subr.bf16.mxu0 0
    %4868 = vmatpush1.bf16.msra.mxu0 %v4176
    %4869 = vmatprep.subr.bf16.mxu0 0
    %4870 = vmatpush1.bf16.msra.mxu0 %v4177
    %4871 = vmatprep.subr.bf16.mxu0 0
    %4872 = vmatpush1.bf16.msra.mxu0 %v4178
    %4873 = vmatprep.subr.bf16.mxu0 0
    %4874 = vmatpush1.bf16.msra.mxu0 %v4179
    %4875 = vmatprep.subr.bf16.mxu0 0
    %4876 = vmatpush1.bf16.msra.mxu0 %v4180
    %4877 = vmatprep.subr.bf16.mxu0 0
    %4878 = vmatpush1.bf16.msra.mxu0 %v4181
    %4879 = vmatprep.subr.bf16.mxu0 0
    %4880 = vmatpush1.bf16.msra.mxu0 %v4182
    %4881 = vmatprep.subr.bf16.mxu0 0
    %4882 = vmatpush1.bf16.msra.mxu0 %v4183
    %4883 = vmatprep.subr.bf16.mxu0 0
    %4884 = vmatpush1.bf16.msra.mxu0 0
    %4885 = vmatprep.subr.bf16.mxu0 0
    %4886 = vmatpush1.bf16.msra.mxu0 0
    %4887 = vmatprep.subr.bf16.mxu0 0
    %4888 = vmatpush1.bf16.msra.mxu0 0
    %4889 = vmatprep.subr.bf16.mxu0 0
    %4890 = vmatpush1.bf16.msra.mxu0 0
    %4891 = vmatprep.subr.bf16.mxu0 0
    %4892 = vmatpush1.bf16.msra.mxu0 0
    %4893 = vmatprep.subr.bf16.mxu0 0
    %4894 = vmatpush1.bf16.msra.mxu0 0
    %4895 = vmatprep.subr.bf16.mxu0 0
    %4896 = vmatpush1.bf16.msra.mxu0 0
    %4897 = vmatprep.subr.bf16.mxu0 0
    %4898 = vmatpush1.bf16.msra.mxu0 0
    %4899 = vmatprep.mubr.bf16.mxu0 0
    %4900 = vmatmul.mubr.bf16.gmra.mrb[0].mxu0 %v3623
    %v4901 = vpop.f32.mrb[0].mxu0
    %v4902 = vadd.f32 %v4693, %v4901
    %v4903 = vpop.f32.mrb[0].mxu0
    %v4904 = vpop.f32.mrb[0].mxu0
    %v4905 = vadd.f32 %v4696, %v4904
    %v4906 = vpop.f32.mrb[0].mxu0
    %4907 = vmatprep.mubr.bf16.mxu0 0
    %4908 = vmatmul.mubr.bf16.gmra.mrb[0].mxu0 %v3630
    %v4909 = vpop.f32.mrb[0].mxu0
    %v4910 = vpop.f32.mrb[0].mxu0
    %v4911 = vpop.f32.mrb[0].mxu0
    %v4912 = vadd.f32 %v4703, %v4911
    %v4913 = vpop.f32.mrb[0].mxu0
    %4914 = vmatprep.mubr.bf16.mxu0 0
    %4915 = vmatmul.mubr.bf16.gmra.mrb[0].mxu0 %v3637
    %v4916 = vpop.f32.mrb[0].mxu0
    %v4917 = vadd.f32 %v4708, %v4916
    %v4918 = vpop.f32.mrb[0].mxu0
    %v4919 = vpop.f32.mrb[0].mxu0
    %v4920 = vpop.f32.mrb[0].mxu0
    %4921 = vmatprep.mubr.bf16.mxu0 0
    %4922 = vmatmul.mubr.bf16.gmra.mrb[0].mxu0 %v3644
    %v4923 = vpop.f32.mrb[0].mxu0
    %v4924 = vadd.f32 %v4715, %v4923
    %v4925 = vpop.f32.mrb[0].mxu0
    %v4926 = vpop.f32.mrb[0].mxu0
    %v4927 = vadd.f32 %v4718, %v4926
    %v4928 = vpop.f32.mrb[0].mxu0
    %4929 = vmatprep.mubr.bf16.mxu0 0
    %4930 = vmatmul.mubr.bf16.gmra.mrb[0].mxu0 %v3651
    %v4931 = vpop.f32.mrb[0].mxu0
    %v4932 = vpop.f32.mrb[0].mxu0
    %v4933 = vpop.f32.mrb[0].mxu0
    %v4934 = vadd.f32 %v4725, %v4933
    %v4935 = vpop.f32.mrb[0].mxu0
    %4936 = vmatprep.mubr.bf16.mxu0 0
    %4937 = vmatmul.mubr.bf16.gmra.mrb[0].mxu0 %v3658
    %v4938 = vpop.f32.mrb[0].mxu0
    %v4939 = vadd.f32 %v4730, %v4938
    %v4940 = vpop.f32.mrb[0].mxu0
    %v4941 = vpop.f32.mrb[0].mxu0
    %v4942 = vpop.f32.mrb[0].mxu0
    %4943 = vmatprep.mubr.bf16.mxu0 0
    %4944 = vmatmul.mubr.bf16.gmra.mrb[0].mxu0 %v3665
    %v4945 = vpop.f32.mrb[0].mxu0
    %v4946 = vadd.f32 %v4737, %v4945
    %v4947 = vpop.f32.mrb[0].mxu0
    %v4948 = vpop.f32.mrb[0].mxu0
    %v4949 = vadd.f32 %v4740, %v4948
    %v4950 = vpop.f32.mrb[0].mxu0
    %4951 = vmatprep.mubr.bf16.mxu0 0
    %4952 = vmatmul.mubr.bf16.gmra.mrb[0].mxu0 %v3672
    %v4953 = vpop.f32.mrb[0].mxu0
    %v4954 = vpop.f32.mrb[0].mxu0
    %v4955 = vpop.f32.mrb[0].mxu0
    %v4956 = vadd.f32 %v4747, %v4955
    %v4957 = vpop.f32.mrb[0].mxu0
    %4958 = vmatprep.mubr.bf16.mxu0 0
    %4959 = vmatmul.mubr.bf16.gmra.mrb[0].mxu0 %v3679
    %v4960 = vpop.f32.mrb[0].mxu0
    %v4961 = vadd.f32 %v4752, %v4960
    %v4962 = vpop.f32.mrb[0].mxu0
    %v4963 = vpop.f32.mrb[0].mxu0
    %v4964 = vpop.f32.mrb[0].mxu0
    %4965 = vmatprep.mubr.bf16.mxu0 0
    %4966 = vmatmul.mubr.bf16.gmra.mrb[0].mxu0 %v3686
    %v4967 = vpop.f32.mrb[0].mxu0
    %v4968 = vadd.f32 %v4759, %v4967
    %v4969 = vpop.f32.mrb[0].mxu0
    %v4970 = vpop.f32.mrb[0].mxu0
    %v4971 = vadd.f32 %v4762, %v4970
    %v4972 = vpop.f32.mrb[0].mxu0
    %4973 = vmatprep.mubr.bf16.mxu0 0
    %4974 = vmatmul.mubr.bf16.gmra.mrb[0].mxu0 %v3693
    %v4975 = vpop.f32.mrb[0].mxu0
    %v4976 = vpop.f32.mrb[0].mxu0
    %v4977 = vpop.f32.mrb[0].mxu0
    %v4978 = vadd.f32 %v4769, %v4977
    %v4979 = vpop.f32.mrb[0].mxu0
    %4980 = vmatprep.mubr.bf16.mxu0 0
    %4981 = vmatmul.mubr.bf16.gmra.mrb[0].mxu0 %v3700
    %v4982 = vpop.f32.mrb[0].mxu0
    %v4983 = vadd.f32 %v4774, %v4982
    %v4984 = vpop.f32.mrb[0].mxu0
    %v4985 = vpop.f32.mrb[0].mxu0
    %v4986 = vpop.f32.mrb[0].mxu0
    %4987 = vmatprep.mubr.bf16.mxu0 0
    %4988 = vmatmul.mubr.bf16.gmra.mrb[0].mxu0 %v3707
    %v4989 = vpop.f32.mrb[0].mxu0
    %v4990 = vadd.f32 %v4781, %v4989
    %v4991 = vpop.f32.mrb[0].mxu0
    %v4992 = vpop.f32.mrb[0].mxu0
    %v4993 = vadd.f32 %v4784, %v4992
    %v4994 = vpop.f32.mrb[0].mxu0
    %4995 = vmatprep.mubr.bf16.mxu0 0
    %4996 = vmatmul.mubr.bf16.gmra.mrb[0].mxu0 %v3714
    %v4997 = vpop.f32.mrb[0].mxu0
    %v4998 = vpop.f32.mrb[0].mxu0
    %v4999 = vpop.f32.mrb[0].mxu0
    %v5000 = vadd.f32 %v4791, %v4999
    %v5001 = vpop.f32.mrb[0].mxu0
    %5002 = vmatprep.mubr.bf16.mxu0 0
    %5003 = vmatmul.mubr.bf16.gmra.mrb[0].mxu0 %v3721
    %v5004 = vpop.f32.mrb[0].mxu0
    %v5005 = vadd.f32 %v4796, %v5004
    %v5006 = vpop.f32.mrb[0].mxu0
    %v5007 = vpop.f32.mrb[0].mxu0
    %v5008 = vpop.f32.mrb[0].mxu0
    %5009 = vmatprep.mubr.bf16.mxu0 0
    %5010 = vmatmul.mubr.bf16.gmra.mrb[0].mxu0 %v3728
    %v5011 = vpop.f32.mrb[0].mxu0
    %v5012 = vadd.f32 %v4803, %v5011
    %v5013 = vpop.f32.mrb[0].mxu0
    %v5014 = vpop.f32.mrb[0].mxu0
    %v5015 = vadd.f32 %v4806, %v5014
    %v5016 = vpop.f32.mrb[0].mxu0
    %5017 = vmatprep.mubr.bf16.mxu0 0
    %5018 = vmatmul.mubr.bf16.gmra.mrb[0].mxu0 %v3735
    %v5019 = vpop.f32.mrb[0].mxu0
    %v5020 = vpop.f32.mrb[0].mxu0
    %v5021 = vpop.f32.mrb[0].mxu0
    %v5022 = vadd.f32 %v4813, %v5021
    %v5023 = vpop.f32.mrb[0].mxu0
    %5024 = vmatprep.mubr.bf16.mxu0 0
    %5025 = vmatmul.mubr.bf16.gmra.mrb[0].mxu0 %v3742
    %v5026 = vpop.f32.mrb[0].mxu0
    %v5027 = vadd.f32 %v4818, %v5026
    %v5028 = vpop.f32.mrb[0].mxu0
    %v5029 = vpop.f32.mrb[0].mxu0
    %v5030 = vpop.f32.mrb[0].mxu0
    %5031 = vmatprep.mubr.bf16.mxu0 0
    %5032 = vmatmul.mubr.bf16.gmra.mrb[0].mxu0 %v3749
    %v5033 = vpop.f32.mrb[0].mxu0
    %v5034 = vadd.f32 %v4825, %v5033
    %v5035 = vpop.f32.mrb[0].mxu0
    %v5036 = vpop.f32.mrb[0].mxu0
    %v5037 = vadd.f32 %v4828, %v5036
    %v5038 = vpop.f32.mrb[0].mxu0
    %5039 = vmatprep.mubr.bf16.mxu0 0
    %5040 = vmatmul.mubr.bf16.gmra.mrb[0].mxu0 %v3756
    %v5041 = vpop.f32.mrb[0].mxu0
    %v5042 = vpop.f32.mrb[0].mxu0
    %v5043 = vpop.f32.mrb[0].mxu0
    %v5044 = vadd.f32 %v4835, %v5043
    %v5045 = vpop.f32.mrb[0].mxu0
    %5046 = vmatprep.mubr.bf16.mxu0 0
    %5047 = vmatmul.mubr.bf16.gmra.mrb[0].mxu0 %v3763
    %v5048 = vpop.f32.mrb[0].mxu0
    %v5049 = vadd.f32 %v4840, %v5048
    %v5050 = vpop.f32.mrb[0].mxu0
    %v5051 = vpop.f32.mrb[0].mxu0
    %v5052 = vpop.f32.mrb[0].mxu0
    %5053 = vmatprep.mubr.bf16.mxu0 0
    %5054 = vmatmul.mubr.bf16.gmra.mrb[0].mxu0 %v3770
    %v5055 = vpop.f32.mrb[0].mxu0
    %v5056 = vadd.f32 %v4847, %v5055
    %v5057 = vpop.f32.mrb[0].mxu0
    %v5058 = vpop.f32.mrb[0].mxu0
    %v5059 = vadd.f32 %v4850, %v5058
    %v5060 = vpop.f32.mrb[0].mxu0
    %5061 = vmatprep.mubr.bf16.mxu0 0
    %5062 = vmatmul.mubr.bf16.gmra.mrb[0].mxu0 %v3777
    %v5063 = vpop.f32.mrb[0].mxu0
    %v5064 = vpop.f32.mrb[0].mxu0
    %v5065 = vpop.f32.mrb[0].mxu0
    %v5066 = vadd.f32 %v4857, %v5065
    %v5067 = vpop.f32.mrb[0].mxu0
    %5068 = vmatprep.mubr.bf16.mxu0 0
    %5069 = vmatmul.mubr.bf16.gmra.mrb[0].mxu0 %v3784
    %v5070 = vpop.f32.mrb[0].mxu0
    %v5071 = vadd.f32 %v4862, %v5070
    %v5072 = vpop.f32.mrb[0].mxu0
    %v5073 = vpop.f32.mrb[0].mxu0
    %v5074 = vpop.f32.mrb[0].mxu0
    %5075 = vdwg.mxu0
    %v5076 = vld [vmem:[#allocation4] sm:$0xff]
    %v5077 = vld [vmem:[#allocation4 + $0x8] sm:$0xff]
    %v5078 = vld [vmem:[#allocation4 + $0x10] sm:$0xff]
    %v5079 = vld [vmem:[#allocation4 + $0x18] sm:$0xff]
    %v5080 = vld [vmem:[#allocation4 + $0x20] sm:$0xff]
    %v5081 = vld [vmem:[#allocation4 + $0x28] sm:$0xff]
    %v5082 = vld [vmem:[#allocation4 + $0x30] sm:$0xff]
    %v5083 = vld [vmem:[#allocation4 + $0x38] sm:$0xff]
    %v5084 = vld [vmem:[#allocation4 + $0x40] sm:$0xff]
    %v5085 = vld [vmem:[#allocation4 + $0x48] sm:$0xff]
    %v5086 = vld [vmem:[#allocation4 + $0x50] sm:$0xff]
    %v5087 = vld [vmem:[#allocation4 + $0x58] sm:$0xff]
    %v5088 = vld [vmem:[#allocation4 + $0x60] sm:$0xff]
    %v5089 = vld [vmem:[#allocation4 + $0x68] sm:$0xff]
    %v5090 = vld [vmem:[#allocation4 + $0x70] sm:$0xff]
    %v5091 = vld [vmem:[#allocation4 + $0x78] sm:$0xff]
    %v5092 = vld [vmem:[#allocation4 + $0x80] sm:$0xff]
    %v5093 = vld [vmem:[#allocation4 + $0x88] sm:$0xff]
    %v5094 = vld [vmem:[#allocation4 + $0x90] sm:$0xff]
    %v5095 = vld [vmem:[#allocation4 + $0x98] sm:$0xff]
    %v5096 = vld [vmem:[#allocation4 + $0xa0] sm:$0xff]
    %v5097 = vld [vmem:[#allocation4 + $0xa8] sm:$0xff]
    %v5098 = vld [vmem:[#allocation4 + $0xb0] sm:$0xff]
    %v5099 = vld [vmem:[#allocation4 + $0xb8] sm:$0xff]
    %v5100 = vld [vmem:[#allocation4 + $0xc0] sm:$0xff]
    %v5101 = vld [vmem:[#allocation4 + $0xc8] sm:$0xff]
    %v5102 = vld [vmem:[#allocation4 + $0xd0] sm:$0xff]
    %v5103 = vld [vmem:[#allocation4 + $0xd8] sm:$0xff]
    %v5104 = vld [vmem:[#allocation4 + $0xe0] sm:$0xff]
    %v5105 = vld [vmem:[#allocation4 + $0xe8] sm:$0xff]
    %v5106 = vld [vmem:[#allocation4 + $0xf0] sm:$0xff]
    %v5107 = vld [vmem:[#allocation4 + $0xf8] sm:$0xff]
    %v5108 = vadd.f32 %v4902, %v5076
    %v5109 = vadd.f32 %v4905, %v5077
    %v5110 = vadd.f32 %v4912, %v5078
    %v5111 = vadd.f32 %v4917, %v5079
    %v5112 = vadd.f32 %v4924, %v5080
    %v5113 = vadd.f32 %v4927, %v5081
    %v5114 = vadd.f32 %v4934, %v5082
    %v5115 = vadd.f32 %v4939, %v5083
    %v5116 = vadd.f32 %v4946, %v5084
    %v5117 = vadd.f32 %v4949, %v5085
    %v5118 = vadd.f32 %v4956, %v5086
    %v5119 = vadd.f32 %v4961, %v5087
    %v5120 = vadd.f32 %v4968, %v5088
    %v5121 = vadd.f32 %v4971, %v5089
    %v5122 = vadd.f32 %v4978, %v5090
    %v5123 = vadd.f32 %v4983, %v5091
    %v5124 = vadd.f32 %v4990, %v5092
    %v5125 = vadd.f32 %v4993, %v5093
    %v5126 = vadd.f32 %v5000, %v5094
    %v5127 = vadd.f32 %v5005, %v5095
    %v5128 = vadd.f32 %v5012, %v5096
    %v5129 = vadd.f32 %v5015, %v5097
    %v5130 = vadd.f32 %v5022, %v5098
    %v5131 = vadd.f32 %v5027, %v5099
    %v5132 = vadd.f32 %v5034, %v5100
    %v5133 = vadd.f32 %v5037, %v5101
    %v5134 = vadd.f32 %v5044, %v5102
    %v5135 = vadd.f32 %v5049, %v5103
    %v5136 = vadd.f32 %v5056, %v5104
    %v5137 = vadd.f32 %v5059, %v5105
    %v5138 = vadd.f32 %v5066, %v5106
    %v5139 = vadd.f32 %v5071, %v5107
    %v5140 = vmax.f32 %v5108, 0.0
    %v5141 = vmax.f32 %v5109, 0.0
    %v5142 = vmax.f32 %v5110, 0.0
    %v5143 = vmax.f32 %v5111, 0.0
    %v5144 = vmax.f32 %v5112, 0.0
    %v5145 = vmax.f32 %v5113, 0.0
    %v5146 = vmax.f32 %v5114, 0.0
    %v5147 = vmax.f32 %v5115, 0.0
    %v5148 = vmax.f32 %v5116, 0.0
    %v5149 = vmax.f32 %v5117, 0.0
    %v5150 = vmax.f32 %v5118, 0.0
    %v5151 = vmax.f32 %v5119, 0.0
    %v5152 = vmax.f32 %v5120, 0.0
    %v5153 = vmax.f32 %v5121, 0.0
    %v5154 = vmax.f32 %v5122, 0.0
    %v5155 = vmax.f32 %v5123, 0.0
    %v5156 = vmax.f32 %v5124, 0.0
    %v5157 = vmax.f32 %v5125, 0.0
    %v5158 = vmax.f32 %v5126, 0.0
    %v5159 = vmax.f32 %v5127, 0.0
    %v5160 = vmax.f32 %v5128, 0.0
    %v5161 = vmax.f32 %v5129, 0.0
    %v5162 = vmax.f32 %v5130, 0.0
    %v5163 = vmax.f32 %v5131, 0.0
    %v5164 = vmax.f32 %v5132, 0.0
    %v5165 = vmax.f32 %v5133, 0.0
    %v5166 = vmax.f32 %v5134, 0.0
    %v5167 = vmax.f32 %v5135, 0.0
    %v5168 = vmax.f32 %v5136, 0.0
    %v5169 = vmax.f32 %v5137, 0.0
    %v5170 = vmax.f32 %v5138, 0.0
    %v5171 = vmax.f32 %v5139, 0.0
    %5172 = vst [vmem:[#allocation13] sm:$0xff] %v5140
    %5173 = vst [vmem:[#allocation13 + $0x8] sm:$0xff] %v5141
    %5174 = vst [vmem:[#allocation13 + $0x10] sm:$0xff] %v5142
    %5175 = vst [vmem:[#allocation13 + $0x18] sm:$0xff] %v5143
    %5176 = vst [vmem:[#allocation13 + $0x20] sm:$0xff] %v5144
    %5177 = vst [vmem:[#allocation13 + $0x28] sm:$0xff] %v5145
    %5178 = vst [vmem:[#allocation13 + $0x30] sm:$0xff] %v5146
    %5179 = vst [vmem:[#allocation13 + $0x38] sm:$0xff] %v5147
    %5180 = vst [vmem:[#allocation13 + $0x40] sm:$0xff] %v5148
    %5181 = vst [vmem:[#allocation13 + $0x48] sm:$0xff] %v5149
    %5182 = vst [vmem:[#allocation13 + $0x50] sm:$0xff] %v5150
    %5183 = vst [vmem:[#allocation13 + $0x58] sm:$0xff] %v5151
    %5184 = vst [vmem:[#allocation13 + $0x60] sm:$0xff] %v5152
    %5185 = vst [vmem:[#allocation13 + $0x68] sm:$0xff] %v5153
    %5186 = vst [vmem:[#allocation13 + $0x70] sm:$0xff] %v5154
    %5187 = vst [vmem:[#allocation13 + $0x78] sm:$0xff] %v5155
    %5188 = vst [vmem:[#allocation13 + $0x80] sm:$0xff] %v5156
    %5189 = vst [vmem:[#allocation13 + $0x88] sm:$0xff] %v5157
    %5190 = vst [vmem:[#allocation13 + $0x90] sm:$0xff] %v5158
    %5191 = vst [vmem:[#allocation13 + $0x98] sm:$0xff] %v5159
    %5192 = vst [vmem:[#allocation13 + $0xa0] sm:$0xff] %v5160
    %5193 = vst [vmem:[#allocation13 + $0xa8] sm:$0xff] %v5161
    %5194 = vst [vmem:[#allocation13 + $0xb0] sm:$0xff] %v5162
    %5195 = vst [vmem:[#allocation13 + $0xb8] sm:$0xff] %v5163
    %5196 = vst [vmem:[#allocation13 + $0xc0] sm:$0xff] %v5164
    %5197 = vst [vmem:[#allocation13 + $0xc8] sm:$0xff] %v5165
    %5198 = vst [vmem:[#allocation13 + $0xd0] sm:$0xff] %v5166
    %5199 = vst [vmem:[#allocation13 + $0xd8] sm:$0xff] %v5167
    %5200 = vst [vmem:[#allocation13 + $0xe0] sm:$0xff] %v5168
    %5201 = vst [vmem:[#allocation13 + $0xe8] sm:$0xff] %v5169
    %5202 = vst [vmem:[#allocation13 + $0xf0] sm:$0xff] %v5170
    %5203 = vst [vmem:[#allocation13 + $0xf8] sm:$0xff] %v5171
    // Predicated region
    $region42: #{l2block_forward.1} parent=1 // pred_check
      _
    $region43: #{l2block_forward.1} parent=1 // pred_check_branch
      %5205 = sbr.rel (0) target = $region45
    $region44: #{l2block_forward.1} parent=1 // pred_region
      %s5207 = ssub.s32 4096, 4096
      %5208 = vsyncadd [#allocation6], %s5207
      %s5209 = sshll.u32 [#allocation13], 4
      %s5210 = int_to_ptr.vmem [resolvable:$true] %s5209
      %5215 = dma.vmem_to_hbm [thread:$0]  %s5210, 4096, %s5, [#allocation6], 128, 128, 8
    $region45: #{l2block_forward.1} parent=1 // pred_fallthru
      _
    // Predicated region
    $region46: #{l2block_forward.1} parent=1 // pred_check
      _
    $region47: #{l2block_forward.1} parent=1 // pred_check_branch
      %5217 = sbr.rel (0) target = $region49
    $region48: #{l2block_forward.1} parent=1 // pred_region
      %5218 = dma.done [#allocation6], 4096
    $region49: #{l2block_forward.1} parent=1 // pred_fallthru
      _
    %5219 = vsyncpa [#allocation5], 1
    %5220 = vsyncpa [#allocation8], 1
    %5221 = vsyncpa [#allocation11], 1
    %5222 = vsyncpa [#allocation6], 1

</llo_original>
